<compile_context>
chip_gen: v7x
topology: tpu7x:2x2x1
jax: 0.10.0
libtpu: 0.0.40
codegen_flags: <defaults>
</compile_context>

<pallas_src>
import math

import numpy as np
import jax
import jax.numpy as jnp
from jax import lax
from jax.experimental import pallas as pl
from jax.experimental.pallas import tpu as pltpu

MAX_VAL = 10000.0

# ----------------------- small, deterministic config -----------------------
BATCH = 2
MAX_LEN = 8                      # trm_max_len == seq_len (module assumes l == max_len)
HIDDEN = 32                      # trm_hidden_dim
GLOBAL_HEADS = 2                 # trm_num_heads
LOCAL_HEADS = 2                  # local_num_heads
NUM_HEADS = GLOBAL_HEADS + LOCAL_HEADS
HEAD_SIZE = HIDDEN // NUM_HEADS  # 8


# ------------------------------- fused kernel -------------------------------
def _fused_mha_kernel(xq_ref, xk_ref, xv_ref,
                      w_qkv_ref, b_qkv_ref, w_o_ref, b_o_ref,
                      mask_ref, pos_q_ref, pos_k_ref, rel_b_ref, mlp_w_ref,
                      o_ref):
    # shapes (all static at trace time)
    B, L, _ = mask_ref.shape          # (B, L, L) additive mask: 0 or -MAX_VAL
    Ll, _, D = pos_q_ref.shape        # local heads, seq, head_size
    Hdim = w_o_ref.shape[0]
    H = Hdim // D                     # total heads
    G = H - Ll                        # global heads
    scale = 1.0 / math.sqrt(D)
    dn = (((1,), (1,)), ((), ()))     # contract last dims: A @ B.T without a transpose

    # ---- fused Q/K/V projections (stay in VMEM/vregs) ----
    q = jnp.dot(xq_ref[...], w_qkv_ref[0], preferred_element_type=jnp.float32) + b_qkv_ref[0]
    k = jnp.dot(xk_ref[...], w_qkv_ref[1], preferred_element_type=jnp.float32) + b_qkv_ref[1]
    v = jnp.dot(xv_ref[...], w_qkv_ref[2], preferred_element_type=jnp.float32) + b_qkv_ref[2]

    w_o = w_o_ref[...]                # (Hdim, Hdim) = Wo.T
    b_o = b_o_ref[...]                # (1, Hdim)

    # static unrolled loops over (batch, head): B*H = 8 tiny (L=8, D=8) problems
    for b in range(B):
        madd = mask_ref[b]            # (L, L)
        acc = jnp.zeros((L, Hdim), dtype=jnp.float32)
        for h in range(H):
            r0, c0 = b * L, h * D
            qh = q[r0:r0 + L, c0:c0 + D]
            kh = k[r0:r0 + L, c0:c0 + D]
            vh = v[r0:r0 + L, c0:c0 + D]
            if h >= G:                # local head: absolute positional embeddings
                hl = h - G
                qh = qh + pos_q_ref[hl]
                kh = kh + pos_k_ref[hl]
            s = lax.dot_general(qh, kh, dn, preferred_element_type=jnp.float32) * scale
            if h >= G:
                # reweight[p,q'] = (w·rel[p,q'] + bias) + w·v[p] + w·v[q']
                # (linear MLP over rel + v_p + v_q decomposes exactly; the
                #  parameter-only term w·rel + bias arrives precomputed)
                hl = h - G
                w2 = mlp_w_ref[hl]                                            # (1, D)
                col = lax.dot_general(vh, w2, dn, preferred_element_type=jnp.float32)  # (L, 1)
                row = lax.dot_general(w2, vh, dn, preferred_element_type=jnp.float32)  # (1, L)
                s = s + (rel_b_ref[hl] + col + row)
            s = s + madd                                       # additive mask
            s = s - jnp.max(s, axis=-1, keepdims=True)
            p = jnp.exp(s)
            p = p * pl.reciprocal(jnp.sum(p, axis=-1, keepdims=True), approx=True)
            head_out = jnp.dot(p, vh, preferred_element_type=jnp.float32)     # (L, D)
            # head merge + output projection fused (block-matmul decomposition)
            acc = acc + jnp.dot(head_out, w_o[c0:c0 + D, :],
                                preferred_element_type=jnp.float32)
        o_ref[pl.ds(b * L, L), :] = (acc + b_o).astype(o_ref.dtype)


# ------------------------------ forward wrapper ------------------------------
def mha_forward(params, query, key, value, mask_bool):
    """query/key/value: (B, L, HIDDEN) f32; mask_bool: (B, 1, L, L) bool (True = masked)."""
    B, L, Hdim = query.shape
    Ll, D = LOCAL_HEADS, HEAD_SIZE

    # ---- parameter-only / mask precompute (cheap glue, outside the kernel) ----
    w_qkv = jnp.stack([params["Wq"].T, params["Wk"].T, params["Wv"].T])       # (3, H, H)
    b_qkv = jnp.stack([params["bq"], params["bk"], params["bv"]])[:, None, :] # (3, 1, H)
    w_o = params["Wo"].T                                                      # (H, H)
    b_o = params["bo"][None, :]                                               # (1, H)

    # torch .view(1,-1,l,d) == row-major reshape of the (L, Ll*D) embedding tables
    pos_q = params["abs_q"].reshape(Ll, L, D)
    pos_k = params["abs_k"].reshape(Ll, L, D)
    dist = (jnp.arange(L)[None, :] - jnp.arange(L)[:, None]) + MAX_LEN - 1    # (L, L)
    rel = params["rel"][dist].reshape(L, L, Ll, D).transpose(2, 0, 1, 3)      # (Ll, L, L, D)
    rel_b = (jnp.einsum("hpqd,hd->hpq", rel, params["mlp_w"])
             + params["mlp_b"][:, None, None])                                # (Ll, L, L)
    mlp_w3 = params["mlp_w"][:, None, :]                                      # (Ll, 1, D)

    mask_add = jnp.where(mask_bool[:, 0], -MAX_VAL, 0.0).astype(jnp.float32)  # (B, L, L)

    def full(shape):
        n = len(shape)
        return pl.BlockSpec(shape, lambda i, _n=n: (0,) * _n)

    out = pl.pallas_call(
        _fused_mha_kernel,
        out_shape=jax.ShapeDtypeStruct((B * L, Hdim), jnp.float32),
        grid=(1,),
        in_specs=[
            full((B * L, Hdim)), full((B * L, Hdim)), full((B * L, Hdim)),
            full((3, Hdim, Hdim)), full((3, 1, Hdim)),
            full((Hdim, Hdim)), full((1, Hdim)),
            full((B, L, L)),
            full((Ll, L, D)), full((Ll, L, D)),
            full((Ll, L, L)), full((Ll, 1, D)),
        ],
        out_specs=full((B * L, Hdim)),
        compiler_params=pltpu.CompilerParams(dimension_semantics=("arbitrary",)),
    )(query.reshape(B * L, Hdim),
      key.reshape(B * L, Hdim),
      value.reshape(B * L, Hdim),
      w_qkv, b_qkv, w_o, b_o, mask_add, pos_q, pos_k, rel_b, mlp_w3)
    return out.reshape(B, L, Hdim)


# ------------------------- pure-JAX reference (check) ------------------------
def mha_reference(params, query, key, value, mask_bool):
    B, L, Hdim = query.shape
    G, Ll, D = GLOBAL_HEADS, LOCAL_HEADS, HEAD_SIZE

    def lin(x, W, b):
        return x @ W.T + b

    q = lin(query, params["Wq"], params["bq"]).reshape(B, L, NUM_HEADS, D).transpose(0, 2, 1, 3)
    k = lin(key, params["Wk"], params["bk"]).reshape(B, L, NUM_HEADS, D).transpose(0, 2, 1, 3)
    v = lin(value, params["Wv"], params["bv"]).reshape(B, L, NUM_HEADS, D).transpose(0, 2, 1, 3)

    m4 = mask_bool  # (B, 1, L, L)

    qg, kg, vg = q[:, :G], k[:, :G], v[:, :G]
    sg = (qg @ kg.transpose(0, 1, 3, 2)) / math.sqrt(D)
    sg = jnp.where(m4, -MAX_VAL, sg)
    vg_out = jax.nn.softmax(sg, axis=-1) @ vg

    ql, kl, vl = q[:, G:], k[:, G:], v[:, G:]
    ql = ql + params["abs_q"].reshape(1, Ll, L, D)
    kl = kl + params["abs_k"].reshape(1, Ll, L, D)
    sl = (ql @ kl.transpose(0, 1, 3, 2)) / math.sqrt(D)
    dist = (jnp.arange(L)[None, :] - jnp.arange(L)[:, None]) + MAX_LEN - 1
    rel = params["rel"][dist].reshape(L, L, Ll, D).transpose(2, 0, 1, 3)[None]  # (1,Ll,L,L,D)
    inputs = rel + vl[:, :, :, None, :] + vl[:, :, None, :, :]
    reweight = (jnp.einsum("bhpqd,hd->bhpq", inputs, params["mlp_w"])
                + params["mlp_b"][None, :, None, None])
    sl = sl + reweight
    sl = jnp.where(m4, -MAX_VAL, sl)
    vl_out = jax.nn.softmax(sl, axis=-1) @ vl

    x = jnp.concatenate([vg_out, vl_out], axis=1).transpose(0, 2, 1, 3).reshape(B, L, Hdim)
    return x @ params["Wo"].T + params["bo"]


# ----------------------------------- main ------------------------------------
if __name__ == "__main__":
    root = jax.random.PRNGKey(0)
    ks = jax.random.split(root, 20)

    def init(k, shape, scale=0.05):
        return (scale * jax.random.normal(k, shape)).astype(jnp.float32)

    params = {
        "Wq": init(ks[0], (HIDDEN, HIDDEN)), "bq": init(ks[1], (HIDDEN,)),
        "Wk": init(ks[2], (HIDDEN, HIDDEN)), "bk": init(ks[3], (HIDDEN,)),
        "Wv": init(ks[4], (HIDDEN, HIDDEN)), "bv": init(ks[5], (HIDDEN,)),
        "Wo": init(ks[6], (HIDDEN, HIDDEN)), "bo": init(ks[7], (HIDDEN,)),
        # abs/rel positional embedding tables (local heads)
        "abs_q": init(ks[8], (MAX_LEN, HEAD_SIZE * LOCAL_HEADS)),
        "abs_k": init(ks[9], (MAX_LEN, HEAD_SIZE * LOCAL_HEADS)),
        "rel":   init(ks[10], (2 * MAX_LEN - 1, HEAD_SIZE * LOCAL_HEADS)),
        # per-local-head Linear(head_size, 1): weight (D,), bias scalar
        "mlp_w": init(ks[11], (LOCAL_HEADS, HEAD_SIZE)),
        "mlp_b": init(ks[12], (LOCAL_HEADS,)),
    }

    query = init(ks[13], (BATCH, MAX_LEN, HIDDEN), scale=1.0)
    key_in = init(ks[14], (BATCH, MAX_LEN, HIDDEN), scale=1.0)
    value = init(ks[15], (BATCH, MAX_LEN, HIDDEN), scale=1.0)
    # causal mask: True (masked) where key position > query position
    causal = jnp.arange(MAX_LEN)[None, :] > jnp.arange(MAX_LEN)[:, None]
    mask = jnp.broadcast_to(causal[None, None], (BATCH, 1, MAX_LEN, MAX_LEN))

    forward = jax.jit(mha_forward)
    out = jax.block_until_ready(forward(params, query, key_in, value, mask))

    ref = jax.block_until_ready(mha_reference(params, query, key_in, value, mask))
    assert out.shape == (BATCH, MAX_LEN, HIDDEN)
    err = np.abs(np.asarray(out) - np.asarray(ref)).max()
    assert np.allclose(np.asarray(out), np.asarray(ref), rtol=2e-3, atol=2e-4), err

    print("KERNEL_OK")
</pallas_src>

<mosaic_0001>
module attributes {stable_mosaic.version = 11 : i64} {
  func.func @_fused_mha_kernel(%arg0: i32, %arg1: memref<16x32xf32, #tpu.memory_space<vmem>>, %arg2: memref<16x32xf32, #tpu.memory_space<vmem>>, %arg3: memref<16x32xf32, #tpu.memory_space<vmem>>, %arg4: memref<3x32x32xf32, #tpu.memory_space<vmem>>, %arg5: memref<3x1x32xf32, #tpu.memory_space<vmem>>, %arg6: memref<32x32xf32, #tpu.memory_space<vmem>>, %arg7: memref<1x32xf32, #tpu.memory_space<vmem>>, %arg8: memref<2x8x8xf32, #tpu.memory_space<vmem>>, %arg9: memref<2x8x8xf32, #tpu.memory_space<vmem>>, %arg10: memref<2x8x8xf32, #tpu.memory_space<vmem>>, %arg11: memref<2x8x8xf32, #tpu.memory_space<vmem>>, %arg12: memref<2x1x8xf32, #tpu.memory_space<vmem>>, %arg13: memref<16x32xf32, #tpu.memory_space<vmem>>) attributes {dimension_semantics = [#tpu.dimension_semantics<arbitrary>], iteration_bounds = array<i64: 1>, scalar_prefetch = 0 : i64, scratch_operands = 0 : i64, tpu.core_type = #tpu.core_type<tc>, window_params = [{pipeline_mode = #tpu.pipeline_mode<synchronous>, transform_indices = @transform_0, window_bounds = array<i64: 16, 32>}, {pipeline_mode = #tpu.pipeline_mode<synchronous>, transform_indices = @transform_1, window_bounds = array<i64: 16, 32>}, {pipeline_mode = #tpu.pipeline_mode<synchronous>, transform_indices = @transform_2, window_bounds = array<i64: 16, 32>}, {pipeline_mode = #tpu.pipeline_mode<synchronous>, transform_indices = @transform_3, window_bounds = array<i64: 3, 32, 32>}, {pipeline_mode = #tpu.pipeline_mode<synchronous>, transform_indices = @transform_4, window_bounds = array<i64: 3, 1, 32>}, {pipeline_mode = #tpu.pipeline_mode<synchronous>, transform_indices = @transform_5, window_bounds = array<i64: 32, 32>}, {pipeline_mode = #tpu.pipeline_mode<synchronous>, transform_indices = @transform_6, window_bounds = array<i64: 1, 32>}, {pipeline_mode = #tpu.pipeline_mode<synchronous>, transform_indices = @transform_7, window_bounds = array<i64: 2, 8, 8>}, {pipeline_mode = #tpu.pipeline_mode<synchronous>, transform_indices = @transform_8, window_bounds = array<i64: 2, 8, 8>}, {pipeline_mode = #tpu.pipeline_mode<synchronous>, transform_indices = @transform_9, window_bounds = array<i64: 2, 8, 8>}, {pipeline_mode = #tpu.pipeline_mode<synchronous>, transform_indices = @transform_10, window_bounds = array<i64: 2, 8, 8>}, {pipeline_mode = #tpu.pipeline_mode<synchronous>, transform_indices = @transform_11, window_bounds = array<i64: 2, 1, 8>}, {pipeline_mode = #tpu.pipeline_mode<synchronous>, transform_indices = @transform_12, window_bounds = array<i64: 16, 32>}]} {
    %c0 = arith.constant 0 : index
    %c0_0 = arith.constant 0 : index
    %0 = vector.load %arg1[%c0, %c0_0] : memref<16x32xf32, #tpu.memory_space<vmem>>, vector<16x32xf32>
    %c0_1 = arith.constant 0 : index
    %c0_2 = arith.constant 0 : index
    %c0_3 = arith.constant 0 : index
    %1 = vector.load %arg4[%c0_1, %c0_2, %c0_3] : memref<3x32x32xf32, #tpu.memory_space<vmem>>, vector<1x32x32xf32>
    %2 = vector.shape_cast %1 : vector<1x32x32xf32> to vector<32x32xf32>
    %cst = arith.constant dense<0.000000e+00> : vector<16x32xf32>
    %3 = tpu.matmul %0, %2, %cst {dimension_numbers = #tpu.dot_dimension_numbers<[1], [0], [0], [1], [0, 0, 1, 1], [], []>} : vector<16x32xf32>, vector<32x32xf32>, vector<16x32xf32> -> vector<16x32xf32>
    %c0_4 = arith.constant 0 : index
    %c0_5 = arith.constant 0 : index
    %c0_6 = arith.constant 0 : index
    %4 = vector.load %arg5[%c0_4, %c0_5, %c0_6] : memref<3x1x32xf32, #tpu.memory_space<vmem>>, vector<1x1x32xf32>
    %5 = vector.shape_cast %4 : vector<1x1x32xf32> to vector<1x32xf32>
    %6 = vector.broadcast %5 : vector<1x32xf32> to vector<16x32xf32>
    %7 = arith.addf %3, %6 : vector<16x32xf32>
    %c0_7 = arith.constant 0 : index
    %c0_8 = arith.constant 0 : index
    %8 = vector.load %arg2[%c0_7, %c0_8] : memref<16x32xf32, #tpu.memory_space<vmem>>, vector<16x32xf32>
    %c1 = arith.constant 1 : index
    %c0_9 = arith.constant 0 : index
    %c0_10 = arith.constant 0 : index
    %9 = vector.load %arg4[%c1, %c0_9, %c0_10] : memref<3x32x32xf32, #tpu.memory_space<vmem>>, vector<1x32x32xf32>
    %10 = vector.shape_cast %9 : vector<1x32x32xf32> to vector<32x32xf32>
    %cst_11 = arith.constant dense<0.000000e+00> : vector<16x32xf32>
    %11 = tpu.matmul %8, %10, %cst_11 {dimension_numbers = #tpu.dot_dimension_numbers<[1], [0], [0], [1], [0, 0, 1, 1], [], []>} : vector<16x32xf32>, vector<32x32xf32>, vector<16x32xf32> -> vector<16x32xf32>
    %c1_12 = arith.constant 1 : index
    %c0_13 = arith.constant 0 : index
    %c0_14 = arith.constant 0 : index
    %12 = vector.load %arg5[%c1_12, %c0_13, %c0_14] : memref<3x1x32xf32, #tpu.memory_space<vmem>>, vector<1x1x32xf32>
    %13 = vector.shape_cast %12 : vector<1x1x32xf32> to vector<1x32xf32>
    %14 = vector.broadcast %13 : vector<1x32xf32> to vector<16x32xf32>
    %15 = arith.addf %11, %14 : vector<16x32xf32>
    %c0_15 = arith.constant 0 : index
    %c0_16 = arith.constant 0 : index
    %16 = vector.load %arg3[%c0_15, %c0_16] : memref<16x32xf32, #tpu.memory_space<vmem>>, vector<16x32xf32>
    %c2 = arith.constant 2 : index
    %c0_17 = arith.constant 0 : index
    %c0_18 = arith.constant 0 : index
    %17 = vector.load %arg4[%c2, %c0_17, %c0_18] : memref<3x32x32xf32, #tpu.memory_space<vmem>>, vector<1x32x32xf32>
    %18 = vector.shape_cast %17 : vector<1x32x32xf32> to vector<32x32xf32>
    %cst_19 = arith.constant dense<0.000000e+00> : vector<16x32xf32>
    %19 = tpu.matmul %16, %18, %cst_19 {dimension_numbers = #tpu.dot_dimension_numbers<[1], [0], [0], [1], [0, 0, 1, 1], [], []>} : vector<16x32xf32>, vector<32x32xf32>, vector<16x32xf32> -> vector<16x32xf32>
    %c2_20 = arith.constant 2 : index
    %c0_21 = arith.constant 0 : index
    %c0_22 = arith.constant 0 : index
    %20 = vector.load %arg5[%c2_20, %c0_21, %c0_22] : memref<3x1x32xf32, #tpu.memory_space<vmem>>, vector<1x1x32xf32>
    %21 = vector.shape_cast %20 : vector<1x1x32xf32> to vector<1x32xf32>
    %22 = vector.broadcast %21 : vector<1x32xf32> to vector<16x32xf32>
    %23 = arith.addf %19, %22 : vector<16x32xf32>
    %c0_23 = arith.constant 0 : index
    %c0_24 = arith.constant 0 : index
    %24 = vector.load %arg6[%c0_23, %c0_24] : memref<32x32xf32, #tpu.memory_space<vmem>>, vector<32x32xf32>
    %c0_25 = arith.constant 0 : index
    %c0_26 = arith.constant 0 : index
    %25 = vector.load %arg7[%c0_25, %c0_26] : memref<1x32xf32, #tpu.memory_space<vmem>>, vector<1x32xf32>
    %c0_27 = arith.constant 0 : index
    %c0_28 = arith.constant 0 : index
    %c0_29 = arith.constant 0 : index
    %26 = vector.load %arg8[%c0_27, %c0_28, %c0_29] : memref<2x8x8xf32, #tpu.memory_space<vmem>>, vector<1x8x8xf32>
    %27 = vector.shape_cast %26 : vector<1x8x8xf32> to vector<8x8xf32>
    %cst_30 = arith.constant 0.000000e+00 : f32
    %28 = vector.broadcast %cst_30 : f32 to vector<8x32xf32>
    %29 = vector.extract_strided_slice %7 {offsets = [0, 0], sizes = [8, 8], strides = [1, 1]} : vector<16x32xf32> to vector<8x8xf32>
    %30 = vector.extract_strided_slice %15 {offsets = [0, 0], sizes = [8, 8], strides = [1, 1]} : vector<16x32xf32> to vector<8x8xf32>
    %31 = vector.extract_strided_slice %23 {offsets = [0, 0], sizes = [8, 8], strides = [1, 1]} : vector<16x32xf32> to vector<8x8xf32>
    %cst_31 = arith.constant dense<0.000000e+00> : vector<8x8xf32>
    %32 = tpu.matmul %29, %30, %cst_31 {dimension_numbers = #tpu.dot_dimension_numbers<[1], [1], [0], [0], [0, 0, 1, 0], [], []>} : vector<8x8xf32>, vector<8x8xf32>, vector<8x8xf32> -> vector<8x8xf32>
    %cst_32 = arith.constant 0.353553385 : f32
    %33 = vector.broadcast %cst_32 : f32 to vector<8x8xf32>
    %34 = arith.mulf %32, %33 : vector<8x8xf32>
    %35 = arith.addf %34, %27 : vector<8x8xf32>
    %cst_33 = arith.constant dense<0xFF800000> : vector<8xf32>
    %36 = vector.multi_reduction <maximumf>, %35, %cst_33 [1] : vector<8x8xf32> to vector<8xf32>
    %37 = vector.shape_cast %36 : vector<8xf32> to vector<8x1xf32>
    %38 = vector.broadcast %37 : vector<8x1xf32> to vector<8x8xf32>
    %39 = arith.subf %35, %38 : vector<8x8xf32>
    %40 = math.exp %39 : vector<8x8xf32>
    %cst_34 = arith.constant dense<0.000000e+00> : vector<8xf32>
    %41 = vector.multi_reduction <add>, %40, %cst_34 [1] : vector<8x8xf32> to vector<8xf32>
    %42 = vector.shape_cast %41 : vector<8xf32> to vector<8x1xf32>
    %43 = tpu.reciprocal %42 {approx = true} : vector<8x1xf32> -> vector<8x1xf32>
    %44 = vector.broadcast %43 : vector<8x1xf32> to vector<8x8xf32>
    %45 = arith.mulf %40, %44 : vector<8x8xf32>
    %cst_35 = arith.constant dense<0.000000e+00> : vector<8x8xf32>
    %46 = tpu.matmul %45, %31, %cst_35 {dimension_numbers = #tpu.dot_dimension_numbers<[1], [0], [0], [1], [0, 0, 1, 1], [], []>} : vector<8x8xf32>, vector<8x8xf32>, vector<8x8xf32> -> vector<8x8xf32>
    %47 = vector.extract_strided_slice %24 {offsets = [0, 0], sizes = [8, 32], strides = [1, 1]} : vector<32x32xf32> to vector<8x32xf32>
    %cst_36 = arith.constant dense<0.000000e+00> : vector<8x32xf32>
    %48 = tpu.matmul %46, %47, %cst_36 {dimension_numbers = #tpu.dot_dimension_numbers<[1], [0], [0], [1], [0, 0, 1, 1], [], []>} : vector<8x8xf32>, vector<8x32xf32>, vector<8x32xf32> -> vector<8x32xf32>
    %49 = arith.addf %28, %48 : vector<8x32xf32>
    %50 = vector.extract_strided_slice %7 {offsets = [0, 8], sizes = [8, 8], strides = [1, 1]} : vector<16x32xf32> to vector<8x8xf32>
    %51 = vector.extract_strided_slice %15 {offsets = [0, 8], sizes = [8, 8], strides = [1, 1]} : vector<16x32xf32> to vector<8x8xf32>
    %52 = vector.extract_strided_slice %23 {offsets = [0, 8], sizes = [8, 8], strides = [1, 1]} : vector<16x32xf32> to vector<8x8xf32>
    %cst_37 = arith.constant dense<0.000000e+00> : vector<8x8xf32>
    %53 = tpu.matmul %50, %51, %cst_37 {dimension_numbers = #tpu.dot_dimension_numbers<[1], [1], [0], [0], [0, 0, 1, 0], [], []>} : vector<8x8xf32>, vector<8x8xf32>, vector<8x8xf32> -> vector<8x8xf32>
    %cst_38 = arith.constant 0.353553385 : f32
    %54 = vector.broadcast %cst_38 : f32 to vector<8x8xf32>
    %55 = arith.mulf %53, %54 : vector<8x8xf32>
    %56 = arith.addf %55, %27 : vector<8x8xf32>
    %cst_39 = arith.constant dense<0xFF800000> : vector<8xf32>
    %57 = vector.multi_reduction <maximumf>, %56, %cst_39 [1] : vector<8x8xf32> to vector<8xf32>
    %58 = vector.shape_cast %57 : vector<8xf32> to vector<8x1xf32>
    %59 = vector.broadcast %58 : vector<8x1xf32> to vector<8x8xf32>
    %60 = arith.subf %56, %59 : vector<8x8xf32>
    %61 = math.exp %60 : vector<8x8xf32>
    %cst_40 = arith.constant dense<0.000000e+00> : vector<8xf32>
    %62 = vector.multi_reduction <add>, %61, %cst_40 [1] : vector<8x8xf32> to vector<8xf32>
    %63 = vector.shape_cast %62 : vector<8xf32> to vector<8x1xf32>
    %64 = tpu.reciprocal %63 {approx = true} : vector<8x1xf32> -> vector<8x1xf32>
    %65 = vector.broadcast %64 : vector<8x1xf32> to vector<8x8xf32>
    %66 = arith.mulf %61, %65 : vector<8x8xf32>
    %cst_41 = arith.constant dense<0.000000e+00> : vector<8x8xf32>
    %67 = tpu.matmul %66, %52, %cst_41 {dimension_numbers = #tpu.dot_dimension_numbers<[1], [0], [0], [1], [0, 0, 1, 1], [], []>} : vector<8x8xf32>, vector<8x8xf32>, vector<8x8xf32> -> vector<8x8xf32>
    %68 = vector.extract_strided_slice %24 {offsets = [8, 0], sizes = [8, 32], strides = [1, 1]} : vector<32x32xf32> to vector<8x32xf32>
    %cst_42 = arith.constant dense<0.000000e+00> : vector<8x32xf32>
    %69 = tpu.matmul %67, %68, %cst_42 {dimension_numbers = #tpu.dot_dimension_numbers<[1], [0], [0], [1], [0, 0, 1, 1], [], []>} : vector<8x8xf32>, vector<8x32xf32>, vector<8x32xf32> -> vector<8x32xf32>
    %70 = arith.addf %49, %69 : vector<8x32xf32>
    %71 = vector.extract_strided_slice %7 {offsets = [0, 16], sizes = [8, 8], strides = [1, 1]} : vector<16x32xf32> to vector<8x8xf32>
    %72 = vector.extract_strided_slice %15 {offsets = [0, 16], sizes = [8, 8], strides = [1, 1]} : vector<16x32xf32> to vector<8x8xf32>
    %73 = vector.extract_strided_slice %23 {offsets = [0, 16], sizes = [8, 8], strides = [1, 1]} : vector<16x32xf32> to vector<8x8xf32>
    %c0_43 = arith.constant 0 : index
    %c0_44 = arith.constant 0 : index
    %c0_45 = arith.constant 0 : index
    %74 = vector.load %arg9[%c0_43, %c0_44, %c0_45] : memref<2x8x8xf32, #tpu.memory_space<vmem>>, vector<1x8x8xf32>
    %75 = vector.shape_cast %74 : vector<1x8x8xf32> to vector<8x8xf32>
    %76 = arith.addf %71, %75 : vector<8x8xf32>
    %c0_46 = arith.constant 0 : index
    %c0_47 = arith.constant 0 : index
    %c0_48 = arith.constant 0 : index
    %77 = vector.load %arg10[%c0_46, %c0_47, %c0_48] : memref<2x8x8xf32, #tpu.memory_space<vmem>>, vector<1x8x8xf32>
    %78 = vector.shape_cast %77 : vector<1x8x8xf32> to vector<8x8xf32>
    %79 = arith.addf %72, %78 : vector<8x8xf32>
    %cst_49 = arith.constant dense<0.000000e+00> : vector<8x8xf32>
    %80 = tpu.matmul %76, %79, %cst_49 {dimension_numbers = #tpu.dot_dimension_numbers<[1], [1], [0], [0], [0, 0, 1, 0], [], []>} : vector<8x8xf32>, vector<8x8xf32>, vector<8x8xf32> -> vector<8x8xf32>
    %cst_50 = arith.constant 0.353553385 : f32
    %81 = vector.broadcast %cst_50 : f32 to vector<8x8xf32>
    %82 = arith.mulf %80, %81 : vector<8x8xf32>
    %c0_51 = arith.constant 0 : index
    %c0_52 = arith.constant 0 : index
    %c0_53 = arith.constant 0 : index
    %83 = vector.load %arg12[%c0_51, %c0_52, %c0_53] : memref<2x1x8xf32, #tpu.memory_space<vmem>>, vector<1x1x8xf32>
    %84 = vector.shape_cast %83 : vector<1x1x8xf32> to vector<1x8xf32>
    %cst_54 = arith.constant dense<0.000000e+00> : vector<8x1xf32>
    %85 = tpu.matmul %73, %84, %cst_54 {dimension_numbers = #tpu.dot_dimension_numbers<[1], [1], [0], [0], [0, 0, 1, 0], [], []>} : vector<8x8xf32>, vector<1x8xf32>, vector<8x1xf32> -> vector<8x1xf32>
    %cst_55 = arith.constant dense<0.000000e+00> : vector<1x8xf32>
    %86 = tpu.matmul %84, %73, %cst_55 {dimension_numbers = #tpu.dot_dimension_numbers<[1], [1], [0], [0], [0, 0, 1, 0], [], []>} : vector<1x8xf32>, vector<8x8xf32>, vector<1x8xf32> -> vector<1x8xf32>
    %c0_56 = arith.constant 0 : index
    %c0_57 = arith.constant 0 : index
    %c0_58 = arith.constant 0 : index
    %87 = vector.load %arg11[%c0_56, %c0_57, %c0_58] : memref<2x8x8xf32, #tpu.memory_space<vmem>>, vector<1x8x8xf32>
    %88 = vector.shape_cast %87 : vector<1x8x8xf32> to vector<8x8xf32>
    %89 = vector.broadcast %85 : vector<8x1xf32> to vector<8x8xf32>
    %90 = arith.addf %88, %89 : vector<8x8xf32>
    %91 = vector.broadcast %86 : vector<1x8xf32> to vector<8x8xf32>
    %92 = arith.addf %90, %91 : vector<8x8xf32>
    %93 = arith.addf %82, %92 : vector<8x8xf32>
    %94 = arith.addf %93, %27 : vector<8x8xf32>
    %cst_59 = arith.constant dense<0xFF800000> : vector<8xf32>
    %95 = vector.multi_reduction <maximumf>, %94, %cst_59 [1] : vector<8x8xf32> to vector<8xf32>
    %96 = vector.shape_cast %95 : vector<8xf32> to vector<8x1xf32>
    %97 = vector.broadcast %96 : vector<8x1xf32> to vector<8x8xf32>
    %98 = arith.subf %94, %97 : vector<8x8xf32>
    %99 = math.exp %98 : vector<8x8xf32>
    %cst_60 = arith.constant dense<0.000000e+00> : vector<8xf32>
    %100 = vector.multi_reduction <add>, %99, %cst_60 [1] : vector<8x8xf32> to vector<8xf32>
    %101 = vector.shape_cast %100 : vector<8xf32> to vector<8x1xf32>
    %102 = tpu.reciprocal %101 {approx = true} : vector<8x1xf32> -> vector<8x1xf32>
    %103 = vector.broadcast %102 : vector<8x1xf32> to vector<8x8xf32>
    %104 = arith.mulf %99, %103 : vector<8x8xf32>
    %cst_61 = arith.constant dense<0.000000e+00> : vector<8x8xf32>
    %105 = tpu.matmul %104, %73, %cst_61 {dimension_numbers = #tpu.dot_dimension_numbers<[1], [0], [0], [1], [0, 0, 1, 1], [], []>} : vector<8x8xf32>, vector<8x8xf32>, vector<8x8xf32> -> vector<8x8xf32>
    %106 = vector.extract_strided_slice %24 {offsets = [16, 0], sizes = [8, 32], strides = [1, 1]} : vector<32x32xf32> to vector<8x32xf32>
    %cst_62 = arith.constant dense<0.000000e+00> : vector<8x32xf32>
    %107 = tpu.matmul %105, %106, %cst_62 {dimension_numbers = #tpu.dot_dimension_numbers<[1], [0], [0], [1], [0, 0, 1, 1], [], []>} : vector<8x8xf32>, vector<8x32xf32>, vector<8x32xf32> -> vector<8x32xf32>
    %108 = arith.addf %70, %107 : vector<8x32xf32>
    %109 = vector.extract_strided_slice %7 {offsets = [0, 24], sizes = [8, 8], strides = [1, 1]} : vector<16x32xf32> to vector<8x8xf32>
    %110 = vector.extract_strided_slice %15 {offsets = [0, 24], sizes = [8, 8], strides = [1, 1]} : vector<16x32xf32> to vector<8x8xf32>
    %111 = vector.extract_strided_slice %23 {offsets = [0, 24], sizes = [8, 8], strides = [1, 1]} : vector<16x32xf32> to vector<8x8xf32>
    %c1_63 = arith.constant 1 : index
    %c0_64 = arith.constant 0 : index
    %c0_65 = arith.constant 0 : index
    %112 = vector.load %arg9[%c1_63, %c0_64, %c0_65] : memref<2x8x8xf32, #tpu.memory_space<vmem>>, vector<1x8x8xf32>
    %113 = vector.shape_cast %112 : vector<1x8x8xf32> to vector<8x8xf32>
    %114 = arith.addf %109, %113 : vector<8x8xf32>
    %c1_66 = arith.constant 1 : index
    %c0_67 = arith.constant 0 : index
    %c0_68 = arith.constant 0 : index
    %115 = vector.load %arg10[%c1_66, %c0_67, %c0_68] : memref<2x8x8xf32, #tpu.memory_space<vmem>>, vector<1x8x8xf32>
    %116 = vector.shape_cast %115 : vector<1x8x8xf32> to vector<8x8xf32>
    %117 = arith.addf %110, %116 : vector<8x8xf32>
    %cst_69 = arith.constant dense<0.000000e+00> : vector<8x8xf32>
    %118 = tpu.matmul %114, %117, %cst_69 {dimension_numbers = #tpu.dot_dimension_numbers<[1], [1], [0], [0], [0, 0, 1, 0], [], []>} : vector<8x8xf32>, vector<8x8xf32>, vector<8x8xf32> -> vector<8x8xf32>
    %cst_70 = arith.constant 0.353553385 : f32
    %119 = vector.broadcast %cst_70 : f32 to vector<8x8xf32>
    %120 = arith.mulf %118, %119 : vector<8x8xf32>
    %c1_71 = arith.constant 1 : index
    %c0_72 = arith.constant 0 : index
    %c0_73 = arith.constant 0 : index
    %121 = vector.load %arg12[%c1_71, %c0_72, %c0_73] : memref<2x1x8xf32, #tpu.memory_space<vmem>>, vector<1x1x8xf32>
    %122 = vector.shape_cast %121 : vector<1x1x8xf32> to vector<1x8xf32>
    %cst_74 = arith.constant dense<0.000000e+00> : vector<8x1xf32>
    %123 = tpu.matmul %111, %122, %cst_74 {dimension_numbers = #tpu.dot_dimension_numbers<[1], [1], [0], [0], [0, 0, 1, 0], [], []>} : vector<8x8xf32>, vector<1x8xf32>, vector<8x1xf32> -> vector<8x1xf32>
    %cst_75 = arith.constant dense<0.000000e+00> : vector<1x8xf32>
    %124 = tpu.matmul %122, %111, %cst_75 {dimension_numbers = #tpu.dot_dimension_numbers<[1], [1], [0], [0], [0, 0, 1, 0], [], []>} : vector<1x8xf32>, vector<8x8xf32>, vector<1x8xf32> -> vector<1x8xf32>
    %c1_76 = arith.constant 1 : index
    %c0_77 = arith.constant 0 : index
    %c0_78 = arith.constant 0 : index
    %125 = vector.load %arg11[%c1_76, %c0_77, %c0_78] : memref<2x8x8xf32, #tpu.memory_space<vmem>>, vector<1x8x8xf32>
    %126 = vector.shape_cast %125 : vector<1x8x8xf32> to vector<8x8xf32>
    %127 = vector.broadcast %123 : vector<8x1xf32> to vector<8x8xf32>
    %128 = arith.addf %126, %127 : vector<8x8xf32>
    %129 = vector.broadcast %124 : vector<1x8xf32> to vector<8x8xf32>
    %130 = arith.addf %128, %129 : vector<8x8xf32>
    %131 = arith.addf %120, %130 : vector<8x8xf32>
    %132 = arith.addf %131, %27 : vector<8x8xf32>
    %cst_79 = arith.constant dense<0xFF800000> : vector<8xf32>
    %133 = vector.multi_reduction <maximumf>, %132, %cst_79 [1] : vector<8x8xf32> to vector<8xf32>
    %134 = vector.shape_cast %133 : vector<8xf32> to vector<8x1xf32>
    %135 = vector.broadcast %134 : vector<8x1xf32> to vector<8x8xf32>
    %136 = arith.subf %132, %135 : vector<8x8xf32>
    %137 = math.exp %136 : vector<8x8xf32>
    %cst_80 = arith.constant dense<0.000000e+00> : vector<8xf32>
    %138 = vector.multi_reduction <add>, %137, %cst_80 [1] : vector<8x8xf32> to vector<8xf32>
    %139 = vector.shape_cast %138 : vector<8xf32> to vector<8x1xf32>
    %140 = tpu.reciprocal %139 {approx = true} : vector<8x1xf32> -> vector<8x1xf32>
    %141 = vector.broadcast %140 : vector<8x1xf32> to vector<8x8xf32>
    %142 = arith.mulf %137, %141 : vector<8x8xf32>
    %cst_81 = arith.constant dense<0.000000e+00> : vector<8x8xf32>
    %143 = tpu.matmul %142, %111, %cst_81 {dimension_numbers = #tpu.dot_dimension_numbers<[1], [0], [0], [1], [0, 0, 1, 1], [], []>} : vector<8x8xf32>, vector<8x8xf32>, vector<8x8xf32> -> vector<8x8xf32>
    %144 = vector.extract_strided_slice %24 {offsets = [24, 0], sizes = [8, 32], strides = [1, 1]} : vector<32x32xf32> to vector<8x32xf32>
    %cst_82 = arith.constant dense<0.000000e+00> : vector<8x32xf32>
    %145 = tpu.matmul %143, %144, %cst_82 {dimension_numbers = #tpu.dot_dimension_numbers<[1], [0], [0], [1], [0, 0, 1, 1], [], []>} : vector<8x8xf32>, vector<8x32xf32>, vector<8x32xf32> -> vector<8x32xf32>
    %146 = arith.addf %108, %145 : vector<8x32xf32>
    %147 = vector.broadcast %25 : vector<1x32xf32> to vector<8x32xf32>
    %148 = arith.addf %146, %147 : vector<8x32xf32>
    %c0_83 = arith.constant 0 : index
    %c0_84 = arith.constant 0 : index
    %149 = vector.load %arg13[%c0_83, %c0_84] : memref<16x32xf32, #tpu.memory_space<vmem>>, vector<8x32xf32>
    tpu.vector_store %arg13[%c0_83, %c0_84], %148 {strides = array<i32>} : memref<16x32xf32, #tpu.memory_space<vmem>>, vector<8x32xf32>,
    %c1_85 = arith.constant 1 : index
    %c0_86 = arith.constant 0 : index
    %c0_87 = arith.constant 0 : index
    %150 = vector.load %arg8[%c1_85, %c0_86, %c0_87] : memref<2x8x8xf32, #tpu.memory_space<vmem>>, vector<1x8x8xf32>
    %151 = vector.shape_cast %150 : vector<1x8x8xf32> to vector<8x8xf32>
    %cst_88 = arith.constant 0.000000e+00 : f32
    %152 = vector.broadcast %cst_88 : f32 to vector<8x32xf32>
    %153 = vector.extract_strided_slice %7 {offsets = [8, 0], sizes = [8, 8], strides = [1, 1]} : vector<16x32xf32> to vector<8x8xf32>
    %154 = vector.extract_strided_slice %15 {offsets = [8, 0], sizes = [8, 8], strides = [1, 1]} : vector<16x32xf32> to vector<8x8xf32>
    %155 = vector.extract_strided_slice %23 {offsets = [8, 0], sizes = [8, 8], strides = [1, 1]} : vector<16x32xf32> to vector<8x8xf32>
    %cst_89 = arith.constant dense<0.000000e+00> : vector<8x8xf32>
    %156 = tpu.matmul %153, %154, %cst_89 {dimension_numbers = #tpu.dot_dimension_numbers<[1], [1], [0], [0], [0, 0, 1, 0], [], []>} : vector<8x8xf32>, vector<8x8xf32>, vector<8x8xf32> -> vector<8x8xf32>
    %cst_90 = arith.constant 0.353553385 : f32
    %157 = vector.broadcast %cst_90 : f32 to vector<8x8xf32>
    %158 = arith.mulf %156, %157 : vector<8x8xf32>
    %159 = arith.addf %158, %151 : vector<8x8xf32>
    %cst_91 = arith.constant dense<0xFF800000> : vector<8xf32>
    %160 = vector.multi_reduction <maximumf>, %159, %cst_91 [1] : vector<8x8xf32> to vector<8xf32>
    %161 = vector.shape_cast %160 : vector<8xf32> to vector<8x1xf32>
    %162 = vector.broadcast %161 : vector<8x1xf32> to vector<8x8xf32>
    %163 = arith.subf %159, %162 : vector<8x8xf32>
    %164 = math.exp %163 : vector<8x8xf32>
    %cst_92 = arith.constant dense<0.000000e+00> : vector<8xf32>
    %165 = vector.multi_reduction <add>, %164, %cst_92 [1] : vector<8x8xf32> to vector<8xf32>
    %166 = vector.shape_cast %165 : vector<8xf32> to vector<8x1xf32>
    %167 = tpu.reciprocal %166 {approx = true} : vector<8x1xf32> -> vector<8x1xf32>
    %168 = vector.broadcast %167 : vector<8x1xf32> to vector<8x8xf32>
    %169 = arith.mulf %164, %168 : vector<8x8xf32>
    %cst_93 = arith.constant dense<0.000000e+00> : vector<8x8xf32>
    %170 = tpu.matmul %169, %155, %cst_93 {dimension_numbers = #tpu.dot_dimension_numbers<[1], [0], [0], [1], [0, 0, 1, 1], [], []>} : vector<8x8xf32>, vector<8x8xf32>, vector<8x8xf32> -> vector<8x8xf32>
    %171 = vector.extract_strided_slice %24 {offsets = [0, 0], sizes = [8, 32], strides = [1, 1]} : vector<32x32xf32> to vector<8x32xf32>
    %cst_94 = arith.constant dense<0.000000e+00> : vector<8x32xf32>
    %172 = tpu.matmul %170, %171, %cst_94 {dimension_numbers = #tpu.dot_dimension_numbers<[1], [0], [0], [1], [0, 0, 1, 1], [], []>} : vector<8x8xf32>, vector<8x32xf32>, vector<8x32xf32> -> vector<8x32xf32>
    %173 = arith.addf %152, %172 : vector<8x32xf32>
    %174 = vector.extract_strided_slice %7 {offsets = [8, 8], sizes = [8, 8], strides = [1, 1]} : vector<16x32xf32> to vector<8x8xf32>
    %175 = vector.extract_strided_slice %15 {offsets = [8, 8], sizes = [8, 8], strides = [1, 1]} : vector<16x32xf32> to vector<8x8xf32>
    %176 = vector.extract_strided_slice %23 {offsets = [8, 8], sizes = [8, 8], strides = [1, 1]} : vector<16x32xf32> to vector<8x8xf32>
    %cst_95 = arith.constant dense<0.000000e+00> : vector<8x8xf32>
    %177 = tpu.matmul %174, %175, %cst_95 {dimension_numbers = #tpu.dot_dimension_numbers<[1], [1], [0], [0], [0, 0, 1, 0], [], []>} : vector<8x8xf32>, vector<8x8xf32>, vector<8x8xf32> -> vector<8x8xf32>
    %cst_96 = arith.constant 0.353553385 : f32
    %178 = vector.broadcast %cst_96 : f32 to vector<8x8xf32>
    %179 = arith.mulf %177, %178 : vector<8x8xf32>
    %180 = arith.addf %179, %151 : vector<8x8xf32>
    %cst_97 = arith.constant dense<0xFF800000> : vector<8xf32>
    %181 = vector.multi_reduction <maximumf>, %180, %cst_97 [1] : vector<8x8xf32> to vector<8xf32>
    %182 = vector.shape_cast %181 : vector<8xf32> to vector<8x1xf32>
    %183 = vector.broadcast %182 : vector<8x1xf32> to vector<8x8xf32>
    %184 = arith.subf %180, %183 : vector<8x8xf32>
    %185 = math.exp %184 : vector<8x8xf32>
    %cst_98 = arith.constant dense<0.000000e+00> : vector<8xf32>
    %186 = vector.multi_reduction <add>, %185, %cst_98 [1] : vector<8x8xf32> to vector<8xf32>
    %187 = vector.shape_cast %186 : vector<8xf32> to vector<8x1xf32>
    %188 = tpu.reciprocal %187 {approx = true} : vector<8x1xf32> -> vector<8x1xf32>
    %189 = vector.broadcast %188 : vector<8x1xf32> to vector<8x8xf32>
    %190 = arith.mulf %185, %189 : vector<8x8xf32>
    %cst_99 = arith.constant dense<0.000000e+00> : vector<8x8xf32>
    %191 = tpu.matmul %190, %176, %cst_99 {dimension_numbers = #tpu.dot_dimension_numbers<[1], [0], [0], [1], [0, 0, 1, 1], [], []>} : vector<8x8xf32>, vector<8x8xf32>, vector<8x8xf32> -> vector<8x8xf32>
    %192 = vector.extract_strided_slice %24 {offsets = [8, 0], sizes = [8, 32], strides = [1, 1]} : vector<32x32xf32> to vector<8x32xf32>
    %cst_100 = arith.constant dense<0.000000e+00> : vector<8x32xf32>
    %193 = tpu.matmul %191, %192, %cst_100 {dimension_numbers = #tpu.dot_dimension_numbers<[1], [0], [0], [1], [0, 0, 1, 1], [], []>} : vector<8x8xf32>, vector<8x32xf32>, vector<8x32xf32> -> vector<8x32xf32>
    %194 = arith.addf %173, %193 : vector<8x32xf32>
    %195 = vector.extract_strided_slice %7 {offsets = [8, 16], sizes = [8, 8], strides = [1, 1]} : vector<16x32xf32> to vector<8x8xf32>
    %196 = vector.extract_strided_slice %15 {offsets = [8, 16], sizes = [8, 8], strides = [1, 1]} : vector<16x32xf32> to vector<8x8xf32>
    %197 = vector.extract_strided_slice %23 {offsets = [8, 16], sizes = [8, 8], strides = [1, 1]} : vector<16x32xf32> to vector<8x8xf32>
    %c0_101 = arith.constant 0 : index
    %c0_102 = arith.constant 0 : index
    %c0_103 = arith.constant 0 : index
    %198 = vector.load %arg9[%c0_101, %c0_102, %c0_103] : memref<2x8x8xf32, #tpu.memory_space<vmem>>, vector<1x8x8xf32>
    %199 = vector.shape_cast %198 : vector<1x8x8xf32> to vector<8x8xf32>
    %200 = arith.addf %195, %199 : vector<8x8xf32>
    %c0_104 = arith.constant 0 : index
    %c0_105 = arith.constant 0 : index
    %c0_106 = arith.constant 0 : index
    %201 = vector.load %arg10[%c0_104, %c0_105, %c0_106] : memref<2x8x8xf32, #tpu.memory_space<vmem>>, vector<1x8x8xf32>
    %202 = vector.shape_cast %201 : vector<1x8x8xf32> to vector<8x8xf32>
    %203 = arith.addf %196, %202 : vector<8x8xf32>
    %cst_107 = arith.constant dense<0.000000e+00> : vector<8x8xf32>
    %204 = tpu.matmul %200, %203, %cst_107 {dimension_numbers = #tpu.dot_dimension_numbers<[1], [1], [0], [0], [0, 0, 1, 0], [], []>} : vector<8x8xf32>, vector<8x8xf32>, vector<8x8xf32> -> vector<8x8xf32>
    %cst_108 = arith.constant 0.353553385 : f32
    %205 = vector.broadcast %cst_108 : f32 to vector<8x8xf32>
    %206 = arith.mulf %204, %205 : vector<8x8xf32>
    %c0_109 = arith.constant 0 : index
    %c0_110 = arith.constant 0 : index
    %c0_111 = arith.constant 0 : index
    %207 = vector.load %arg12[%c0_109, %c0_110, %c0_111] : memref<2x1x8xf32, #tpu.memory_space<vmem>>, vector<1x1x8xf32>
    %208 = vector.shape_cast %207 : vector<1x1x8xf32> to vector<1x8xf32>
    %cst_112 = arith.constant dense<0.000000e+00> : vector<8x1xf32>
    %209 = tpu.matmul %197, %208, %cst_112 {dimension_numbers = #tpu.dot_dimension_numbers<[1], [1], [0], [0], [0, 0, 1, 0], [], []>} : vector<8x8xf32>, vector<1x8xf32>, vector<8x1xf32> -> vector<8x1xf32>
    %cst_113 = arith.constant dense<0.000000e+00> : vector<1x8xf32>
    %210 = tpu.matmul %208, %197, %cst_113 {dimension_numbers = #tpu.dot_dimension_numbers<[1], [1], [0], [0], [0, 0, 1, 0], [], []>} : vector<1x8xf32>, vector<8x8xf32>, vector<1x8xf32> -> vector<1x8xf32>
    %c0_114 = arith.constant 0 : index
    %c0_115 = arith.constant 0 : index
    %c0_116 = arith.constant 0 : index
    %211 = vector.load %arg11[%c0_114, %c0_115, %c0_116] : memref<2x8x8xf32, #tpu.memory_space<vmem>>, vector<1x8x8xf32>
    %212 = vector.shape_cast %211 : vector<1x8x8xf32> to vector<8x8xf32>
    %213 = vector.broadcast %209 : vector<8x1xf32> to vector<8x8xf32>
    %214 = arith.addf %212, %213 : vector<8x8xf32>
    %215 = vector.broadcast %210 : vector<1x8xf32> to vector<8x8xf32>
    %216 = arith.addf %214, %215 : vector<8x8xf32>
    %217 = arith.addf %206, %216 : vector<8x8xf32>
    %218 = arith.addf %217, %151 : vector<8x8xf32>
    %cst_117 = arith.constant dense<0xFF800000> : vector<8xf32>
    %219 = vector.multi_reduction <maximumf>, %218, %cst_117 [1] : vector<8x8xf32> to vector<8xf32>
    %220 = vector.shape_cast %219 : vector<8xf32> to vector<8x1xf32>
    %221 = vector.broadcast %220 : vector<8x1xf32> to vector<8x8xf32>
    %222 = arith.subf %218, %221 : vector<8x8xf32>
    %223 = math.exp %222 : vector<8x8xf32>
    %cst_118 = arith.constant dense<0.000000e+00> : vector<8xf32>
    %224 = vector.multi_reduction <add>, %223, %cst_118 [1] : vector<8x8xf32> to vector<8xf32>
    %225 = vector.shape_cast %224 : vector<8xf32> to vector<8x1xf32>
    %226 = tpu.reciprocal %225 {approx = true} : vector<8x1xf32> -> vector<8x1xf32>
    %227 = vector.broadcast %226 : vector<8x1xf32> to vector<8x8xf32>
    %228 = arith.mulf %223, %227 : vector<8x8xf32>
    %cst_119 = arith.constant dense<0.000000e+00> : vector<8x8xf32>
    %229 = tpu.matmul %228, %197, %cst_119 {dimension_numbers = #tpu.dot_dimension_numbers<[1], [0], [0], [1], [0, 0, 1, 1], [], []>} : vector<8x8xf32>, vector<8x8xf32>, vector<8x8xf32> -> vector<8x8xf32>
    %230 = vector.extract_strided_slice %24 {offsets = [16, 0], sizes = [8, 32], strides = [1, 1]} : vector<32x32xf32> to vector<8x32xf32>
    %cst_120 = arith.constant dense<0.000000e+00> : vector<8x32xf32>
    %231 = tpu.matmul %229, %230, %cst_120 {dimension_numbers = #tpu.dot_dimension_numbers<[1], [0], [0], [1], [0, 0, 1, 1], [], []>} : vector<8x8xf32>, vector<8x32xf32>, vector<8x32xf32> -> vector<8x32xf32>
    %232 = arith.addf %194, %231 : vector<8x32xf32>
    %233 = vector.extract_strided_slice %7 {offsets = [8, 24], sizes = [8, 8], strides = [1, 1]} : vector<16x32xf32> to vector<8x8xf32>
    %234 = vector.extract_strided_slice %15 {offsets = [8, 24], sizes = [8, 8], strides = [1, 1]} : vector<16x32xf32> to vector<8x8xf32>
    %235 = vector.extract_strided_slice %23 {offsets = [8, 24], sizes = [8, 8], strides = [1, 1]} : vector<16x32xf32> to vector<8x8xf32>
    %c1_121 = arith.constant 1 : index
    %c0_122 = arith.constant 0 : index
    %c0_123 = arith.constant 0 : index
    %236 = vector.load %arg9[%c1_121, %c0_122, %c0_123] : memref<2x8x8xf32, #tpu.memory_space<vmem>>, vector<1x8x8xf32>
    %237 = vector.shape_cast %236 : vector<1x8x8xf32> to vector<8x8xf32>
    %238 = arith.addf %233, %237 : vector<8x8xf32>
    %c1_124 = arith.constant 1 : index
    %c0_125 = arith.constant 0 : index
    %c0_126 = arith.constant 0 : index
    %239 = vector.load %arg10[%c1_124, %c0_125, %c0_126] : memref<2x8x8xf32, #tpu.memory_space<vmem>>, vector<1x8x8xf32>
    %240 = vector.shape_cast %239 : vector<1x8x8xf32> to vector<8x8xf32>
    %241 = arith.addf %234, %240 : vector<8x8xf32>
    %cst_127 = arith.constant dense<0.000000e+00> : vector<8x8xf32>
    %242 = tpu.matmul %238, %241, %cst_127 {dimension_numbers = #tpu.dot_dimension_numbers<[1], [1], [0], [0], [0, 0, 1, 0], [], []>} : vector<8x8xf32>, vector<8x8xf32>, vector<8x8xf32> -> vector<8x8xf32>
    %cst_128 = arith.constant 0.353553385 : f32
    %243 = vector.broadcast %cst_128 : f32 to vector<8x8xf32>
    %244 = arith.mulf %242, %243 : vector<8x8xf32>
    %c1_129 = arith.constant 1 : index
    %c0_130 = arith.constant 0 : index
    %c0_131 = arith.constant 0 : index
    %245 = vector.load %arg12[%c1_129, %c0_130, %c0_131] : memref<2x1x8xf32, #tpu.memory_space<vmem>>, vector<1x1x8xf32>
    %246 = vector.shape_cast %245 : vector<1x1x8xf32> to vector<1x8xf32>
    %cst_132 = arith.constant dense<0.000000e+00> : vector<8x1xf32>
    %247 = tpu.matmul %235, %246, %cst_132 {dimension_numbers = #tpu.dot_dimension_numbers<[1], [1], [0], [0], [0, 0, 1, 0], [], []>} : vector<8x8xf32>, vector<1x8xf32>, vector<8x1xf32> -> vector<8x1xf32>
    %cst_133 = arith.constant dense<0.000000e+00> : vector<1x8xf32>
    %248 = tpu.matmul %246, %235, %cst_133 {dimension_numbers = #tpu.dot_dimension_numbers<[1], [1], [0], [0], [0, 0, 1, 0], [], []>} : vector<1x8xf32>, vector<8x8xf32>, vector<1x8xf32> -> vector<1x8xf32>
    %c1_134 = arith.constant 1 : index
    %c0_135 = arith.constant 0 : index
    %c0_136 = arith.constant 0 : index
    %249 = vector.load %arg11[%c1_134, %c0_135, %c0_136] : memref<2x8x8xf32, #tpu.memory_space<vmem>>, vector<1x8x8xf32>
    %250 = vector.shape_cast %249 : vector<1x8x8xf32> to vector<8x8xf32>
    %251 = vector.broadcast %247 : vector<8x1xf32> to vector<8x8xf32>
    %252 = arith.addf %250, %251 : vector<8x8xf32>
    %253 = vector.broadcast %248 : vector<1x8xf32> to vector<8x8xf32>
    %254 = arith.addf %252, %253 : vector<8x8xf32>
    %255 = arith.addf %244, %254 : vector<8x8xf32>
    %256 = arith.addf %255, %151 : vector<8x8xf32>
    %cst_137 = arith.constant dense<0xFF800000> : vector<8xf32>
    %257 = vector.multi_reduction <maximumf>, %256, %cst_137 [1] : vector<8x8xf32> to vector<8xf32>
    %258 = vector.shape_cast %257 : vector<8xf32> to vector<8x1xf32>
    %259 = vector.broadcast %258 : vector<8x1xf32> to vector<8x8xf32>
    %260 = arith.subf %256, %259 : vector<8x8xf32>
    %261 = math.exp %260 : vector<8x8xf32>
    %cst_138 = arith.constant dense<0.000000e+00> : vector<8xf32>
    %262 = vector.multi_reduction <add>, %261, %cst_138 [1] : vector<8x8xf32> to vector<8xf32>
    %263 = vector.shape_cast %262 : vector<8xf32> to vector<8x1xf32>
    %264 = tpu.reciprocal %263 {approx = true} : vector<8x1xf32> -> vector<8x1xf32>
    %265 = vector.broadcast %264 : vector<8x1xf32> to vector<8x8xf32>
    %266 = arith.mulf %261, %265 : vector<8x8xf32>
    %cst_139 = arith.constant dense<0.000000e+00> : vector<8x8xf32>
    %267 = tpu.matmul %266, %235, %cst_139 {dimension_numbers = #tpu.dot_dimension_numbers<[1], [0], [0], [1], [0, 0, 1, 1], [], []>} : vector<8x8xf32>, vector<8x8xf32>, vector<8x8xf32> -> vector<8x8xf32>
    %268 = vector.extract_strided_slice %24 {offsets = [24, 0], sizes = [8, 32], strides = [1, 1]} : vector<32x32xf32> to vector<8x32xf32>
    %cst_140 = arith.constant dense<0.000000e+00> : vector<8x32xf32>
    %269 = tpu.matmul %267, %268, %cst_140 {dimension_numbers = #tpu.dot_dimension_numbers<[1], [0], [0], [1], [0, 0, 1, 1], [], []>} : vector<8x8xf32>, vector<8x32xf32>, vector<8x32xf32> -> vector<8x32xf32>
    %270 = arith.addf %232, %269 : vector<8x32xf32>
    %271 = vector.broadcast %25 : vector<1x32xf32> to vector<8x32xf32>
    %272 = arith.addf %270, %271 : vector<8x32xf32>
    %c8 = arith.constant 8 : index
    %c0_141 = arith.constant 0 : index
    %273 = vector.load %arg13[%c8, %c0_141] : memref<16x32xf32, #tpu.memory_space<vmem>>, vector<8x32xf32>
    tpu.vector_store %arg13[%c8, %c0_141], %272 {strides = array<i32>} : memref<16x32xf32, #tpu.memory_space<vmem>>, vector<8x32xf32>,
    return
  }
  func.func @transform_0(%arg0: i32) -> (i32, i32) {
    %c0_i32 = arith.constant 0 : i32
    %c0_i32_0 = arith.constant 0 : i32
    %c0_i32_1 = arith.constant 0 : i32
    return %c0_i32, %c0_i32_0 : i32, i32
  }
  func.func @transform_1(%arg0: i32) -> (i32, i32) {
    %c0_i32 = arith.constant 0 : i32
    %c0_i32_0 = arith.constant 0 : i32
    %c0_i32_1 = arith.constant 0 : i32
    return %c0_i32, %c0_i32_0 : i32, i32
  }
  func.func @transform_2(%arg0: i32) -> (i32, i32) {
    %c0_i32 = arith.constant 0 : i32
    %c0_i32_0 = arith.constant 0 : i32
    %c0_i32_1 = arith.constant 0 : i32
    return %c0_i32, %c0_i32_0 : i32, i32
  }
  func.func @transform_3(%arg0: i32) -> (i32, i32, i32) {
    %c0_i32 = arith.constant 0 : i32
    %c0_i32_0 = arith.constant 0 : i32
    %c0_i32_1 = arith.constant 0 : i32
    %c0_i32_2 = arith.constant 0 : i32
    return %c0_i32, %c0_i32_0, %c0_i32_1 : i32, i32, i32
  }
  func.func @transform_4(%arg0: i32) -> (i32, i32, i32) {
    %c0_i32 = arith.constant 0 : i32
    %c0_i32_0 = arith.constant 0 : i32
    %c0_i32_1 = arith.constant 0 : i32
    %c0_i32_2 = arith.constant 0 : i32
    return %c0_i32, %c0_i32_0, %c0_i32_1 : i32, i32, i32
  }
  func.func @transform_5(%arg0: i32) -> (i32, i32) {
    %c0_i32 = arith.constant 0 : i32
    %c0_i32_0 = arith.constant 0 : i32
    %c0_i32_1 = arith.constant 0 : i32
    return %c0_i32, %c0_i32_0 : i32, i32
  }
  func.func @transform_6(%arg0: i32) -> (i32, i32) {
    %c0_i32 = arith.constant 0 : i32
    %c0_i32_0 = arith.constant 0 : i32
    %c0_i32_1 = arith.constant 0 : i32
    return %c0_i32, %c0_i32_0 : i32, i32
  }
  func.func @transform_7(%arg0: i32) -> (i32, i32, i32) {
    %c0_i32 = arith.constant 0 : i32
    %c0_i32_0 = arith.constant 0 : i32
    %c0_i32_1 = arith.constant 0 : i32
    %c0_i32_2 = arith.constant 0 : i32
    return %c0_i32, %c0_i32_0, %c0_i32_1 : i32, i32, i32
  }
  func.func @transform_8(%arg0: i32) -> (i32, i32, i32) {
    %c0_i32 = arith.constant 0 : i32
    %c0_i32_0 = arith.constant 0 : i32
    %c0_i32_1 = arith.constant 0 : i32
    %c0_i32_2 = arith.constant 0 : i32
    return %c0_i32, %c0_i32_0, %c0_i32_1 : i32, i32, i32
  }
  func.func @transform_9(%arg0: i32) -> (i32, i32, i32) {
    %c0_i32 = arith.constant 0 : i32
    %c0_i32_0 = arith.constant 0 : i32
    %c0_i32_1 = arith.constant 0 : i32
    %c0_i32_2 = arith.constant 0 : i32
    return %c0_i32, %c0_i32_0, %c0_i32_1 : i32, i32, i32
  }
  func.func @transform_10(%arg0: i32) -> (i32, i32, i32) {
    %c0_i32 = arith.constant 0 : i32
    %c0_i32_0 = arith.constant 0 : i32
    %c0_i32_1 = arith.constant 0 : i32
    %c0_i32_2 = arith.constant 0 : i32
    return %c0_i32, %c0_i32_0, %c0_i32_1 : i32, i32, i32
  }
  func.func @transform_11(%arg0: i32) -> (i32, i32, i32) {
    %c0_i32 = arith.constant 0 : i32
    %c0_i32_0 = arith.constant 0 : i32
    %c0_i32_1 = arith.constant 0 : i32
    %c0_i32_2 = arith.constant 0 : i32
    return %c0_i32, %c0_i32_0, %c0_i32_1 : i32, i32, i32
  }
  func.func @transform_12(%arg0: i32) -> (i32, i32) {
    %c0_i32 = arith.constant 0 : i32
    %c0_i32_0 = arith.constant 0 : i32
    %c0_i32_1 = arith.constant 0 : i32
    return %c0_i32, %c0_i32_0 : i32, i32
  }
}

</mosaic_0001>

<llo_original>
// kernel: mha_forward.1
$region0: #{mha_forward.1}
  #allocation0 [shape = 'u32[]', space=smem, size = 0x4, offset = 0x4, fixed_abs, tag = 'smem constant byte address 0x4 - core index']
  #allocation1 [shape = 'u32[144,128]{1,0:T(1,128)}', space=vmem, size = 0x12000, scoped, tag = 'internal scratch']
  %s0 = inlined_call_operand.vmem [shape: f32[16,32], index: 0, kind: input, shape index: {}]
  %s1 = inlined_call_operand.vmem [shape: f32[16,32], index: 1, kind: input, shape index: {}]
  %s2 = inlined_call_operand.vmem [shape: f32[16,32], index: 2, kind: input, shape index: {}]
  %s3 = inlined_call_operand.vmem [shape: f32[3,32,32], index: 3, kind: input, shape index: {}]
  %s4 = inlined_call_operand.vmem [shape: f32[3,1,32], index: 4, kind: input, shape index: {}]
  %s5 = inlined_call_operand.vmem [shape: f32[32,32], index: 5, kind: input, shape index: {}]
  %s6 = inlined_call_operand.vmem [shape: f32[1,32], index: 6, kind: input, shape index: {}]
  %s7 = inlined_call_operand.vmem [shape: f32[2,8,8], index: 7, kind: input, shape index: {}]
  %s8 = inlined_call_operand.vmem [shape: f32[2,8,8], index: 8, kind: input, shape index: {}]
  %s9 = inlined_call_operand.vmem [shape: f32[2,8,8], index: 9, kind: input, shape index: {}]
  %s10 = inlined_call_operand.vmem [shape: f32[2,8,8], index: 10, kind: input, shape index: {}]
  %s11 = inlined_call_operand.vmem [shape: f32[2,1,8], index: 11, kind: input, shape index: {}]
  %s12 = inlined_call_operand.hbm [shape: f32[16,32], index: 12, kind: output, shape index: {}]
  %s13 = sld [smem:[#allocation0]]
  $region58: #{mha_forward.1} parent=0
    _
  %s15 = ssub.s32 1, %s13
  %s16 = scalar_select 0, %s15, %s13
  $region1: #{mha_forward.1} parent=0
    #allocation2 [shape = 'u8[8192]{0}', space=vmem, size = 0x2000, scoped, tag = 'output window, operand 0, single buffered']
    #allocation3 [shape = 's32[1]{0}', space=sflag, size = 0x4, scoped, tag = 'scoped memory for mha_forward.1']
    %17 = vsyncpa [#allocation3], 0
    // Predicated region
    $region2: #{mha_forward.1} parent=1 // pred_check
      _
    $region3: #{mha_forward.1} parent=1 // pred_check_branch
      %19 = sbr.rel (0) target = $region5
    $region4: #{mha_forward.1} parent=1 // pred_region
      _
    $region5: #{mha_forward.1} parent=1 // pred_fallthru
      _
    // Predicated region
    $region6: #{mha_forward.1} parent=1 // pred_check
      _
    $region7: #{mha_forward.1} parent=1 // pred_check_branch
      %21 = sbr.rel (0) target = $region9
    $region8: #{mha_forward.1} parent=1 // pred_region
      _
    $region9: #{mha_forward.1} parent=1 // pred_fallthru
      _
    // Predicated region
    $region10: #{mha_forward.1} parent=1 // pred_check
      _
    $region11: #{mha_forward.1} parent=1 // pred_check_branch
      %23 = sbr.rel (0) target = $region13
    $region12: #{mha_forward.1} parent=1 // pred_region
      _
    $region13: #{mha_forward.1} parent=1 // pred_fallthru
      _
    // Predicated region
    $region14: #{mha_forward.1} parent=1 // pred_check
      _
    $region15: #{mha_forward.1} parent=1 // pred_check_branch
      %25 = sbr.rel (0) target = $region17
    $region16: #{mha_forward.1} parent=1 // pred_region
      _
    $region17: #{mha_forward.1} parent=1 // pred_fallthru
      _
    // Predicated region
    $region18: #{mha_forward.1} parent=1 // pred_check
      _
    $region19: #{mha_forward.1} parent=1 // pred_check_branch
      %27 = sbr.rel (0) target = $region21
    $region20: #{mha_forward.1} parent=1 // pred_region
      _
    $region21: #{mha_forward.1} parent=1 // pred_fallthru
      _
    // Predicated region
    $region22: #{mha_forward.1} parent=1 // pred_check
      _
    $region23: #{mha_forward.1} parent=1 // pred_check_branch
      %29 = sbr.rel (0) target = $region25
    $region24: #{mha_forward.1} parent=1 // pred_region
      _
    $region25: #{mha_forward.1} parent=1 // pred_fallthru
      _
    // Predicated region
    $region26: #{mha_forward.1} parent=1 // pred_check
      _
    $region27: #{mha_forward.1} parent=1 // pred_check_branch
      %31 = sbr.rel (0) target = $region29
    $region28: #{mha_forward.1} parent=1 // pred_region
      _
    $region29: #{mha_forward.1} parent=1 // pred_fallthru
      _
    // Predicated region
    $region30: #{mha_forward.1} parent=1 // pred_check
      _
    $region31: #{mha_forward.1} parent=1 // pred_check_branch
      %33 = sbr.rel (0) target = $region33
    $region32: #{mha_forward.1} parent=1 // pred_region
      _
    $region33: #{mha_forward.1} parent=1 // pred_fallthru
      _
    // Predicated region
    $region34: #{mha_forward.1} parent=1 // pred_check
      _
    $region35: #{mha_forward.1} parent=1 // pred_check_branch
      %35 = sbr.rel (0) target = $region37
    $region36: #{mha_forward.1} parent=1 // pred_region
      _
    $region37: #{mha_forward.1} parent=1 // pred_fallthru
      _
    // Predicated region
    $region38: #{mha_forward.1} parent=1 // pred_check
      _
    $region39: #{mha_forward.1} parent=1 // pred_check_branch
      %37 = sbr.rel (0) target = $region41
    $region40: #{mha_forward.1} parent=1 // pred_region
      _
    $region41: #{mha_forward.1} parent=1 // pred_fallthru
      _
    // Predicated region
    $region42: #{mha_forward.1} parent=1 // pred_check
      _
    $region43: #{mha_forward.1} parent=1 // pred_check_branch
      %39 = sbr.rel (0) target = $region45
    $region44: #{mha_forward.1} parent=1 // pred_region
      _
    $region45: #{mha_forward.1} parent=1 // pred_fallthru
      _
    // Predicated region
    $region46: #{mha_forward.1} parent=1 // pred_check
      _
    $region47: #{mha_forward.1} parent=1 // pred_check_branch
      %41 = sbr.rel (0) target = $region49
    $region48: #{mha_forward.1} parent=1 // pred_region
      _
    $region49: #{mha_forward.1} parent=1 // pred_fallthru
      _
    %v42 = vld [vmem:[%s0] sm:$0xff]
    %v43 = vld [vmem:[%s0 + $0x8] sm:$0xff]
    %v44 = vld [vmem:[%s3] sm:$0xff]
    %v45 = vld [vmem:[%s3 + $0x8] sm:$0xff]
    %v46 = vld [vmem:[%s3 + $0x10] sm:$0xff]
    %v47 = vld [vmem:[%s3 + $0x18] sm:$0xff]
    %v48 = vld [vmem:[%s4] sm:$0x1]
    %v50 = vlaneseq
    %v51 = vshrl.u32 %v50, 7
    %v52 = vsub.s32 0, %v51
    %v53 = vrot.slane %v48, %v52
    %vm55 = vcmask 261120
    %v57 = vsel %vm55, %v42, 0
    %v60 = vsel %vm55, %v43, 0
    %62 = vmatprep.subr.mxu0 0.0
    %63 = vmatpush1.msra.mxu0 %v44
    %64 = vmatprep.subr.mxu0 0.0
    %65 = vmatpush1.msra.mxu0 %v45
    %66 = vmatprep.subr.mxu0 0.0
    %67 = vmatpush1.msra.mxu0 %v46
    %68 = vmatprep.subr.mxu0 0.0
    %69 = vmatpush1.msra.mxu0 %v47
    %70 = vmatprep.subr.mxu0 0.0
    %71 = vmatpush1.msra.mxu0 0.0
    %72 = vmatprep.subr.mxu0 0.0
    %73 = vmatpush1.msra.mxu0 0.0
    %74 = vmatprep.subr.mxu0 0.0
    %75 = vmatpush1.msra.mxu0 0.0
    %76 = vmatprep.subr.mxu0 0.0
    %77 = vmatpush1.msra.mxu0 0.0
    %78 = vmatprep.subr.mxu0 0.0
    %79 = vmatpush1.msra.mxu0 0.0
    %80 = vmatprep.subr.mxu0 0.0
    %81 = vmatpush1.msra.mxu0 0.0
    %82 = vmatprep.subr.mxu0 0.0
    %83 = vmatpush1.msra.mxu0 0.0
    %84 = vmatprep.subr.mxu0 0.0
    %85 = vmatpush1.msra.mxu0 0.0
    %86 = vmatprep.subr.mxu0 0.0
    %87 = vmatpush1.msra.mxu0 0.0
    %88 = vmatprep.subr.mxu0 0.0
    %89 = vmatpush1.msra.mxu0 0.0
    %90 = vmatprep.subr.mxu0 0.0
    %91 = vmatpush1.msra.mxu0 0.0
    %92 = vmatprep.subr.mxu0 0.0
    %93 = vmatpush1.msra.mxu0 0.0
    %94 = vmatprep.subr.mxu0 0.0
    %95 = vmatpush1.msra.mxu0 0.0
    %96 = vmatprep.subr.mxu0 0.0
    %97 = vmatpush1.msra.mxu0 0.0
    %98 = vmatprep.subr.mxu0 0.0
    %99 = vmatpush1.msra.mxu0 0.0
    %100 = vmatprep.subr.mxu0 0.0
    %101 = vmatpush1.msra.mxu0 0.0
    %102 = vmatprep.subr.mxu0 0.0
    %103 = vmatpush1.msra.mxu0 0.0
    %104 = vmatprep.subr.mxu0 0.0
    %105 = vmatpush1.msra.mxu0 0.0
    %106 = vmatprep.subr.mxu0 0.0
    %107 = vmatpush1.msra.mxu0 0.0
    %108 = vmatprep.subr.mxu0 0.0
    %109 = vmatpush1.msra.mxu0 0.0
    %110 = vmatprep.subr.mxu0 0.0
    %111 = vmatpush1.msra.mxu0 0.0
    %112 = vmatprep.subr.mxu0 0.0
    %113 = vmatpush1.msra.mxu0 0.0
    %114 = vmatprep.subr.mxu0 0.0
    %115 = vmatpush1.msra.mxu0 0.0
    %116 = vmatprep.subr.mxu0 0.0
    %117 = vmatpush1.msra.mxu0 0.0
    %118 = vmatprep.subr.mxu0 0.0
    %119 = vmatpush1.msra.mxu0 0.0
    %120 = vmatprep.subr.mxu0 0.0
    %121 = vmatpush1.msra.mxu0 0.0
    %122 = vmatprep.subr.mxu0 0.0
    %123 = vmatpush1.msra.mxu0 0.0
    %124 = vmatprep.subr.mxu0 0.0
    %125 = vmatpush1.msra.mxu0 0.0
    %126 = vmatprep.mubr.f32.mxu0 0.0
    %127 = vmatmul.mubr.f32.gmra.mrb[0].mxu0 %v57
    %v128 = vpop.f32.mrb[0].mxu0
    %v129 = vadd.f32 %v53, %v128
    %v130 = vpop.f32.mrb[0].mxu0
    %131 = vmatprep.mubr.f32.mxu0 0.0
    %132 = vmatmul.mubr.f32.gmra.mrb[0].mxu0 %v60
    %v133 = vpop.f32.mrb[0].mxu0
    %v134 = vadd.f32 %v53, %v133
    %v135 = vpop.f32.mrb[0].mxu0
    %136 = vdwg.mxu0
    %v137 = vld [vmem:[%s1] sm:$0xff]
    %v138 = vld [vmem:[%s1 + $0x8] sm:$0xff]
    %s139 = scalar_lea.vmem %s3, 32
    %v140 = vld [vmem:[%s139] sm:$0xff]
    %v141 = vld [vmem:[%s139 + $0x8] sm:$0xff]
    %v142 = vld [vmem:[%s139 + $0x10] sm:$0xff]
    %v143 = vld [vmem:[%s139 + $0x18] sm:$0xff]
    %s144 = scalar_lea.vmem %s4, 1
    %v145 = vld [vmem:[%s144] sm:$0x1]
    %v147 = vlaneseq
    %v148 = vshrl.u32 %v147, 7
    %v149 = vsub.s32 0, %v148
    %v150 = vrot.slane %v145, %v149
    %v153 = vsel %vm55, %v137, 0
    %v156 = vsel %vm55, %v138, 0
    %158 = vmatprep.subr.mxu0 0.0
    %159 = vmatpush1.msra.mxu0 %v140
    %160 = vmatprep.subr.mxu0 0.0
    %161 = vmatpush1.msra.mxu0 %v141
    %162 = vmatprep.subr.mxu0 0.0
    %163 = vmatpush1.msra.mxu0 %v142
    %164 = vmatprep.subr.mxu0 0.0
    %165 = vmatpush1.msra.mxu0 %v143
    %166 = vmatprep.subr.mxu0 0.0
    %167 = vmatpush1.msra.mxu0 0.0
    %168 = vmatprep.subr.mxu0 0.0
    %169 = vmatpush1.msra.mxu0 0.0
    %170 = vmatprep.subr.mxu0 0.0
    %171 = vmatpush1.msra.mxu0 0.0
    %172 = vmatprep.subr.mxu0 0.0
    %173 = vmatpush1.msra.mxu0 0.0
    %174 = vmatprep.subr.mxu0 0.0
    %175 = vmatpush1.msra.mxu0 0.0
    %176 = vmatprep.subr.mxu0 0.0
    %177 = vmatpush1.msra.mxu0 0.0
    %178 = vmatprep.subr.mxu0 0.0
    %179 = vmatpush1.msra.mxu0 0.0
    %180 = vmatprep.subr.mxu0 0.0
    %181 = vmatpush1.msra.mxu0 0.0
    %182 = vmatprep.subr.mxu0 0.0
    %183 = vmatpush1.msra.mxu0 0.0
    %184 = vmatprep.subr.mxu0 0.0
    %185 = vmatpush1.msra.mxu0 0.0
    %186 = vmatprep.subr.mxu0 0.0
    %187 = vmatpush1.msra.mxu0 0.0
    %188 = vmatprep.subr.mxu0 0.0
    %189 = vmatpush1.msra.mxu0 0.0
    %190 = vmatprep.subr.mxu0 0.0
    %191 = vmatpush1.msra.mxu0 0.0
    %192 = vmatprep.subr.mxu0 0.0
    %193 = vmatpush1.msra.mxu0 0.0
    %194 = vmatprep.subr.mxu0 0.0
    %195 = vmatpush1.msra.mxu0 0.0
    %196 = vmatprep.subr.mxu0 0.0
    %197 = vmatpush1.msra.mxu0 0.0
    %198 = vmatprep.subr.mxu0 0.0
    %199 = vmatpush1.msra.mxu0 0.0
    %200 = vmatprep.subr.mxu0 0.0
    %201 = vmatpush1.msra.mxu0 0.0
    %202 = vmatprep.subr.mxu0 0.0
    %203 = vmatpush1.msra.mxu0 0.0
    %204 = vmatprep.subr.mxu0 0.0
    %205 = vmatpush1.msra.mxu0 0.0
    %206 = vmatprep.subr.mxu0 0.0
    %207 = vmatpush1.msra.mxu0 0.0
    %208 = vmatprep.subr.mxu0 0.0
    %209 = vmatpush1.msra.mxu0 0.0
    %210 = vmatprep.subr.mxu0 0.0
    %211 = vmatpush1.msra.mxu0 0.0
    %212 = vmatprep.subr.mxu0 0.0
    %213 = vmatpush1.msra.mxu0 0.0
    %214 = vmatprep.subr.mxu0 0.0
    %215 = vmatpush1.msra.mxu0 0.0
    %216 = vmatprep.subr.mxu0 0.0
    %217 = vmatpush1.msra.mxu0 0.0
    %218 = vmatprep.subr.mxu0 0.0
    %219 = vmatpush1.msra.mxu0 0.0
    %220 = vmatprep.subr.mxu0 0.0
    %221 = vmatpush1.msra.mxu0 0.0
    %222 = vmatprep.mubr.f32.mxu0 0.0
    %223 = vmatmul.mubr.f32.gmra.mrb[0].mxu0 %v153
    %v224 = vpop.f32.mrb[0].mxu0
    %v225 = vadd.f32 %v150, %v224
    %v226 = vpop.f32.mrb[0].mxu0
    %227 = vmatprep.mubr.f32.mxu0 0.0
    %228 = vmatmul.mubr.f32.gmra.mrb[0].mxu0 %v156
    %v229 = vpop.f32.mrb[0].mxu0
    %v230 = vadd.f32 %v150, %v229
    %v231 = vpop.f32.mrb[0].mxu0
    %232 = vdwg.mxu0
    %v233 = vld [vmem:[%s2] sm:$0xff]
    %v234 = vld [vmem:[%s2 + $0x8] sm:$0xff]
    %s235 = scalar_lea.vmem %s3, 64
    %v236 = vld [vmem:[%s235] sm:$0xff]
    %v237 = vld [vmem:[%s235 + $0x8] sm:$0xff]
    %v238 = vld [vmem:[%s235 + $0x10] sm:$0xff]
    %v239 = vld [vmem:[%s235 + $0x18] sm:$0xff]
    %s240 = scalar_lea.vmem %s4, 2
    %v241 = vld [vmem:[%s240] sm:$0x1]
    %v243 = vlaneseq
    %v244 = vshrl.u32 %v243, 7
    %v245 = vsub.s32 0, %v244
    %v246 = vrot.slane %v241, %v245
    %v249 = vsel %vm55, %v233, 0
    %v252 = vsel %vm55, %v234, 0
    %254 = vmatprep.subr.mxu0 0.0
    %255 = vmatpush1.msra.mxu0 %v236
    %256 = vmatprep.subr.mxu0 0.0
    %257 = vmatpush1.msra.mxu0 %v237
    %258 = vmatprep.subr.mxu0 0.0
    %259 = vmatpush1.msra.mxu0 %v238
    %260 = vmatprep.subr.mxu0 0.0
    %261 = vmatpush1.msra.mxu0 %v239
    %262 = vmatprep.subr.mxu0 0.0
    %263 = vmatpush1.msra.mxu0 0.0
    %264 = vmatprep.subr.mxu0 0.0
    %265 = vmatpush1.msra.mxu0 0.0
    %266 = vmatprep.subr.mxu0 0.0
    %267 = vmatpush1.msra.mxu0 0.0
    %268 = vmatprep.subr.mxu0 0.0
    %269 = vmatpush1.msra.mxu0 0.0
    %270 = vmatprep.subr.mxu0 0.0
    %271 = vmatpush1.msra.mxu0 0.0
    %272 = vmatprep.subr.mxu0 0.0
    %273 = vmatpush1.msra.mxu0 0.0
    %274 = vmatprep.subr.mxu0 0.0
    %275 = vmatpush1.msra.mxu0 0.0
    %276 = vmatprep.subr.mxu0 0.0
    %277 = vmatpush1.msra.mxu0 0.0
    %278 = vmatprep.subr.mxu0 0.0
    %279 = vmatpush1.msra.mxu0 0.0
    %280 = vmatprep.subr.mxu0 0.0
    %281 = vmatpush1.msra.mxu0 0.0
    %282 = vmatprep.subr.mxu0 0.0
    %283 = vmatpush1.msra.mxu0 0.0
    %284 = vmatprep.subr.mxu0 0.0
    %285 = vmatpush1.msra.mxu0 0.0
    %286 = vmatprep.subr.mxu0 0.0
    %287 = vmatpush1.msra.mxu0 0.0
    %288 = vmatprep.subr.mxu0 0.0
    %289 = vmatpush1.msra.mxu0 0.0
    %290 = vmatprep.subr.mxu0 0.0
    %291 = vmatpush1.msra.mxu0 0.0
    %292 = vmatprep.subr.mxu0 0.0
    %293 = vmatpush1.msra.mxu0 0.0
    %294 = vmatprep.subr.mxu0 0.0
    %295 = vmatpush1.msra.mxu0 0.0
    %296 = vmatprep.subr.mxu0 0.0
    %297 = vmatpush1.msra.mxu0 0.0
    %298 = vmatprep.subr.mxu0 0.0
    %299 = vmatpush1.msra.mxu0 0.0
    %300 = vmatprep.subr.mxu0 0.0
    %301 = vmatpush1.msra.mxu0 0.0
    %302 = vmatprep.subr.mxu0 0.0
    %303 = vmatpush1.msra.mxu0 0.0
    %304 = vmatprep.subr.mxu0 0.0
    %305 = vmatpush1.msra.mxu0 0.0
    %306 = vmatprep.subr.mxu0 0.0
    %307 = vmatpush1.msra.mxu0 0.0
    %308 = vmatprep.subr.mxu0 0.0
    %309 = vmatpush1.msra.mxu0 0.0
    %310 = vmatprep.subr.mxu0 0.0
    %311 = vmatpush1.msra.mxu0 0.0
    %312 = vmatprep.subr.mxu0 0.0
    %313 = vmatpush1.msra.mxu0 0.0
    %314 = vmatprep.subr.mxu0 0.0
    %315 = vmatpush1.msra.mxu0 0.0
    %316 = vmatprep.subr.mxu0 0.0
    %317 = vmatpush1.msra.mxu0 0.0
    %318 = vmatprep.mubr.f32.mxu0 0.0
    %319 = vmatmul.mubr.f32.gmra.mrb[0].mxu0 %v249
    %v320 = vpop.f32.mrb[0].mxu0
    %v321 = vadd.f32 %v246, %v320
    %v322 = vpop.f32.mrb[0].mxu0
    %323 = vmatprep.mubr.f32.mxu0 0.0
    %324 = vmatmul.mubr.f32.gmra.mrb[0].mxu0 %v252
    %v325 = vpop.f32.mrb[0].mxu0
    %v326 = vadd.f32 %v246, %v325
    %v327 = vpop.f32.mrb[0].mxu0
    %328 = vdwg.mxu0
    %v329 = vld [vmem:[%s5] sm:$0xff]
    %v330 = vld [vmem:[%s5 + $0x8] sm:$0xff]
    %v331 = vld [vmem:[%s5 + $0x10] sm:$0xff]
    %v332 = vld [vmem:[%s5 + $0x18] sm:$0xff]
    %v333 = vld [vmem:[%s6] sm:$0x1]
    %v334 = vld [vmem:[%s7] sm:$0xff]
    %vm335 = vcmask 64512
    %v337 = vsel %vm335, %v129, 0
    %v340 = vsel %vm335, %v225, 0
    %342 = vmatprep.subr.mxu0 0.0
    %343 = vmatpush1.xpose.msra.mxu0 %v340
    %344 = vmatprep.subr.mxu0 0.0
    %345 = vmatpush1.xpose.msra.mxu0 0.0
    %346 = vmatprep.subr.mxu0 0.0
    %347 = vmatpush1.xpose.msra.mxu0 0.0
    %348 = vmatprep.subr.mxu0 0.0
    %349 = vmatpush1.xpose.msra.mxu0 0.0
    %350 = vmatprep.subr.mxu0 0.0
    %351 = vmatpush1.xpose.msra.mxu0 0.0
    %352 = vmatprep.subr.mxu0 0.0
    %353 = vmatpush1.xpose.msra.mxu0 0.0
    %354 = vmatprep.subr.mxu0 0.0
    %355 = vmatpush1.xpose.msra.mxu0 0.0
    %356 = vmatprep.subr.mxu0 0.0
    %357 = vmatpush1.xpose.msra.mxu0 0.0
    %358 = vmatprep.subr.mxu0 0.0
    %359 = vmatpush1.xpose.msra.mxu0 0.0
    %360 = vmatprep.subr.mxu0 0.0
    %361 = vmatpush1.xpose.msra.mxu0 0.0
    %362 = vmatprep.subr.mxu0 0.0
    %363 = vmatpush1.xpose.msra.mxu0 0.0
    %364 = vmatprep.subr.mxu0 0.0
    %365 = vmatpush1.xpose.msra.mxu0 0.0
    %366 = vmatprep.subr.mxu0 0.0
    %367 = vmatpush1.xpose.msra.mxu0 0.0
    %368 = vmatprep.subr.mxu0 0.0
    %369 = vmatpush1.xpose.msra.mxu0 0.0
    %370 = vmatprep.subr.mxu0 0.0
    %371 = vmatpush1.xpose.msra.mxu0 0.0
    %372 = vmatprep.subr.mxu0 0.0
    %373 = vmatpush1.xpose.msra.mxu0 0.0
    %374 = vmatprep.subr.mxu0 0.0
    %375 = vmatpush1.xpose.msra.mxu0 0.0
    %376 = vmatprep.subr.mxu0 0.0
    %377 = vmatpush1.xpose.msra.mxu0 0.0
    %378 = vmatprep.subr.mxu0 0.0
    %379 = vmatpush1.xpose.msra.mxu0 0.0
    %380 = vmatprep.subr.mxu0 0.0
    %381 = vmatpush1.xpose.msra.mxu0 0.0
    %382 = vmatprep.subr.mxu0 0.0
    %383 = vmatpush1.xpose.msra.mxu0 0.0
    %384 = vmatprep.subr.mxu0 0.0
    %385 = vmatpush1.xpose.msra.mxu0 0.0
    %386 = vmatprep.subr.mxu0 0.0
    %387 = vmatpush1.xpose.msra.mxu0 0.0
    %388 = vmatprep.subr.mxu0 0.0
    %389 = vmatpush1.xpose.msra.mxu0 0.0
    %390 = vmatprep.subr.mxu0 0.0
    %391 = vmatpush1.xpose.msra.mxu0 0.0
    %392 = vmatprep.subr.mxu0 0.0
    %393 = vmatpush1.xpose.msra.mxu0 0.0
    %394 = vmatprep.subr.mxu0 0.0
    %395 = vmatpush1.xpose.msra.mxu0 0.0
    %396 = vmatprep.subr.mxu0 0.0
    %397 = vmatpush1.xpose.msra.mxu0 0.0
    %398 = vmatprep.subr.mxu0 0.0
    %399 = vmatpush1.xpose.msra.mxu0 0.0
    %400 = vmatprep.subr.mxu0 0.0
    %401 = vmatpush1.xpose.msra.mxu0 0.0
    %402 = vmatprep.subr.mxu0 0.0
    %403 = vmatpush1.xpose.msra.mxu0 0.0
    %404 = vmatprep.subr.mxu0 0.0
    %405 = vmatpush1.xpose.msra.mxu0 0.0
    %406 = vmatprep.mubr.f32.mxu0 0.0
    %407 = vmatmul.mubr.f32.gmra.mrb[0].mxu0 %v337
    %v408 = vpop.f32.mrb[0].mxu0
    %v409 = vadd.f32 0.0, %v408
    %v410 = vpop.f32.mrb[0].mxu0
    %411 = vdwg.mxu0
    %v412 = vmul.f32 %v409, 0.35355338
    %v413 = vadd.f32 %v412, %v334
    %v414 = vsel %vm335, %v413, -inf
    %415 = vmax.xlane.f32.xlu0 %v414
    %v416 = vpop.xlane.xlu0 %415
    %v417 = vsub.f32 %v413, %v416
    %v418 = vmul.f32 %v417, 1.442695
    %v419 = vpow.pop %v418
    %v420 = vsel %vm335, %v419, 0.0
    %421 = vadd.xlane.f32.xlu0 %v420
    %v422 = vpop.xlane.xlu0 %421
    %v423 = vrcp.pop %v422
    %v424 = vmul.f32 %v419, %v423
    %v426 = vsel %vm335, %v424, 0
    %428 = vmatprep.subr.mxu0 0.0
    %429 = vmatpush1.msra.mxu0 %v321
    %430 = vmatprep.subr.mxu0 0.0
    %431 = vmatpush1.msra.mxu0 0.0
    %432 = vmatprep.subr.mxu0 0.0
    %433 = vmatpush1.msra.mxu0 0.0
    %434 = vmatprep.subr.mxu0 0.0
    %435 = vmatpush1.msra.mxu0 0.0
    %436 = vmatprep.subr.mxu0 0.0
    %437 = vmatpush1.msra.mxu0 0.0
    %438 = vmatprep.subr.mxu0 0.0
    %439 = vmatpush1.msra.mxu0 0.0
    %440 = vmatprep.subr.mxu0 0.0
    %441 = vmatpush1.msra.mxu0 0.0
    %442 = vmatprep.subr.mxu0 0.0
    %443 = vmatpush1.msra.mxu0 0.0
    %444 = vmatprep.subr.mxu0 0.0
    %445 = vmatpush1.msra.mxu0 0.0
    %446 = vmatprep.subr.mxu0 0.0
    %447 = vmatpush1.msra.mxu0 0.0
    %448 = vmatprep.subr.mxu0 0.0
    %449 = vmatpush1.msra.mxu0 0.0
    %450 = vmatprep.subr.mxu0 0.0
    %451 = vmatpush1.msra.mxu0 0.0
    %452 = vmatprep.subr.mxu0 0.0
    %453 = vmatpush1.msra.mxu0 0.0
    %454 = vmatprep.subr.mxu0 0.0
    %455 = vmatpush1.msra.mxu0 0.0
    %456 = vmatprep.subr.mxu0 0.0
    %457 = vmatpush1.msra.mxu0 0.0
    %458 = vmatprep.subr.mxu0 0.0
    %459 = vmatpush1.msra.mxu0 0.0
    %460 = vmatprep.subr.mxu0 0.0
    %461 = vmatpush1.msra.mxu0 0.0
    %462 = vmatprep.subr.mxu0 0.0
    %463 = vmatpush1.msra.mxu0 0.0
    %464 = vmatprep.subr.mxu0 0.0
    %465 = vmatpush1.msra.mxu0 0.0
    %466 = vmatprep.subr.mxu0 0.0
    %467 = vmatpush1.msra.mxu0 0.0
    %468 = vmatprep.subr.mxu0 0.0
    %469 = vmatpush1.msra.mxu0 0.0
    %470 = vmatprep.subr.mxu0 0.0
    %471 = vmatpush1.msra.mxu0 0.0
    %472 = vmatprep.subr.mxu0 0.0
    %473 = vmatpush1.msra.mxu0 0.0
    %474 = vmatprep.subr.mxu0 0.0
    %475 = vmatpush1.msra.mxu0 0.0
    %476 = vmatprep.subr.mxu0 0.0
    %477 = vmatpush1.msra.mxu0 0.0
    %478 = vmatprep.subr.mxu0 0.0
    %479 = vmatpush1.msra.mxu0 0.0
    %480 = vmatprep.subr.mxu0 0.0
    %481 = vmatpush1.msra.mxu0 0.0
    %482 = vmatprep.subr.mxu0 0.0
    %483 = vmatpush1.msra.mxu0 0.0
    %484 = vmatprep.subr.mxu0 0.0
    %485 = vmatpush1.msra.mxu0 0.0
    %486 = vmatprep.subr.mxu0 0.0
    %487 = vmatpush1.msra.mxu0 0.0
    %488 = vmatprep.subr.mxu0 0.0
    %489 = vmatpush1.msra.mxu0 0.0
    %490 = vmatprep.subr.mxu0 0.0
    %491 = vmatpush1.msra.mxu0 0.0
    %492 = vmatprep.mubr.f32.mxu0 0.0
    %493 = vmatmul.mubr.f32.gmra.mrb[0].mxu0 %v426
    %v494 = vpop.f32.mrb[0].mxu0
    %v495 = vadd.f32 0.0, %v494
    %v496 = vpop.f32.mrb[0].mxu0
    %497 = vdwg.mxu0
    %498 = vrot.lane.b32.xlu0 %v129, 120
    %v499 = vpop.permute.xlu0 %498
    %500 = vrot.lane.b32.xlu0 %v225, 120
    %v501 = vpop.permute.xlu0 %500
    %v502 = vsel %vm335, %v499, 0
    %v504 = vsel %vm335, %v501, 0
    %506 = vmatprep.subr.mxu0 0.0
    %507 = vmatpush1.xpose.msra.mxu0 %v504
    %508 = vmatprep.subr.mxu0 0.0
    %509 = vmatpush1.xpose.msra.mxu0 0.0
    %510 = vmatprep.subr.mxu0 0.0
    %511 = vmatpush1.xpose.msra.mxu0 0.0
    %512 = vmatprep.subr.mxu0 0.0
    %513 = vmatpush1.xpose.msra.mxu0 0.0
    %514 = vmatprep.subr.mxu0 0.0
    %515 = vmatpush1.xpose.msra.mxu0 0.0
    %516 = vmatprep.subr.mxu0 0.0
    %517 = vmatpush1.xpose.msra.mxu0 0.0
    %518 = vmatprep.subr.mxu0 0.0
    %519 = vmatpush1.xpose.msra.mxu0 0.0
    %520 = vmatprep.subr.mxu0 0.0
    %521 = vmatpush1.xpose.msra.mxu0 0.0
    %522 = vmatprep.subr.mxu0 0.0
    %523 = vmatpush1.xpose.msra.mxu0 0.0
    %524 = vmatprep.subr.mxu0 0.0
    %525 = vmatpush1.xpose.msra.mxu0 0.0
    %526 = vmatprep.subr.mxu0 0.0
    %527 = vmatpush1.xpose.msra.mxu0 0.0
    %528 = vmatprep.subr.mxu0 0.0
    %529 = vmatpush1.xpose.msra.mxu0 0.0
    %530 = vmatprep.subr.mxu0 0.0
    %531 = vmatpush1.xpose.msra.mxu0 0.0
    %532 = vmatprep.subr.mxu0 0.0
    %533 = vmatpush1.xpose.msra.mxu0 0.0
    %534 = vmatprep.subr.mxu0 0.0
    %535 = vmatpush1.xpose.msra.mxu0 0.0
    %536 = vmatprep.subr.mxu0 0.0
    %537 = vmatpush1.xpose.msra.mxu0 0.0
    %538 = vmatprep.subr.mxu0 0.0
    %539 = vmatpush1.xpose.msra.mxu0 0.0
    %540 = vmatprep.subr.mxu0 0.0
    %541 = vmatpush1.xpose.msra.mxu0 0.0
    %542 = vmatprep.subr.mxu0 0.0
    %543 = vmatpush1.xpose.msra.mxu0 0.0
    %544 = vmatprep.subr.mxu0 0.0
    %545 = vmatpush1.xpose.msra.mxu0 0.0
    %546 = vmatprep.subr.mxu0 0.0
    %547 = vmatpush1.xpose.msra.mxu0 0.0
    %548 = vmatprep.subr.mxu0 0.0
    %549 = vmatpush1.xpose.msra.mxu0 0.0
    %550 = vmatprep.subr.mxu0 0.0
    %551 = vmatpush1.xpose.msra.mxu0 0.0
    %552 = vmatprep.subr.mxu0 0.0
    %553 = vmatpush1.xpose.msra.mxu0 0.0
    %554 = vmatprep.subr.mxu0 0.0
    %555 = vmatpush1.xpose.msra.mxu0 0.0
    %556 = vmatprep.subr.mxu0 0.0
    %557 = vmatpush1.xpose.msra.mxu0 0.0
    %558 = vmatprep.subr.mxu0 0.0
    %559 = vmatpush1.xpose.msra.mxu0 0.0
    %560 = vmatprep.subr.mxu0 0.0
    %561 = vmatpush1.xpose.msra.mxu0 0.0
    %562 = vmatprep.subr.mxu0 0.0
    %563 = vmatpush1.xpose.msra.mxu0 0.0
    %564 = vmatprep.subr.mxu0 0.0
    %565 = vmatpush1.xpose.msra.mxu0 0.0
    %566 = vmatprep.subr.mxu0 0.0
    %567 = vmatpush1.xpose.msra.mxu0 0.0
    %568 = vmatprep.subr.mxu0 0.0
    %569 = vmatpush1.xpose.msra.mxu0 0.0
    %570 = vmatprep.mubr.f32.mxu0 0.0
    %571 = vmatmul.mubr.f32.gmra.mrb[0].mxu0 %v502
    %v572 = vpop.f32.mrb[0].mxu0
    %v573 = vadd.f32 0.0, %v572
    %v574 = vpop.f32.mrb[0].mxu0
    %575 = vdwg.mxu0
    %v576 = vmul.f32 %v573, 0.35355338
    %v577 = vadd.f32 %v576, %v334
    %v578 = vsel %vm335, %v577, -inf
    %579 = vmax.xlane.f32.xlu0 %v578
    %v580 = vpop.xlane.xlu0 %579
    %v581 = vsub.f32 %v577, %v580
    %v582 = vmul.f32 %v581, 1.442695
    %v583 = vpow.pop %v582
    %v584 = vsel %vm335, %v583, 0.0
    %585 = vadd.xlane.f32.xlu0 %v584
    %v586 = vpop.xlane.xlu0 %585
    %v587 = vrcp.pop %v586
    %v588 = vmul.f32 %v583, %v587
    %590 = vrot.lane.b32.xlu0 %v321, 120
    %v591 = vpop.permute.xlu0 %590
    %v594 = vsel %vm335, %v588, 0
    %596 = vmatprep.subr.mxu0 0.0
    %597 = vmatpush1.msra.mxu0 %v591
    %598 = vmatprep.subr.mxu0 0.0
    %599 = vmatpush1.msra.mxu0 0.0
    %600 = vmatprep.subr.mxu0 0.0
    %601 = vmatpush1.msra.mxu0 0.0
    %602 = vmatprep.subr.mxu0 0.0
    %603 = vmatpush1.msra.mxu0 0.0
    %604 = vmatprep.subr.mxu0 0.0
    %605 = vmatpush1.msra.mxu0 0.0
    %606 = vmatprep.subr.mxu0 0.0
    %607 = vmatpush1.msra.mxu0 0.0
    %608 = vmatprep.subr.mxu0 0.0
    %609 = vmatpush1.msra.mxu0 0.0
    %610 = vmatprep.subr.mxu0 0.0
    %611 = vmatpush1.msra.mxu0 0.0
    %612 = vmatprep.subr.mxu0 0.0
    %613 = vmatpush1.msra.mxu0 0.0
    %614 = vmatprep.subr.mxu0 0.0
    %615 = vmatpush1.msra.mxu0 0.0
    %616 = vmatprep.subr.mxu0 0.0
    %617 = vmatpush1.msra.mxu0 0.0
    %618 = vmatprep.subr.mxu0 0.0
    %619 = vmatpush1.msra.mxu0 0.0
    %620 = vmatprep.subr.mxu0 0.0
    %621 = vmatpush1.msra.mxu0 0.0
    %622 = vmatprep.subr.mxu0 0.0
    %623 = vmatpush1.msra.mxu0 0.0
    %624 = vmatprep.subr.mxu0 0.0
    %625 = vmatpush1.msra.mxu0 0.0
    %626 = vmatprep.subr.mxu0 0.0
    %627 = vmatpush1.msra.mxu0 0.0
    %628 = vmatprep.subr.mxu0 0.0
    %629 = vmatpush1.msra.mxu0 0.0
    %630 = vmatprep.subr.mxu0 0.0
    %631 = vmatpush1.msra.mxu0 0.0
    %632 = vmatprep.subr.mxu0 0.0
    %633 = vmatpush1.msra.mxu0 0.0
    %634 = vmatprep.subr.mxu0 0.0
    %635 = vmatpush1.msra.mxu0 0.0
    %636 = vmatprep.subr.mxu0 0.0
    %637 = vmatpush1.msra.mxu0 0.0
    %638 = vmatprep.subr.mxu0 0.0
    %639 = vmatpush1.msra.mxu0 0.0
    %640 = vmatprep.subr.mxu0 0.0
    %641 = vmatpush1.msra.mxu0 0.0
    %642 = vmatprep.subr.mxu0 0.0
    %643 = vmatpush1.msra.mxu0 0.0
    %644 = vmatprep.subr.mxu0 0.0
    %645 = vmatpush1.msra.mxu0 0.0
    %646 = vmatprep.subr.mxu0 0.0
    %647 = vmatpush1.msra.mxu0 0.0
    %648 = vmatprep.subr.mxu0 0.0
    %649 = vmatpush1.msra.mxu0 0.0
    %650 = vmatprep.subr.mxu0 0.0
    %651 = vmatpush1.msra.mxu0 0.0
    %652 = vmatprep.subr.mxu0 0.0
    %653 = vmatpush1.msra.mxu0 0.0
    %654 = vmatprep.subr.mxu0 0.0
    %655 = vmatpush1.msra.mxu0 0.0
    %656 = vmatprep.subr.mxu0 0.0
    %657 = vmatpush1.msra.mxu0 0.0
    %658 = vmatprep.subr.mxu0 0.0
    %659 = vmatpush1.msra.mxu0 0.0
    %660 = vmatprep.mubr.f32.mxu0 0.0
    %661 = vmatmul.mubr.f32.gmra.mrb[0].mxu0 %v594
    %v662 = vpop.f32.mrb[0].mxu0
    %v663 = vadd.f32 0.0, %v662
    %v664 = vpop.f32.mrb[0].mxu0
    %665 = vdwg.mxu0
    %v667 = vsel %vm335, %v663, 0
    %669 = vmatprep.subr.mxu0 0.0
    %670 = vmatpush1.msra.mxu0 %v330
    %671 = vmatprep.subr.mxu0 0.0
    %672 = vmatpush1.msra.mxu0 0.0
    %673 = vmatprep.subr.mxu0 0.0
    %674 = vmatpush1.msra.mxu0 0.0
    %675 = vmatprep.subr.mxu0 0.0
    %676 = vmatpush1.msra.mxu0 0.0
    %677 = vmatprep.subr.mxu0 0.0
    %678 = vmatpush1.msra.mxu0 0.0
    %679 = vmatprep.subr.mxu0 0.0
    %680 = vmatpush1.msra.mxu0 0.0
    %681 = vmatprep.subr.mxu0 0.0
    %682 = vmatpush1.msra.mxu0 0.0
    %683 = vmatprep.subr.mxu0 0.0
    %684 = vmatpush1.msra.mxu0 0.0
    %685 = vmatprep.subr.mxu0 0.0
    %686 = vmatpush1.msra.mxu0 0.0
    %687 = vmatprep.subr.mxu0 0.0
    %688 = vmatpush1.msra.mxu0 0.0
    %689 = vmatprep.subr.mxu0 0.0
    %690 = vmatpush1.msra.mxu0 0.0
    %691 = vmatprep.subr.mxu0 0.0
    %692 = vmatpush1.msra.mxu0 0.0
    %693 = vmatprep.subr.mxu0 0.0
    %694 = vmatpush1.msra.mxu0 0.0
    %695 = vmatprep.subr.mxu0 0.0
    %696 = vmatpush1.msra.mxu0 0.0
    %697 = vmatprep.subr.mxu0 0.0
    %698 = vmatpush1.msra.mxu0 0.0
    %699 = vmatprep.subr.mxu0 0.0
    %700 = vmatpush1.msra.mxu0 0.0
    %701 = vmatprep.subr.mxu0 0.0
    %702 = vmatpush1.msra.mxu0 0.0
    %703 = vmatprep.subr.mxu0 0.0
    %704 = vmatpush1.msra.mxu0 0.0
    %705 = vmatprep.subr.mxu0 0.0
    %706 = vmatpush1.msra.mxu0 0.0
    %707 = vmatprep.subr.mxu0 0.0
    %708 = vmatpush1.msra.mxu0 0.0
    %709 = vmatprep.subr.mxu0 0.0
    %710 = vmatpush1.msra.mxu0 0.0
    %711 = vmatprep.subr.mxu0 0.0
    %712 = vmatpush1.msra.mxu0 0.0
    %713 = vmatprep.subr.mxu0 0.0
    %714 = vmatpush1.msra.mxu0 0.0
    %715 = vmatprep.subr.mxu0 0.0
    %716 = vmatpush1.msra.mxu0 0.0
    %717 = vmatprep.subr.mxu0 0.0
    %718 = vmatpush1.msra.mxu0 0.0
    %719 = vmatprep.subr.mxu0 0.0
    %720 = vmatpush1.msra.mxu0 0.0
    %721 = vmatprep.subr.mxu0 0.0
    %722 = vmatpush1.msra.mxu0 0.0
    %723 = vmatprep.subr.mxu0 0.0
    %724 = vmatpush1.msra.mxu0 0.0
    %725 = vmatprep.subr.mxu0 0.0
    %726 = vmatpush1.msra.mxu0 0.0
    %727 = vmatprep.subr.mxu0 0.0
    %728 = vmatpush1.msra.mxu0 0.0
    %729 = vmatprep.subr.mxu0 0.0
    %730 = vmatpush1.msra.mxu0 0.0
    %731 = vmatprep.subr.mxu0 0.0
    %732 = vmatpush1.msra.mxu0 0.0
    %733 = vmatprep.mubr.f32.mxu0 0.0
    %734 = vmatmul.mubr.f32.gmra.mrb[0].mxu0 %v667
    %v735 = vpop.f32.mrb[0].mxu0
    %v736 = vadd.f32 0.0, %v735
    %v737 = vpop.f32.mrb[0].mxu0
    %738 = vdwg.mxu0
    %v740 = vsel %vm335, %v495, 0
    %742 = vmatprep.subr.mxu0 0.0
    %743 = vmatpush1.msra.mxu0 %v329
    %744 = vmatprep.subr.mxu0 0.0
    %745 = vmatpush1.msra.mxu0 0.0
    %746 = vmatprep.subr.mxu0 0.0
    %747 = vmatpush1.msra.mxu0 0.0
    %748 = vmatprep.subr.mxu0 0.0
    %749 = vmatpush1.msra.mxu0 0.0
    %750 = vmatprep.subr.mxu0 0.0
    %751 = vmatpush1.msra.mxu0 0.0
    %752 = vmatprep.subr.mxu0 0.0
    %753 = vmatpush1.msra.mxu0 0.0
    %754 = vmatprep.subr.mxu0 0.0
    %755 = vmatpush1.msra.mxu0 0.0
    %756 = vmatprep.subr.mxu0 0.0
    %757 = vmatpush1.msra.mxu0 0.0
    %758 = vmatprep.subr.mxu0 0.0
    %759 = vmatpush1.msra.mxu0 0.0
    %760 = vmatprep.subr.mxu0 0.0
    %761 = vmatpush1.msra.mxu0 0.0
    %762 = vmatprep.subr.mxu0 0.0
    %763 = vmatpush1.msra.mxu0 0.0
    %764 = vmatprep.subr.mxu0 0.0
    %765 = vmatpush1.msra.mxu0 0.0
    %766 = vmatprep.subr.mxu0 0.0
    %767 = vmatpush1.msra.mxu0 0.0
    %768 = vmatprep.subr.mxu0 0.0
    %769 = vmatpush1.msra.mxu0 0.0
    %770 = vmatprep.subr.mxu0 0.0
    %771 = vmatpush1.msra.mxu0 0.0
    %772 = vmatprep.subr.mxu0 0.0
    %773 = vmatpush1.msra.mxu0 0.0
    %774 = vmatprep.subr.mxu0 0.0
    %775 = vmatpush1.msra.mxu0 0.0
    %776 = vmatprep.subr.mxu0 0.0
    %777 = vmatpush1.msra.mxu0 0.0
    %778 = vmatprep.subr.mxu0 0.0
    %779 = vmatpush1.msra.mxu0 0.0
    %780 = vmatprep.subr.mxu0 0.0
    %781 = vmatpush1.msra.mxu0 0.0
    %782 = vmatprep.subr.mxu0 0.0
    %783 = vmatpush1.msra.mxu0 0.0
    %784 = vmatprep.subr.mxu0 0.0
    %785 = vmatpush1.msra.mxu0 0.0
    %786 = vmatprep.subr.mxu0 0.0
    %787 = vmatpush1.msra.mxu0 0.0
    %788 = vmatprep.subr.mxu0 0.0
    %789 = vmatpush1.msra.mxu0 0.0
    %790 = vmatprep.subr.mxu0 0.0
    %791 = vmatpush1.msra.mxu0 0.0
    %792 = vmatprep.subr.mxu0 0.0
    %793 = vmatpush1.msra.mxu0 0.0
    %794 = vmatprep.subr.mxu0 0.0
    %795 = vmatpush1.msra.mxu0 0.0
    %796 = vmatprep.subr.mxu0 0.0
    %797 = vmatpush1.msra.mxu0 0.0
    %798 = vmatprep.subr.mxu0 0.0
    %799 = vmatpush1.msra.mxu0 0.0
    %800 = vmatprep.subr.mxu0 0.0
    %801 = vmatpush1.msra.mxu0 0.0
    %802 = vmatprep.subr.mxu0 0.0
    %803 = vmatpush1.msra.mxu0 0.0
    %804 = vmatprep.subr.mxu0 0.0
    %805 = vmatpush1.msra.mxu0 0.0
    %806 = vmatprep.mubr.f32.mxu0 0.0
    %807 = vmatmul.mubr.f32.gmra.mrb[0].mxu0 %v740
    %v808 = vpop.f32.mrb[0].mxu0
    %v809 = vadd.f32 %v736, %v808
    %v810 = vpop.f32.mrb[0].mxu0
    %811 = vdwg.mxu0
    %v812 = vld [vmem:[%s8] sm:$0xff]
    %814 = vrot.lane.b32.xlu0 %v812, 16
    %v815 = vpop.permute.xlu0 %814
    %v817 = vadd.f32 %v129, %v815
    %v818 = vld [vmem:[%s9] sm:$0xff]
    %820 = vrot.lane.b32.xlu0 %v818, 16
    %v821 = vpop.permute.xlu0 %820
    %v823 = vadd.f32 %v225, %v821
    %825 = vrot.lane.b32.xlu0 %v817, 112
    %v826 = vpop.permute.xlu0 %825
    %828 = vrot.lane.b32.xlu0 %v823, 112
    %v829 = vpop.permute.xlu0 %828
    %v830 = vsel %vm335, %v826, 0
    %v832 = vsel %vm335, %v829, 0
    %834 = vmatprep.subr.mxu0 0.0
    %835 = vmatpush1.xpose.msra.mxu0 %v832
    %836 = vmatprep.subr.mxu0 0.0
    %837 = vmatpush1.xpose.msra.mxu0 0.0
    %838 = vmatprep.subr.mxu0 0.0
    %839 = vmatpush1.xpose.msra.mxu0 0.0
    %840 = vmatprep.subr.mxu0 0.0
    %841 = vmatpush1.xpose.msra.mxu0 0.0
    %842 = vmatprep.subr.mxu0 0.0
    %843 = vmatpush1.xpose.msra.mxu0 0.0
    %844 = vmatprep.subr.mxu0 0.0
    %845 = vmatpush1.xpose.msra.mxu0 0.0
    %846 = vmatprep.subr.mxu0 0.0
    %847 = vmatpush1.xpose.msra.mxu0 0.0
    %848 = vmatprep.subr.mxu0 0.0
    %849 = vmatpush1.xpose.msra.mxu0 0.0
    %850 = vmatprep.subr.mxu0 0.0
    %851 = vmatpush1.xpose.msra.mxu0 0.0
    %852 = vmatprep.subr.mxu0 0.0
    %853 = vmatpush1.xpose.msra.mxu0 0.0
    %854 = vmatprep.subr.mxu0 0.0
    %855 = vmatpush1.xpose.msra.mxu0 0.0
    %856 = vmatprep.subr.mxu0 0.0
    %857 = vmatpush1.xpose.msra.mxu0 0.0
    %858 = vmatprep.subr.mxu0 0.0
    %859 = vmatpush1.xpose.msra.mxu0 0.0
    %860 = vmatprep.subr.mxu0 0.0
    %861 = vmatpush1.xpose.msra.mxu0 0.0
    %862 = vmatprep.subr.mxu0 0.0
    %863 = vmatpush1.xpose.msra.mxu0 0.0
    %864 = vmatprep.subr.mxu0 0.0
    %865 = vmatpush1.xpose.msra.mxu0 0.0
    %866 = vmatprep.subr.mxu0 0.0
    %867 = vmatpush1.xpose.msra.mxu0 0.0
    %868 = vmatprep.subr.mxu0 0.0
    %869 = vmatpush1.xpose.msra.mxu0 0.0
    %870 = vmatprep.subr.mxu0 0.0
    %871 = vmatpush1.xpose.msra.mxu0 0.0
    %872 = vmatprep.subr.mxu0 0.0
    %873 = vmatpush1.xpose.msra.mxu0 0.0
    %874 = vmatprep.subr.mxu0 0.0
    %875 = vmatpush1.xpose.msra.mxu0 0.0
    %876 = vmatprep.subr.mxu0 0.0
    %877 = vmatpush1.xpose.msra.mxu0 0.0
    %878 = vmatprep.subr.mxu0 0.0
    %879 = vmatpush1.xpose.msra.mxu0 0.0
    %880 = vmatprep.subr.mxu0 0.0
    %881 = vmatpush1.xpose.msra.mxu0 0.0
    %882 = vmatprep.subr.mxu0 0.0
    %883 = vmatpush1.xpose.msra.mxu0 0.0
    %884 = vmatprep.subr.mxu0 0.0
    %885 = vmatpush1.xpose.msra.mxu0 0.0
    %886 = vmatprep.subr.mxu0 0.0
    %887 = vmatpush1.xpose.msra.mxu0 0.0
    %888 = vmatprep.subr.mxu0 0.0
    %889 = vmatpush1.xpose.msra.mxu0 0.0
    %890 = vmatprep.subr.mxu0 0.0
    %891 = vmatpush1.xpose.msra.mxu0 0.0
    %892 = vmatprep.subr.mxu0 0.0
    %893 = vmatpush1.xpose.msra.mxu0 0.0
    %894 = vmatprep.subr.mxu0 0.0
    %895 = vmatpush1.xpose.msra.mxu0 0.0
    %896 = vmatprep.subr.mxu0 0.0
    %897 = vmatpush1.xpose.msra.mxu0 0.0
    %898 = vmatprep.mubr.f32.mxu0 0.0
    %899 = vmatmul.mubr.f32.gmra.mrb[0].mxu0 %v830
    %v900 = vpop.f32.mrb[0].mxu0
    %v901 = vadd.f32 0.0, %v900
    %v902 = vpop.f32.mrb[0].mxu0
    %903 = vdwg.mxu0
    %v904 = vmul.f32 %v901, 0.35355338
    %v905 = vld [vmem:[%s11] sm:$0x1]
    %v907 = vlaneseq
    %v908 = vshrl.u32 %v907, 7
    %v909 = vsub.s32 0, %v908
    %v910 = vrot.slane %v905, %v909
    %911 = vrot.lane.b32.xlu0 %v910, 16
    %v912 = vpop.permute.xlu0 %911
    %v914 = vmul.f32 %v321, %v912
    %916 = vrot.lane.b32.xlu0 %v914, 112
    %v917 = vpop.permute.xlu0 %916
    %v919 = vsel %vm335, %v917, 0.0
    %920 = vadd.xlane.f32.xlu0 %v919
    %v921 = vpop.xlane.xlu0 %920
    %922 = vrot.lane.b32.xlu0 %v321, 112
    %v923 = vpop.permute.xlu0 %922
    %v924 = vsel %vm335, %v905, 0
    %v926 = vsel %vm335, %v923, 0
    %928 = vmatprep.subr.mxu0 0.0
    %929 = vmatpush1.xpose.msra.mxu0 %v926
    %930 = vmatprep.subr.mxu0 0.0
    %931 = vmatpush1.xpose.msra.mxu0 0.0
    %932 = vmatprep.subr.mxu0 0.0
    %933 = vmatpush1.xpose.msra.mxu0 0.0
    %934 = vmatprep.subr.mxu0 0.0
    %935 = vmatpush1.xpose.msra.mxu0 0.0
    %936 = vmatprep.subr.mxu0 0.0
    %937 = vmatpush1.xpose.msra.mxu0 0.0
    %938 = vmatprep.subr.mxu0 0.0
    %939 = vmatpush1.xpose.msra.mxu0 0.0
    %940 = vmatprep.subr.mxu0 0.0
    %941 = vmatpush1.xpose.msra.mxu0 0.0
    %942 = vmatprep.subr.mxu0 0.0
    %943 = vmatpush1.xpose.msra.mxu0 0.0
    %944 = vmatprep.subr.mxu0 0.0
    %945 = vmatpush1.xpose.msra.mxu0 0.0
    %946 = vmatprep.subr.mxu0 0.0
    %947 = vmatpush1.xpose.msra.mxu0 0.0
    %948 = vmatprep.subr.mxu0 0.0
    %949 = vmatpush1.xpose.msra.mxu0 0.0
    %950 = vmatprep.subr.mxu0 0.0
    %951 = vmatpush1.xpose.msra.mxu0 0.0
    %952 = vmatprep.subr.mxu0 0.0
    %953 = vmatpush1.xpose.msra.mxu0 0.0
    %954 = vmatprep.subr.mxu0 0.0
    %955 = vmatpush1.xpose.msra.mxu0 0.0
    %956 = vmatprep.subr.mxu0 0.0
    %957 = vmatpush1.xpose.msra.mxu0 0.0
    %958 = vmatprep.subr.mxu0 0.0
    %959 = vmatpush1.xpose.msra.mxu0 0.0
    %960 = vmatprep.subr.mxu0 0.0
    %961 = vmatpush1.xpose.msra.mxu0 0.0
    %962 = vmatprep.subr.mxu0 0.0
    %963 = vmatpush1.xpose.msra.mxu0 0.0
    %964 = vmatprep.subr.mxu0 0.0
    %965 = vmatpush1.xpose.msra.mxu0 0.0
    %966 = vmatprep.subr.mxu0 0.0
    %967 = vmatpush1.xpose.msra.mxu0 0.0
    %968 = vmatprep.subr.mxu0 0.0
    %969 = vmatpush1.xpose.msra.mxu0 0.0
    %970 = vmatprep.subr.mxu0 0.0
    %971 = vmatpush1.xpose.msra.mxu0 0.0
    %972 = vmatprep.subr.mxu0 0.0
    %973 = vmatpush1.xpose.msra.mxu0 0.0
    %974 = vmatprep.subr.mxu0 0.0
    %975 = vmatpush1.xpose.msra.mxu0 0.0
    %976 = vmatprep.subr.mxu0 0.0
    %977 = vmatpush1.xpose.msra.mxu0 0.0
    %978 = vmatprep.subr.mxu0 0.0
    %979 = vmatpush1.xpose.msra.mxu0 0.0
    %980 = vmatprep.subr.mxu0 0.0
    %981 = vmatpush1.xpose.msra.mxu0 0.0
    %982 = vmatprep.subr.mxu0 0.0
    %983 = vmatpush1.xpose.msra.mxu0 0.0
    %984 = vmatprep.subr.mxu0 0.0
    %985 = vmatpush1.xpose.msra.mxu0 0.0
    %986 = vmatprep.subr.mxu0 0.0
    %987 = vmatpush1.xpose.msra.mxu0 0.0
    %988 = vmatprep.subr.mxu0 0.0
    %989 = vmatpush1.xpose.msra.mxu0 0.0
    %990 = vmatprep.subr.mxu0 0.0
    %991 = vmatpush1.xpose.msra.mxu0 0.0
    %992 = vmatprep.mubr.f32.mxu0 0.0
    %993 = vmatmul.mubr.f32.gmra.mrb[0].mxu0 %v924
    %v994 = vpop.f32.mrb[0].mxu0
    %v995 = vadd.f32 0.0, %v994
    %v996 = vpop.f32.mrb[0].mxu0
    %997 = vdwg.mxu0
    %v998 = vld [vmem:[%s10] sm:$0xff]
    %v999 = vadd.f32 %v998, %v921
    %v1000 = vlaneseq
    %v1001 = vshrl.u32 %v1000, 7
    %v1002 = vsub.s32 0, %v1001
    %v1003 = vrot.slane %v995, %v1002
    %v1004 = vadd.f32 %v999, %v1003
    %v1005 = vadd.f32 %v904, %v1004
    %v1006 = vadd.f32 %v1005, %v334
    %v1007 = vsel %vm335, %v1006, -inf
    %1008 = vmax.xlane.f32.xlu0 %v1007
    %v1009 = vpop.xlane.xlu0 %1008
    %v1010 = vsub.f32 %v1006, %v1009
    %v1011 = vmul.f32 %v1010, 1.442695
    %v1012 = vpow.pop %v1011
    %v1013 = vsel %vm335, %v1012, 0.0
    %1014 = vadd.xlane.f32.xlu0 %v1013
    %v1015 = vpop.xlane.xlu0 %1014
    %v1016 = vrcp.pop %v1015
    %v1017 = vmul.f32 %v1012, %v1016
    %v1020 = vsel %vm335, %v1017, 0
    %1022 = vmatprep.subr.mxu0 0.0
    %1023 = vmatpush1.msra.mxu0 %v923
    %1024 = vmatprep.subr.mxu0 0.0
    %1025 = vmatpush1.msra.mxu0 0.0
    %1026 = vmatprep.subr.mxu0 0.0
    %1027 = vmatpush1.msra.mxu0 0.0
    %1028 = vmatprep.subr.mxu0 0.0
    %1029 = vmatpush1.msra.mxu0 0.0
    %1030 = vmatprep.subr.mxu0 0.0
    %1031 = vmatpush1.msra.mxu0 0.0
    %1032 = vmatprep.subr.mxu0 0.0
    %1033 = vmatpush1.msra.mxu0 0.0
    %1034 = vmatprep.subr.mxu0 0.0
    %1035 = vmatpush1.msra.mxu0 0.0
    %1036 = vmatprep.subr.mxu0 0.0
    %1037 = vmatpush1.msra.mxu0 0.0
    %1038 = vmatprep.subr.mxu0 0.0
    %1039 = vmatpush1.msra.mxu0 0.0
    %1040 = vmatprep.subr.mxu0 0.0
    %1041 = vmatpush1.msra.mxu0 0.0
    %1042 = vmatprep.subr.mxu0 0.0
    %1043 = vmatpush1.msra.mxu0 0.0
    %1044 = vmatprep.subr.mxu0 0.0
    %1045 = vmatpush1.msra.mxu0 0.0
    %1046 = vmatprep.subr.mxu0 0.0
    %1047 = vmatpush1.msra.mxu0 0.0
    %1048 = vmatprep.subr.mxu0 0.0
    %1049 = vmatpush1.msra.mxu0 0.0
    %1050 = vmatprep.subr.mxu0 0.0
    %1051 = vmatpush1.msra.mxu0 0.0
    %1052 = vmatprep.subr.mxu0 0.0
    %1053 = vmatpush1.msra.mxu0 0.0
    %1054 = vmatprep.subr.mxu0 0.0
    %1055 = vmatpush1.msra.mxu0 0.0
    %1056 = vmatprep.subr.mxu0 0.0
    %1057 = vmatpush1.msra.mxu0 0.0
    %1058 = vmatprep.subr.mxu0 0.0
    %1059 = vmatpush1.msra.mxu0 0.0
    %1060 = vmatprep.subr.mxu0 0.0
    %1061 = vmatpush1.msra.mxu0 0.0
    %1062 = vmatprep.subr.mxu0 0.0
    %1063 = vmatpush1.msra.mxu0 0.0
    %1064 = vmatprep.subr.mxu0 0.0
    %1065 = vmatpush1.msra.mxu0 0.0
    %1066 = vmatprep.subr.mxu0 0.0
    %1067 = vmatpush1.msra.mxu0 0.0
    %1068 = vmatprep.subr.mxu0 0.0
    %1069 = vmatpush1.msra.mxu0 0.0
    %1070 = vmatprep.subr.mxu0 0.0
    %1071 = vmatpush1.msra.mxu0 0.0
    %1072 = vmatprep.subr.mxu0 0.0
    %1073 = vmatpush1.msra.mxu0 0.0
    %1074 = vmatprep.subr.mxu0 0.0
    %1075 = vmatpush1.msra.mxu0 0.0
    %1076 = vmatprep.subr.mxu0 0.0
    %1077 = vmatpush1.msra.mxu0 0.0
    %1078 = vmatprep.subr.mxu0 0.0
    %1079 = vmatpush1.msra.mxu0 0.0
    %1080 = vmatprep.subr.mxu0 0.0
    %1081 = vmatpush1.msra.mxu0 0.0
    %1082 = vmatprep.subr.mxu0 0.0
    %1083 = vmatpush1.msra.mxu0 0.0
    %1084 = vmatprep.subr.mxu0 0.0
    %1085 = vmatpush1.msra.mxu0 0.0
    %1086 = vmatprep.mubr.f32.mxu0 0.0
    %1087 = vmatmul.mubr.f32.gmra.mrb[0].mxu0 %v1020
    %v1088 = vpop.f32.mrb[0].mxu0
    %v1089 = vadd.f32 0.0, %v1088
    %v1090 = vpop.f32.mrb[0].mxu0
    %1091 = vdwg.mxu0
    %v1093 = vsel %vm335, %v1089, 0
    %1095 = vmatprep.subr.mxu0 0.0
    %1096 = vmatpush1.msra.mxu0 %v331
    %1097 = vmatprep.subr.mxu0 0.0
    %1098 = vmatpush1.msra.mxu0 0.0
    %1099 = vmatprep.subr.mxu0 0.0
    %1100 = vmatpush1.msra.mxu0 0.0
    %1101 = vmatprep.subr.mxu0 0.0
    %1102 = vmatpush1.msra.mxu0 0.0
    %1103 = vmatprep.subr.mxu0 0.0
    %1104 = vmatpush1.msra.mxu0 0.0
    %1105 = vmatprep.subr.mxu0 0.0
    %1106 = vmatpush1.msra.mxu0 0.0
    %1107 = vmatprep.subr.mxu0 0.0
    %1108 = vmatpush1.msra.mxu0 0.0
    %1109 = vmatprep.subr.mxu0 0.0
    %1110 = vmatpush1.msra.mxu0 0.0
    %1111 = vmatprep.subr.mxu0 0.0
    %1112 = vmatpush1.msra.mxu0 0.0
    %1113 = vmatprep.subr.mxu0 0.0
    %1114 = vmatpush1.msra.mxu0 0.0
    %1115 = vmatprep.subr.mxu0 0.0
    %1116 = vmatpush1.msra.mxu0 0.0
    %1117 = vmatprep.subr.mxu0 0.0
    %1118 = vmatpush1.msra.mxu0 0.0
    %1119 = vmatprep.subr.mxu0 0.0
    %1120 = vmatpush1.msra.mxu0 0.0
    %1121 = vmatprep.subr.mxu0 0.0
    %1122 = vmatpush1.msra.mxu0 0.0
    %1123 = vmatprep.subr.mxu0 0.0
    %1124 = vmatpush1.msra.mxu0 0.0
    %1125 = vmatprep.subr.mxu0 0.0
    %1126 = vmatpush1.msra.mxu0 0.0
    %1127 = vmatprep.subr.mxu0 0.0
    %1128 = vmatpush1.msra.mxu0 0.0
    %1129 = vmatprep.subr.mxu0 0.0
    %1130 = vmatpush1.msra.mxu0 0.0
    %1131 = vmatprep.subr.mxu0 0.0
    %1132 = vmatpush1.msra.mxu0 0.0
    %1133 = vmatprep.subr.mxu0 0.0
    %1134 = vmatpush1.msra.mxu0 0.0
    %1135 = vmatprep.subr.mxu0 0.0
    %1136 = vmatpush1.msra.mxu0 0.0
    %1137 = vmatprep.subr.mxu0 0.0
    %1138 = vmatpush1.msra.mxu0 0.0
    %1139 = vmatprep.subr.mxu0 0.0
    %1140 = vmatpush1.msra.mxu0 0.0
    %1141 = vmatprep.subr.mxu0 0.0
    %1142 = vmatpush1.msra.mxu0 0.0
    %1143 = vmatprep.subr.mxu0 0.0
    %1144 = vmatpush1.msra.mxu0 0.0
    %1145 = vmatprep.subr.mxu0 0.0
    %1146 = vmatpush1.msra.mxu0 0.0
    %1147 = vmatprep.subr.mxu0 0.0
    %1148 = vmatpush1.msra.mxu0 0.0
    %1149 = vmatprep.subr.mxu0 0.0
    %1150 = vmatpush1.msra.mxu0 0.0
    %1151 = vmatprep.subr.mxu0 0.0
    %1152 = vmatpush1.msra.mxu0 0.0
    %1153 = vmatprep.subr.mxu0 0.0
    %1154 = vmatpush1.msra.mxu0 0.0
    %1155 = vmatprep.subr.mxu0 0.0
    %1156 = vmatpush1.msra.mxu0 0.0
    %1157 = vmatprep.subr.mxu0 0.0
    %1158 = vmatpush1.msra.mxu0 0.0
    %1159 = vmatprep.mubr.f32.mxu0 0.0
    %1160 = vmatmul.mubr.f32.gmra.mrb[0].mxu0 %v1093
    %v1161 = vpop.f32.mrb[0].mxu0
    %v1162 = vadd.f32 0.0, %v1161
    %v1163 = vpop.f32.mrb[0].mxu0
    %1164 = vdwg.mxu0
    %v1165 = vadd.f32 %v809, %v1162
    %s1166 = scalar_lea.vmem %s8, 8
    %v1167 = vld [vmem:[%s1166] sm:$0xff]
    %1169 = vrot.lane.b32.xlu0 %v1167, 24
    %v1170 = vpop.permute.xlu0 %1169
    %v1172 = vadd.f32 %v129, %v1170
    %s1173 = scalar_lea.vmem %s9, 8
    %v1174 = vld [vmem:[%s1173] sm:$0xff]
    %1176 = vrot.lane.b32.xlu0 %v1174, 24
    %v1177 = vpop.permute.xlu0 %1176
    %v1179 = vadd.f32 %v225, %v1177
    %1181 = vrot.lane.b32.xlu0 %v1172, 104
    %v1182 = vpop.permute.xlu0 %1181
    %1184 = vrot.lane.b32.xlu0 %v1179, 104
    %v1185 = vpop.permute.xlu0 %1184
    %v1186 = vsel %vm335, %v1182, 0
    %v1188 = vsel %vm335, %v1185, 0
    %1190 = vmatprep.subr.mxu0 0.0
    %1191 = vmatpush1.xpose.msra.mxu0 %v1188
    %1192 = vmatprep.subr.mxu0 0.0
    %1193 = vmatpush1.xpose.msra.mxu0 0.0
    %1194 = vmatprep.subr.mxu0 0.0
    %1195 = vmatpush1.xpose.msra.mxu0 0.0
    %1196 = vmatprep.subr.mxu0 0.0
    %1197 = vmatpush1.xpose.msra.mxu0 0.0
    %1198 = vmatprep.subr.mxu0 0.0
    %1199 = vmatpush1.xpose.msra.mxu0 0.0
    %1200 = vmatprep.subr.mxu0 0.0
    %1201 = vmatpush1.xpose.msra.mxu0 0.0
    %1202 = vmatprep.subr.mxu0 0.0
    %1203 = vmatpush1.xpose.msra.mxu0 0.0
    %1204 = vmatprep.subr.mxu0 0.0
    %1205 = vmatpush1.xpose.msra.mxu0 0.0
    %1206 = vmatprep.subr.mxu0 0.0
    %1207 = vmatpush1.xpose.msra.mxu0 0.0
    %1208 = vmatprep.subr.mxu0 0.0
    %1209 = vmatpush1.xpose.msra.mxu0 0.0
    %1210 = vmatprep.subr.mxu0 0.0
    %1211 = vmatpush1.xpose.msra.mxu0 0.0
    %1212 = vmatprep.subr.mxu0 0.0
    %1213 = vmatpush1.xpose.msra.mxu0 0.0
    %1214 = vmatprep.subr.mxu0 0.0
    %1215 = vmatpush1.xpose.msra.mxu0 0.0
    %1216 = vmatprep.subr.mxu0 0.0
    %1217 = vmatpush1.xpose.msra.mxu0 0.0
    %1218 = vmatprep.subr.mxu0 0.0
    %1219 = vmatpush1.xpose.msra.mxu0 0.0
    %1220 = vmatprep.subr.mxu0 0.0
    %1221 = vmatpush1.xpose.msra.mxu0 0.0
    %1222 = vmatprep.subr.mxu0 0.0
    %1223 = vmatpush1.xpose.msra.mxu0 0.0
    %1224 = vmatprep.subr.mxu0 0.0
    %1225 = vmatpush1.xpose.msra.mxu0 0.0
    %1226 = vmatprep.subr.mxu0 0.0
    %1227 = vmatpush1.xpose.msra.mxu0 0.0
    %1228 = vmatprep.subr.mxu0 0.0
    %1229 = vmatpush1.xpose.msra.mxu0 0.0
    %1230 = vmatprep.subr.mxu0 0.0
    %1231 = vmatpush1.xpose.msra.mxu0 0.0
    %1232 = vmatprep.subr.mxu0 0.0
    %1233 = vmatpush1.xpose.msra.mxu0 0.0
    %1234 = vmatprep.subr.mxu0 0.0
    %1235 = vmatpush1.xpose.msra.mxu0 0.0
    %1236 = vmatprep.subr.mxu0 0.0
    %1237 = vmatpush1.xpose.msra.mxu0 0.0
    %1238 = vmatprep.subr.mxu0 0.0
    %1239 = vmatpush1.xpose.msra.mxu0 0.0
    %1240 = vmatprep.subr.mxu0 0.0
    %1241 = vmatpush1.xpose.msra.mxu0 0.0
    %1242 = vmatprep.subr.mxu0 0.0
    %1243 = vmatpush1.xpose.msra.mxu0 0.0
    %1244 = vmatprep.subr.mxu0 0.0
    %1245 = vmatpush1.xpose.msra.mxu0 0.0
    %1246 = vmatprep.subr.mxu0 0.0
    %1247 = vmatpush1.xpose.msra.mxu0 0.0
    %1248 = vmatprep.subr.mxu0 0.0
    %1249 = vmatpush1.xpose.msra.mxu0 0.0
    %1250 = vmatprep.subr.mxu0 0.0
    %1251 = vmatpush1.xpose.msra.mxu0 0.0
    %1252 = vmatprep.subr.mxu0 0.0
    %1253 = vmatpush1.xpose.msra.mxu0 0.0
    %1254 = vmatprep.mubr.f32.mxu0 0.0
    %1255 = vmatmul.mubr.f32.gmra.mrb[0].mxu0 %v1186
    %v1256 = vpop.f32.mrb[0].mxu0
    %v1257 = vadd.f32 0.0, %v1256
    %v1258 = vpop.f32.mrb[0].mxu0
    %1259 = vdwg.mxu0
    %v1260 = vmul.f32 %v1257, 0.35355338
    %s1261 = scalar_lea.vmem %s11, 1
    %v1262 = vld [vmem:[%s1261] sm:$0x1]
    %v1264 = vlaneseq
    %v1265 = vshrl.u32 %v1264, 7
    %v1266 = vsub.s32 0, %v1265
    %v1267 = vrot.slane %v1262, %v1266
    %1268 = vrot.lane.b32.xlu0 %v1267, 24
    %v1269 = vpop.permute.xlu0 %1268
    %v1271 = vmul.f32 %v321, %v1269
    %1273 = vrot.lane.b32.xlu0 %v1271, 104
    %v1274 = vpop.permute.xlu0 %1273
    %v1276 = vsel %vm335, %v1274, 0.0
    %1277 = vadd.xlane.f32.xlu0 %v1276
    %v1278 = vpop.xlane.xlu0 %1277
    %1279 = vrot.lane.b32.xlu0 %v321, 104
    %v1280 = vpop.permute.xlu0 %1279
    %v1281 = vsel %vm335, %v1262, 0
    %v1283 = vsel %vm335, %v1280, 0
    %1285 = vmatprep.subr.mxu0 0.0
    %1286 = vmatpush1.xpose.msra.mxu0 %v1283
    %1287 = vmatprep.subr.mxu0 0.0
    %1288 = vmatpush1.xpose.msra.mxu0 0.0
    %1289 = vmatprep.subr.mxu0 0.0
    %1290 = vmatpush1.xpose.msra.mxu0 0.0
    %1291 = vmatprep.subr.mxu0 0.0
    %1292 = vmatpush1.xpose.msra.mxu0 0.0
    %1293 = vmatprep.subr.mxu0 0.0
    %1294 = vmatpush1.xpose.msra.mxu0 0.0
    %1295 = vmatprep.subr.mxu0 0.0
    %1296 = vmatpush1.xpose.msra.mxu0 0.0
    %1297 = vmatprep.subr.mxu0 0.0
    %1298 = vmatpush1.xpose.msra.mxu0 0.0
    %1299 = vmatprep.subr.mxu0 0.0
    %1300 = vmatpush1.xpose.msra.mxu0 0.0
    %1301 = vmatprep.subr.mxu0 0.0
    %1302 = vmatpush1.xpose.msra.mxu0 0.0
    %1303 = vmatprep.subr.mxu0 0.0
    %1304 = vmatpush1.xpose.msra.mxu0 0.0
    %1305 = vmatprep.subr.mxu0 0.0
    %1306 = vmatpush1.xpose.msra.mxu0 0.0
    %1307 = vmatprep.subr.mxu0 0.0
    %1308 = vmatpush1.xpose.msra.mxu0 0.0
    %1309 = vmatprep.subr.mxu0 0.0
    %1310 = vmatpush1.xpose.msra.mxu0 0.0
    %1311 = vmatprep.subr.mxu0 0.0
    %1312 = vmatpush1.xpose.msra.mxu0 0.0
    %1313 = vmatprep.subr.mxu0 0.0
    %1314 = vmatpush1.xpose.msra.mxu0 0.0
    %1315 = vmatprep.subr.mxu0 0.0
    %1316 = vmatpush1.xpose.msra.mxu0 0.0
    %1317 = vmatprep.subr.mxu0 0.0
    %1318 = vmatpush1.xpose.msra.mxu0 0.0
    %1319 = vmatprep.subr.mxu0 0.0
    %1320 = vmatpush1.xpose.msra.mxu0 0.0
    %1321 = vmatprep.subr.mxu0 0.0
    %1322 = vmatpush1.xpose.msra.mxu0 0.0
    %1323 = vmatprep.subr.mxu0 0.0
    %1324 = vmatpush1.xpose.msra.mxu0 0.0
    %1325 = vmatprep.subr.mxu0 0.0
    %1326 = vmatpush1.xpose.msra.mxu0 0.0
    %1327 = vmatprep.subr.mxu0 0.0
    %1328 = vmatpush1.xpose.msra.mxu0 0.0
    %1329 = vmatprep.subr.mxu0 0.0
    %1330 = vmatpush1.xpose.msra.mxu0 0.0
    %1331 = vmatprep.subr.mxu0 0.0
    %1332 = vmatpush1.xpose.msra.mxu0 0.0
    %1333 = vmatprep.subr.mxu0 0.0
    %1334 = vmatpush1.xpose.msra.mxu0 0.0
    %1335 = vmatprep.subr.mxu0 0.0
    %1336 = vmatpush1.xpose.msra.mxu0 0.0
    %1337 = vmatprep.subr.mxu0 0.0
    %1338 = vmatpush1.xpose.msra.mxu0 0.0
    %1339 = vmatprep.subr.mxu0 0.0
    %1340 = vmatpush1.xpose.msra.mxu0 0.0
    %1341 = vmatprep.subr.mxu0 0.0
    %1342 = vmatpush1.xpose.msra.mxu0 0.0
    %1343 = vmatprep.subr.mxu0 0.0
    %1344 = vmatpush1.xpose.msra.mxu0 0.0
    %1345 = vmatprep.subr.mxu0 0.0
    %1346 = vmatpush1.xpose.msra.mxu0 0.0
    %1347 = vmatprep.subr.mxu0 0.0
    %1348 = vmatpush1.xpose.msra.mxu0 0.0
    %1349 = vmatprep.mubr.f32.mxu0 0.0
    %1350 = vmatmul.mubr.f32.gmra.mrb[0].mxu0 %v1281
    %v1351 = vpop.f32.mrb[0].mxu0
    %v1352 = vadd.f32 0.0, %v1351
    %v1353 = vpop.f32.mrb[0].mxu0
    %1354 = vdwg.mxu0
    %s1355 = scalar_lea.vmem %s10, 8
    %v1356 = vld [vmem:[%s1355] sm:$0xff]
    %v1357 = vadd.f32 %v1356, %v1278
    %v1358 = vlaneseq
    %v1359 = vshrl.u32 %v1358, 7
    %v1360 = vsub.s32 0, %v1359
    %v1361 = vrot.slane %v1352, %v1360
    %v1362 = vadd.f32 %v1357, %v1361
    %v1363 = vadd.f32 %v1260, %v1362
    %v1364 = vadd.f32 %v1363, %v334
    %v1365 = vsel %vm335, %v1364, -inf
    %1366 = vmax.xlane.f32.xlu0 %v1365
    %v1367 = vpop.xlane.xlu0 %1366
    %v1368 = vsub.f32 %v1364, %v1367
    %v1369 = vmul.f32 %v1368, 1.442695
    %v1370 = vpow.pop %v1369
    %v1371 = vsel %vm335, %v1370, 0.0
    %1372 = vadd.xlane.f32.xlu0 %v1371
    %v1373 = vpop.xlane.xlu0 %1372
    %v1374 = vrcp.pop %v1373
    %v1375 = vmul.f32 %v1370, %v1374
    %v1378 = vsel %vm335, %v1375, 0
    %1380 = vmatprep.subr.mxu0 0.0
    %1381 = vmatpush1.msra.mxu0 %v1280
    %1382 = vmatprep.subr.mxu0 0.0
    %1383 = vmatpush1.msra.mxu0 0.0
    %1384 = vmatprep.subr.mxu0 0.0
    %1385 = vmatpush1.msra.mxu0 0.0
    %1386 = vmatprep.subr.mxu0 0.0
    %1387 = vmatpush1.msra.mxu0 0.0
    %1388 = vmatprep.subr.mxu0 0.0
    %1389 = vmatpush1.msra.mxu0 0.0
    %1390 = vmatprep.subr.mxu0 0.0
    %1391 = vmatpush1.msra.mxu0 0.0
    %1392 = vmatprep.subr.mxu0 0.0
    %1393 = vmatpush1.msra.mxu0 0.0
    %1394 = vmatprep.subr.mxu0 0.0
    %1395 = vmatpush1.msra.mxu0 0.0
    %1396 = vmatprep.subr.mxu0 0.0
    %1397 = vmatpush1.msra.mxu0 0.0
    %1398 = vmatprep.subr.mxu0 0.0
    %1399 = vmatpush1.msra.mxu0 0.0
    %1400 = vmatprep.subr.mxu0 0.0
    %1401 = vmatpush1.msra.mxu0 0.0
    %1402 = vmatprep.subr.mxu0 0.0
    %1403 = vmatpush1.msra.mxu0 0.0
    %1404 = vmatprep.subr.mxu0 0.0
    %1405 = vmatpush1.msra.mxu0 0.0
    %1406 = vmatprep.subr.mxu0 0.0
    %1407 = vmatpush1.msra.mxu0 0.0
    %1408 = vmatprep.subr.mxu0 0.0
    %1409 = vmatpush1.msra.mxu0 0.0
    %1410 = vmatprep.subr.mxu0 0.0
    %1411 = vmatpush1.msra.mxu0 0.0
    %1412 = vmatprep.subr.mxu0 0.0
    %1413 = vmatpush1.msra.mxu0 0.0
    %1414 = vmatprep.subr.mxu0 0.0
    %1415 = vmatpush1.msra.mxu0 0.0
    %1416 = vmatprep.subr.mxu0 0.0
    %1417 = vmatpush1.msra.mxu0 0.0
    %1418 = vmatprep.subr.mxu0 0.0
    %1419 = vmatpush1.msra.mxu0 0.0
    %1420 = vmatprep.subr.mxu0 0.0
    %1421 = vmatpush1.msra.mxu0 0.0
    %1422 = vmatprep.subr.mxu0 0.0
    %1423 = vmatpush1.msra.mxu0 0.0
    %1424 = vmatprep.subr.mxu0 0.0
    %1425 = vmatpush1.msra.mxu0 0.0
    %1426 = vmatprep.subr.mxu0 0.0
    %1427 = vmatpush1.msra.mxu0 0.0
    %1428 = vmatprep.subr.mxu0 0.0
    %1429 = vmatpush1.msra.mxu0 0.0
    %1430 = vmatprep.subr.mxu0 0.0
    %1431 = vmatpush1.msra.mxu0 0.0
    %1432 = vmatprep.subr.mxu0 0.0
    %1433 = vmatpush1.msra.mxu0 0.0
    %1434 = vmatprep.subr.mxu0 0.0
    %1435 = vmatpush1.msra.mxu0 0.0
    %1436 = vmatprep.subr.mxu0 0.0
    %1437 = vmatpush1.msra.mxu0 0.0
    %1438 = vmatprep.subr.mxu0 0.0
    %1439 = vmatpush1.msra.mxu0 0.0
    %1440 = vmatprep.subr.mxu0 0.0
    %1441 = vmatpush1.msra.mxu0 0.0
    %1442 = vmatprep.subr.mxu0 0.0
    %1443 = vmatpush1.msra.mxu0 0.0
    %1444 = vmatprep.mubr.f32.mxu0 0.0
    %1445 = vmatmul.mubr.f32.gmra.mrb[0].mxu0 %v1378
    %v1446 = vpop.f32.mrb[0].mxu0
    %v1447 = vadd.f32 0.0, %v1446
    %v1448 = vpop.f32.mrb[0].mxu0
    %1449 = vdwg.mxu0
    %v1451 = vsel %vm335, %v1447, 0
    %1453 = vmatprep.subr.mxu0 0.0
    %1454 = vmatpush1.msra.mxu0 %v332
    %1455 = vmatprep.subr.mxu0 0.0
    %1456 = vmatpush1.msra.mxu0 0.0
    %1457 = vmatprep.subr.mxu0 0.0
    %1458 = vmatpush1.msra.mxu0 0.0
    %1459 = vmatprep.subr.mxu0 0.0
    %1460 = vmatpush1.msra.mxu0 0.0
    %1461 = vmatprep.subr.mxu0 0.0
    %1462 = vmatpush1.msra.mxu0 0.0
    %1463 = vmatprep.subr.mxu0 0.0
    %1464 = vmatpush1.msra.mxu0 0.0
    %1465 = vmatprep.subr.mxu0 0.0
    %1466 = vmatpush1.msra.mxu0 0.0
    %1467 = vmatprep.subr.mxu0 0.0
    %1468 = vmatpush1.msra.mxu0 0.0
    %1469 = vmatprep.subr.mxu0 0.0
    %1470 = vmatpush1.msra.mxu0 0.0
    %1471 = vmatprep.subr.mxu0 0.0
    %1472 = vmatpush1.msra.mxu0 0.0
    %1473 = vmatprep.subr.mxu0 0.0
    %1474 = vmatpush1.msra.mxu0 0.0
    %1475 = vmatprep.subr.mxu0 0.0
    %1476 = vmatpush1.msra.mxu0 0.0
    %1477 = vmatprep.subr.mxu0 0.0
    %1478 = vmatpush1.msra.mxu0 0.0
    %1479 = vmatprep.subr.mxu0 0.0
    %1480 = vmatpush1.msra.mxu0 0.0
    %1481 = vmatprep.subr.mxu0 0.0
    %1482 = vmatpush1.msra.mxu0 0.0
    %1483 = vmatprep.subr.mxu0 0.0
    %1484 = vmatpush1.msra.mxu0 0.0
    %1485 = vmatprep.subr.mxu0 0.0
    %1486 = vmatpush1.msra.mxu0 0.0
    %1487 = vmatprep.subr.mxu0 0.0
    %1488 = vmatpush1.msra.mxu0 0.0
    %1489 = vmatprep.subr.mxu0 0.0
    %1490 = vmatpush1.msra.mxu0 0.0
    %1491 = vmatprep.subr.mxu0 0.0
    %1492 = vmatpush1.msra.mxu0 0.0
    %1493 = vmatprep.subr.mxu0 0.0
    %1494 = vmatpush1.msra.mxu0 0.0
    %1495 = vmatprep.subr.mxu0 0.0
    %1496 = vmatpush1.msra.mxu0 0.0
    %1497 = vmatprep.subr.mxu0 0.0
    %1498 = vmatpush1.msra.mxu0 0.0
    %1499 = vmatprep.subr.mxu0 0.0
    %1500 = vmatpush1.msra.mxu0 0.0
    %1501 = vmatprep.subr.mxu0 0.0
    %1502 = vmatpush1.msra.mxu0 0.0
    %1503 = vmatprep.subr.mxu0 0.0
    %1504 = vmatpush1.msra.mxu0 0.0
    %1505 = vmatprep.subr.mxu0 0.0
    %1506 = vmatpush1.msra.mxu0 0.0
    %1507 = vmatprep.subr.mxu0 0.0
    %1508 = vmatpush1.msra.mxu0 0.0
    %1509 = vmatprep.subr.mxu0 0.0
    %1510 = vmatpush1.msra.mxu0 0.0
    %1511 = vmatprep.subr.mxu0 0.0
    %1512 = vmatpush1.msra.mxu0 0.0
    %1513 = vmatprep.subr.mxu0 0.0
    %1514 = vmatpush1.msra.mxu0 0.0
    %1515 = vmatprep.subr.mxu0 0.0
    %1516 = vmatpush1.msra.mxu0 0.0
    %1517 = vmatprep.mubr.f32.mxu0 0.0
    %1518 = vmatmul.mubr.f32.gmra.mrb[0].mxu0 %v1451
    %v1519 = vpop.f32.mrb[0].mxu0
    %v1520 = vadd.f32 0.0, %v1519
    %v1521 = vpop.f32.mrb[0].mxu0
    %1522 = vdwg.mxu0
    %v1523 = vadd.f32 %v1165, %v1520
    %v1525 = vlaneseq
    %v1526 = vshrl.u32 %v1525, 7
    %v1527 = vsub.s32 0, %v1526
    %v1528 = vrot.slane %v333, %v1527
    %v1530 = vadd.f32 %v1523, %v1528
    %1531 = vst.msk [vmem:[#allocation2] sm:$0xff] %vm55, %v1530
    %s1532 = scalar_lea.vmem %s7, 8
    %v1533 = vld [vmem:[%s1532] sm:$0xff]
    %v1535 = vsel %vm335, %v134, 0
    %v1538 = vsel %vm335, %v230, 0
    %1540 = vmatprep.subr.mxu0 0.0
    %1541 = vmatpush1.xpose.msra.mxu0 %v1538
    %1542 = vmatprep.subr.mxu0 0.0
    %1543 = vmatpush1.xpose.msra.mxu0 0.0
    %1544 = vmatprep.subr.mxu0 0.0
    %1545 = vmatpush1.xpose.msra.mxu0 0.0
    %1546 = vmatprep.subr.mxu0 0.0
    %1547 = vmatpush1.xpose.msra.mxu0 0.0
    %1548 = vmatprep.subr.mxu0 0.0
    %1549 = vmatpush1.xpose.msra.mxu0 0.0
    %1550 = vmatprep.subr.mxu0 0.0
    %1551 = vmatpush1.xpose.msra.mxu0 0.0
    %1552 = vmatprep.subr.mxu0 0.0
    %1553 = vmatpush1.xpose.msra.mxu0 0.0
    %1554 = vmatprep.subr.mxu0 0.0
    %1555 = vmatpush1.xpose.msra.mxu0 0.0
    %1556 = vmatprep.subr.mxu0 0.0
    %1557 = vmatpush1.xpose.msra.mxu0 0.0
    %1558 = vmatprep.subr.mxu0 0.0
    %1559 = vmatpush1.xpose.msra.mxu0 0.0
    %1560 = vmatprep.subr.mxu0 0.0
    %1561 = vmatpush1.xpose.msra.mxu0 0.0
    %1562 = vmatprep.subr.mxu0 0.0
    %1563 = vmatpush1.xpose.msra.mxu0 0.0
    %1564 = vmatprep.subr.mxu0 0.0
    %1565 = vmatpush1.xpose.msra.mxu0 0.0
    %1566 = vmatprep.subr.mxu0 0.0
    %1567 = vmatpush1.xpose.msra.mxu0 0.0
    %1568 = vmatprep.subr.mxu0 0.0
    %1569 = vmatpush1.xpose.msra.mxu0 0.0
    %1570 = vmatprep.subr.mxu0 0.0
    %1571 = vmatpush1.xpose.msra.mxu0 0.0
    %1572 = vmatprep.subr.mxu0 0.0
    %1573 = vmatpush1.xpose.msra.mxu0 0.0
    %1574 = vmatprep.subr.mxu0 0.0
    %1575 = vmatpush1.xpose.msra.mxu0 0.0
    %1576 = vmatprep.subr.mxu0 0.0
    %1577 = vmatpush1.xpose.msra.mxu0 0.0
    %1578 = vmatprep.subr.mxu0 0.0
    %1579 = vmatpush1.xpose.msra.mxu0 0.0
    %1580 = vmatprep.subr.mxu0 0.0
    %1581 = vmatpush1.xpose.msra.mxu0 0.0
    %1582 = vmatprep.subr.mxu0 0.0
    %1583 = vmatpush1.xpose.msra.mxu0 0.0
    %1584 = vmatprep.subr.mxu0 0.0
    %1585 = vmatpush1.xpose.msra.mxu0 0.0
    %1586 = vmatprep.subr.mxu0 0.0
    %1587 = vmatpush1.xpose.msra.mxu0 0.0
    %1588 = vmatprep.subr.mxu0 0.0
    %1589 = vmatpush1.xpose.msra.mxu0 0.0
    %1590 = vmatprep.subr.mxu0 0.0
    %1591 = vmatpush1.xpose.msra.mxu0 0.0
    %1592 = vmatprep.subr.mxu0 0.0
    %1593 = vmatpush1.xpose.msra.mxu0 0.0
    %1594 = vmatprep.subr.mxu0 0.0
    %1595 = vmatpush1.xpose.msra.mxu0 0.0
    %1596 = vmatprep.subr.mxu0 0.0
    %1597 = vmatpush1.xpose.msra.mxu0 0.0
    %1598 = vmatprep.subr.mxu0 0.0
    %1599 = vmatpush1.xpose.msra.mxu0 0.0
    %1600 = vmatprep.subr.mxu0 0.0
    %1601 = vmatpush1.xpose.msra.mxu0 0.0
    %1602 = vmatprep.subr.mxu0 0.0
    %1603 = vmatpush1.xpose.msra.mxu0 0.0
    %1604 = vmatprep.mubr.f32.mxu0 0.0
    %1605 = vmatmul.mubr.f32.gmra.mrb[0].mxu0 %v1535
    %v1606 = vpop.f32.mrb[0].mxu0
    %v1607 = vadd.f32 0.0, %v1606
    %v1608 = vpop.f32.mrb[0].mxu0
    %1609 = vdwg.mxu0
    %v1610 = vmul.f32 %v1607, 0.35355338
    %v1611 = vadd.f32 %v1610, %v1533
    %v1612 = vsel %vm335, %v1611, -inf
    %1613 = vmax.xlane.f32.xlu0 %v1612
    %v1614 = vpop.xlane.xlu0 %1613
    %v1615 = vsub.f32 %v1611, %v1614
    %v1616 = vmul.f32 %v1615, 1.442695
    %v1617 = vpow.pop %v1616
    %v1618 = vsel %vm335, %v1617, 0.0
    %1619 = vadd.xlane.f32.xlu0 %v1618
    %v1620 = vpop.xlane.xlu0 %1619
    %v1621 = vrcp.pop %v1620
    %v1622 = vmul.f32 %v1617, %v1621
    %v1624 = vsel %vm335, %v1622, 0
    %1626 = vmatprep.subr.mxu0 0.0
    %1627 = vmatpush1.msra.mxu0 %v326
    %1628 = vmatprep.subr.mxu0 0.0
    %1629 = vmatpush1.msra.mxu0 0.0
    %1630 = vmatprep.subr.mxu0 0.0
    %1631 = vmatpush1.msra.mxu0 0.0
    %1632 = vmatprep.subr.mxu0 0.0
    %1633 = vmatpush1.msra.mxu0 0.0
    %1634 = vmatprep.subr.mxu0 0.0
    %1635 = vmatpush1.msra.mxu0 0.0
    %1636 = vmatprep.subr.mxu0 0.0
    %1637 = vmatpush1.msra.mxu0 0.0
    %1638 = vmatprep.subr.mxu0 0.0
    %1639 = vmatpush1.msra.mxu0 0.0
    %1640 = vmatprep.subr.mxu0 0.0
    %1641 = vmatpush1.msra.mxu0 0.0
    %1642 = vmatprep.subr.mxu0 0.0
    %1643 = vmatpush1.msra.mxu0 0.0
    %1644 = vmatprep.subr.mxu0 0.0
    %1645 = vmatpush1.msra.mxu0 0.0
    %1646 = vmatprep.subr.mxu0 0.0
    %1647 = vmatpush1.msra.mxu0 0.0
    %1648 = vmatprep.subr.mxu0 0.0
    %1649 = vmatpush1.msra.mxu0 0.0
    %1650 = vmatprep.subr.mxu0 0.0
    %1651 = vmatpush1.msra.mxu0 0.0
    %1652 = vmatprep.subr.mxu0 0.0
    %1653 = vmatpush1.msra.mxu0 0.0
    %1654 = vmatprep.subr.mxu0 0.0
    %1655 = vmatpush1.msra.mxu0 0.0
    %1656 = vmatprep.subr.mxu0 0.0
    %1657 = vmatpush1.msra.mxu0 0.0
    %1658 = vmatprep.subr.mxu0 0.0
    %1659 = vmatpush1.msra.mxu0 0.0
    %1660 = vmatprep.subr.mxu0 0.0
    %1661 = vmatpush1.msra.mxu0 0.0
    %1662 = vmatprep.subr.mxu0 0.0
    %1663 = vmatpush1.msra.mxu0 0.0
    %1664 = vmatprep.subr.mxu0 0.0
    %1665 = vmatpush1.msra.mxu0 0.0
    %1666 = vmatprep.subr.mxu0 0.0
    %1667 = vmatpush1.msra.mxu0 0.0
    %1668 = vmatprep.subr.mxu0 0.0
    %1669 = vmatpush1.msra.mxu0 0.0
    %1670 = vmatprep.subr.mxu0 0.0
    %1671 = vmatpush1.msra.mxu0 0.0
    %1672 = vmatprep.subr.mxu0 0.0
    %1673 = vmatpush1.msra.mxu0 0.0
    %1674 = vmatprep.subr.mxu0 0.0
    %1675 = vmatpush1.msra.mxu0 0.0
    %1676 = vmatprep.subr.mxu0 0.0
    %1677 = vmatpush1.msra.mxu0 0.0
    %1678 = vmatprep.subr.mxu0 0.0
    %1679 = vmatpush1.msra.mxu0 0.0
    %1680 = vmatprep.subr.mxu0 0.0
    %1681 = vmatpush1.msra.mxu0 0.0
    %1682 = vmatprep.subr.mxu0 0.0
    %1683 = vmatpush1.msra.mxu0 0.0
    %1684 = vmatprep.subr.mxu0 0.0
    %1685 = vmatpush1.msra.mxu0 0.0
    %1686 = vmatprep.subr.mxu0 0.0
    %1687 = vmatpush1.msra.mxu0 0.0
    %1688 = vmatprep.subr.mxu0 0.0
    %1689 = vmatpush1.msra.mxu0 0.0
    %1690 = vmatprep.mubr.f32.mxu0 0.0
    %1691 = vmatmul.mubr.f32.gmra.mrb[0].mxu0 %v1624
    %v1692 = vpop.f32.mrb[0].mxu0
    %v1693 = vadd.f32 0.0, %v1692
    %v1694 = vpop.f32.mrb[0].mxu0
    %1695 = vdwg.mxu0
    %1696 = vrot.lane.b32.xlu0 %v134, 120
    %v1697 = vpop.permute.xlu0 %1696
    %1698 = vrot.lane.b32.xlu0 %v230, 120
    %v1699 = vpop.permute.xlu0 %1698
    %v1700 = vsel %vm335, %v1697, 0
    %v1702 = vsel %vm335, %v1699, 0
    %1704 = vmatprep.subr.mxu0 0.0
    %1705 = vmatpush1.xpose.msra.mxu0 %v1702
    %1706 = vmatprep.subr.mxu0 0.0
    %1707 = vmatpush1.xpose.msra.mxu0 0.0
    %1708 = vmatprep.subr.mxu0 0.0
    %1709 = vmatpush1.xpose.msra.mxu0 0.0
    %1710 = vmatprep.subr.mxu0 0.0
    %1711 = vmatpush1.xpose.msra.mxu0 0.0
    %1712 = vmatprep.subr.mxu0 0.0
    %1713 = vmatpush1.xpose.msra.mxu0 0.0
    %1714 = vmatprep.subr.mxu0 0.0
    %1715 = vmatpush1.xpose.msra.mxu0 0.0
    %1716 = vmatprep.subr.mxu0 0.0
    %1717 = vmatpush1.xpose.msra.mxu0 0.0
    %1718 = vmatprep.subr.mxu0 0.0
    %1719 = vmatpush1.xpose.msra.mxu0 0.0
    %1720 = vmatprep.subr.mxu0 0.0
    %1721 = vmatpush1.xpose.msra.mxu0 0.0
    %1722 = vmatprep.subr.mxu0 0.0
    %1723 = vmatpush1.xpose.msra.mxu0 0.0
    %1724 = vmatprep.subr.mxu0 0.0
    %1725 = vmatpush1.xpose.msra.mxu0 0.0
    %1726 = vmatprep.subr.mxu0 0.0
    %1727 = vmatpush1.xpose.msra.mxu0 0.0
    %1728 = vmatprep.subr.mxu0 0.0
    %1729 = vmatpush1.xpose.msra.mxu0 0.0
    %1730 = vmatprep.subr.mxu0 0.0
    %1731 = vmatpush1.xpose.msra.mxu0 0.0
    %1732 = vmatprep.subr.mxu0 0.0
    %1733 = vmatpush1.xpose.msra.mxu0 0.0
    %1734 = vmatprep.subr.mxu0 0.0
    %1735 = vmatpush1.xpose.msra.mxu0 0.0
    %1736 = vmatprep.subr.mxu0 0.0
    %1737 = vmatpush1.xpose.msra.mxu0 0.0
    %1738 = vmatprep.subr.mxu0 0.0
    %1739 = vmatpush1.xpose.msra.mxu0 0.0
    %1740 = vmatprep.subr.mxu0 0.0
    %1741 = vmatpush1.xpose.msra.mxu0 0.0
    %1742 = vmatprep.subr.mxu0 0.0
    %1743 = vmatpush1.xpose.msra.mxu0 0.0
    %1744 = vmatprep.subr.mxu0 0.0
    %1745 = vmatpush1.xpose.msra.mxu0 0.0
    %1746 = vmatprep.subr.mxu0 0.0
    %1747 = vmatpush1.xpose.msra.mxu0 0.0
    %1748 = vmatprep.subr.mxu0 0.0
    %1749 = vmatpush1.xpose.msra.mxu0 0.0
    %1750 = vmatprep.subr.mxu0 0.0
    %1751 = vmatpush1.xpose.msra.mxu0 0.0
    %1752 = vmatprep.subr.mxu0 0.0
    %1753 = vmatpush1.xpose.msra.mxu0 0.0
    %1754 = vmatprep.subr.mxu0 0.0
    %1755 = vmatpush1.xpose.msra.mxu0 0.0
    %1756 = vmatprep.subr.mxu0 0.0
    %1757 = vmatpush1.xpose.msra.mxu0 0.0
    %1758 = vmatprep.subr.mxu0 0.0
    %1759 = vmatpush1.xpose.msra.mxu0 0.0
    %1760 = vmatprep.subr.mxu0 0.0
    %1761 = vmatpush1.xpose.msra.mxu0 0.0
    %1762 = vmatprep.subr.mxu0 0.0
    %1763 = vmatpush1.xpose.msra.mxu0 0.0
    %1764 = vmatprep.subr.mxu0 0.0
    %1765 = vmatpush1.xpose.msra.mxu0 0.0
    %1766 = vmatprep.subr.mxu0 0.0
    %1767 = vmatpush1.xpose.msra.mxu0 0.0
    %1768 = vmatprep.mubr.f32.mxu0 0.0
    %1769 = vmatmul.mubr.f32.gmra.mrb[0].mxu0 %v1700
    %v1770 = vpop.f32.mrb[0].mxu0
    %v1771 = vadd.f32 0.0, %v1770
    %v1772 = vpop.f32.mrb[0].mxu0
    %1773 = vdwg.mxu0
    %v1774 = vmul.f32 %v1771, 0.35355338
    %v1775 = vadd.f32 %v1774, %v1533
    %v1776 = vsel %vm335, %v1775, -inf
    %1777 = vmax.xlane.f32.xlu0 %v1776
    %v1778 = vpop.xlane.xlu0 %1777
    %v1779 = vsub.f32 %v1775, %v1778
    %v1780 = vmul.f32 %v1779, 1.442695
    %v1781 = vpow.pop %v1780
    %v1782 = vsel %vm335, %v1781, 0.0
    %1783 = vadd.xlane.f32.xlu0 %v1782
    %v1784 = vpop.xlane.xlu0 %1783
    %v1785 = vrcp.pop %v1784
    %v1786 = vmul.f32 %v1781, %v1785
    %1788 = vrot.lane.b32.xlu0 %v326, 120
    %v1789 = vpop.permute.xlu0 %1788
    %v1792 = vsel %vm335, %v1786, 0
    %1794 = vmatprep.subr.mxu0 0.0
    %1795 = vmatpush1.msra.mxu0 %v1789
    %1796 = vmatprep.subr.mxu0 0.0
    %1797 = vmatpush1.msra.mxu0 0.0
    %1798 = vmatprep.subr.mxu0 0.0
    %1799 = vmatpush1.msra.mxu0 0.0
    %1800 = vmatprep.subr.mxu0 0.0
    %1801 = vmatpush1.msra.mxu0 0.0
    %1802 = vmatprep.subr.mxu0 0.0
    %1803 = vmatpush1.msra.mxu0 0.0
    %1804 = vmatprep.subr.mxu0 0.0
    %1805 = vmatpush1.msra.mxu0 0.0
    %1806 = vmatprep.subr.mxu0 0.0
    %1807 = vmatpush1.msra.mxu0 0.0
    %1808 = vmatprep.subr.mxu0 0.0
    %1809 = vmatpush1.msra.mxu0 0.0
    %1810 = vmatprep.subr.mxu0 0.0
    %1811 = vmatpush1.msra.mxu0 0.0
    %1812 = vmatprep.subr.mxu0 0.0
    %1813 = vmatpush1.msra.mxu0 0.0
    %1814 = vmatprep.subr.mxu0 0.0
    %1815 = vmatpush1.msra.mxu0 0.0
    %1816 = vmatprep.subr.mxu0 0.0
    %1817 = vmatpush1.msra.mxu0 0.0
    %1818 = vmatprep.subr.mxu0 0.0
    %1819 = vmatpush1.msra.mxu0 0.0
    %1820 = vmatprep.subr.mxu0 0.0
    %1821 = vmatpush1.msra.mxu0 0.0
    %1822 = vmatprep.subr.mxu0 0.0
    %1823 = vmatpush1.msra.mxu0 0.0
    %1824 = vmatprep.subr.mxu0 0.0
    %1825 = vmatpush1.msra.mxu0 0.0
    %1826 = vmatprep.subr.mxu0 0.0
    %1827 = vmatpush1.msra.mxu0 0.0
    %1828 = vmatprep.subr.mxu0 0.0
    %1829 = vmatpush1.msra.mxu0 0.0
    %1830 = vmatprep.subr.mxu0 0.0
    %1831 = vmatpush1.msra.mxu0 0.0
    %1832 = vmatprep.subr.mxu0 0.0
    %1833 = vmatpush1.msra.mxu0 0.0
    %1834 = vmatprep.subr.mxu0 0.0
    %1835 = vmatpush1.msra.mxu0 0.0
    %1836 = vmatprep.subr.mxu0 0.0
    %1837 = vmatpush1.msra.mxu0 0.0
    %1838 = vmatprep.subr.mxu0 0.0
    %1839 = vmatpush1.msra.mxu0 0.0
    %1840 = vmatprep.subr.mxu0 0.0
    %1841 = vmatpush1.msra.mxu0 0.0
    %1842 = vmatprep.subr.mxu0 0.0
    %1843 = vmatpush1.msra.mxu0 0.0
    %1844 = vmatprep.subr.mxu0 0.0
    %1845 = vmatpush1.msra.mxu0 0.0
    %1846 = vmatprep.subr.mxu0 0.0
    %1847 = vmatpush1.msra.mxu0 0.0
    %1848 = vmatprep.subr.mxu0 0.0
    %1849 = vmatpush1.msra.mxu0 0.0
    %1850 = vmatprep.subr.mxu0 0.0
    %1851 = vmatpush1.msra.mxu0 0.0
    %1852 = vmatprep.subr.mxu0 0.0
    %1853 = vmatpush1.msra.mxu0 0.0
    %1854 = vmatprep.subr.mxu0 0.0
    %1855 = vmatpush1.msra.mxu0 0.0
    %1856 = vmatprep.subr.mxu0 0.0
    %1857 = vmatpush1.msra.mxu0 0.0
    %1858 = vmatprep.mubr.f32.mxu0 0.0
    %1859 = vmatmul.mubr.f32.gmra.mrb[0].mxu0 %v1792
    %v1860 = vpop.f32.mrb[0].mxu0
    %v1861 = vadd.f32 0.0, %v1860
    %v1862 = vpop.f32.mrb[0].mxu0
    %1863 = vdwg.mxu0
    %v1865 = vsel %vm335, %v1861, 0
    %1867 = vmatprep.subr.mxu0 0.0
    %1868 = vmatpush1.msra.mxu0 %v330
    %1869 = vmatprep.subr.mxu0 0.0
    %1870 = vmatpush1.msra.mxu0 0.0
    %1871 = vmatprep.subr.mxu0 0.0
    %1872 = vmatpush1.msra.mxu0 0.0
    %1873 = vmatprep.subr.mxu0 0.0
    %1874 = vmatpush1.msra.mxu0 0.0
    %1875 = vmatprep.subr.mxu0 0.0
    %1876 = vmatpush1.msra.mxu0 0.0
    %1877 = vmatprep.subr.mxu0 0.0
    %1878 = vmatpush1.msra.mxu0 0.0
    %1879 = vmatprep.subr.mxu0 0.0
    %1880 = vmatpush1.msra.mxu0 0.0
    %1881 = vmatprep.subr.mxu0 0.0
    %1882 = vmatpush1.msra.mxu0 0.0
    %1883 = vmatprep.subr.mxu0 0.0
    %1884 = vmatpush1.msra.mxu0 0.0
    %1885 = vmatprep.subr.mxu0 0.0
    %1886 = vmatpush1.msra.mxu0 0.0
    %1887 = vmatprep.subr.mxu0 0.0
    %1888 = vmatpush1.msra.mxu0 0.0
    %1889 = vmatprep.subr.mxu0 0.0
    %1890 = vmatpush1.msra.mxu0 0.0
    %1891 = vmatprep.subr.mxu0 0.0
    %1892 = vmatpush1.msra.mxu0 0.0
    %1893 = vmatprep.subr.mxu0 0.0
    %1894 = vmatpush1.msra.mxu0 0.0
    %1895 = vmatprep.subr.mxu0 0.0
    %1896 = vmatpush1.msra.mxu0 0.0
    %1897 = vmatprep.subr.mxu0 0.0
    %1898 = vmatpush1.msra.mxu0 0.0
    %1899 = vmatprep.subr.mxu0 0.0
    %1900 = vmatpush1.msra.mxu0 0.0
    %1901 = vmatprep.subr.mxu0 0.0
    %1902 = vmatpush1.msra.mxu0 0.0
    %1903 = vmatprep.subr.mxu0 0.0
    %1904 = vmatpush1.msra.mxu0 0.0
    %1905 = vmatprep.subr.mxu0 0.0
    %1906 = vmatpush1.msra.mxu0 0.0
    %1907 = vmatprep.subr.mxu0 0.0
    %1908 = vmatpush1.msra.mxu0 0.0
    %1909 = vmatprep.subr.mxu0 0.0
    %1910 = vmatpush1.msra.mxu0 0.0
    %1911 = vmatprep.subr.mxu0 0.0
    %1912 = vmatpush1.msra.mxu0 0.0
    %1913 = vmatprep.subr.mxu0 0.0
    %1914 = vmatpush1.msra.mxu0 0.0
    %1915 = vmatprep.subr.mxu0 0.0
    %1916 = vmatpush1.msra.mxu0 0.0
    %1917 = vmatprep.subr.mxu0 0.0
    %1918 = vmatpush1.msra.mxu0 0.0
    %1919 = vmatprep.subr.mxu0 0.0
    %1920 = vmatpush1.msra.mxu0 0.0
    %1921 = vmatprep.subr.mxu0 0.0
    %1922 = vmatpush1.msra.mxu0 0.0
    %1923 = vmatprep.subr.mxu0 0.0
    %1924 = vmatpush1.msra.mxu0 0.0
    %1925 = vmatprep.subr.mxu0 0.0
    %1926 = vmatpush1.msra.mxu0 0.0
    %1927 = vmatprep.subr.mxu0 0.0
    %1928 = vmatpush1.msra.mxu0 0.0
    %1929 = vmatprep.subr.mxu0 0.0
    %1930 = vmatpush1.msra.mxu0 0.0
    %1931 = vmatprep.mubr.f32.mxu0 0.0
    %1932 = vmatmul.mubr.f32.gmra.mrb[0].mxu0 %v1865
    %v1933 = vpop.f32.mrb[0].mxu0
    %v1934 = vadd.f32 0.0, %v1933
    %v1935 = vpop.f32.mrb[0].mxu0
    %1936 = vdwg.mxu0
    %v1938 = vsel %vm335, %v1693, 0
    %1940 = vmatprep.subr.mxu0 0.0
    %1941 = vmatpush1.msra.mxu0 %v329
    %1942 = vmatprep.subr.mxu0 0.0
    %1943 = vmatpush1.msra.mxu0 0.0
    %1944 = vmatprep.subr.mxu0 0.0
    %1945 = vmatpush1.msra.mxu0 0.0
    %1946 = vmatprep.subr.mxu0 0.0
    %1947 = vmatpush1.msra.mxu0 0.0
    %1948 = vmatprep.subr.mxu0 0.0
    %1949 = vmatpush1.msra.mxu0 0.0
    %1950 = vmatprep.subr.mxu0 0.0
    %1951 = vmatpush1.msra.mxu0 0.0
    %1952 = vmatprep.subr.mxu0 0.0
    %1953 = vmatpush1.msra.mxu0 0.0
    %1954 = vmatprep.subr.mxu0 0.0
    %1955 = vmatpush1.msra.mxu0 0.0
    %1956 = vmatprep.subr.mxu0 0.0
    %1957 = vmatpush1.msra.mxu0 0.0
    %1958 = vmatprep.subr.mxu0 0.0
    %1959 = vmatpush1.msra.mxu0 0.0
    %1960 = vmatprep.subr.mxu0 0.0
    %1961 = vmatpush1.msra.mxu0 0.0
    %1962 = vmatprep.subr.mxu0 0.0
    %1963 = vmatpush1.msra.mxu0 0.0
    %1964 = vmatprep.subr.mxu0 0.0
    %1965 = vmatpush1.msra.mxu0 0.0
    %1966 = vmatprep.subr.mxu0 0.0
    %1967 = vmatpush1.msra.mxu0 0.0
    %1968 = vmatprep.subr.mxu0 0.0
    %1969 = vmatpush1.msra.mxu0 0.0
    %1970 = vmatprep.subr.mxu0 0.0
    %1971 = vmatpush1.msra.mxu0 0.0
    %1972 = vmatprep.subr.mxu0 0.0
    %1973 = vmatpush1.msra.mxu0 0.0
    %1974 = vmatprep.subr.mxu0 0.0
    %1975 = vmatpush1.msra.mxu0 0.0
    %1976 = vmatprep.subr.mxu0 0.0
    %1977 = vmatpush1.msra.mxu0 0.0
    %1978 = vmatprep.subr.mxu0 0.0
    %1979 = vmatpush1.msra.mxu0 0.0
    %1980 = vmatprep.subr.mxu0 0.0
    %1981 = vmatpush1.msra.mxu0 0.0
    %1982 = vmatprep.subr.mxu0 0.0
    %1983 = vmatpush1.msra.mxu0 0.0
    %1984 = vmatprep.subr.mxu0 0.0
    %1985 = vmatpush1.msra.mxu0 0.0
    %1986 = vmatprep.subr.mxu0 0.0
    %1987 = vmatpush1.msra.mxu0 0.0
    %1988 = vmatprep.subr.mxu0 0.0
    %1989 = vmatpush1.msra.mxu0 0.0
    %1990 = vmatprep.subr.mxu0 0.0
    %1991 = vmatpush1.msra.mxu0 0.0
    %1992 = vmatprep.subr.mxu0 0.0
    %1993 = vmatpush1.msra.mxu0 0.0
    %1994 = vmatprep.subr.mxu0 0.0
    %1995 = vmatpush1.msra.mxu0 0.0
    %1996 = vmatprep.subr.mxu0 0.0
    %1997 = vmatpush1.msra.mxu0 0.0
    %1998 = vmatprep.subr.mxu0 0.0
    %1999 = vmatpush1.msra.mxu0 0.0
    %2000 = vmatprep.subr.mxu0 0.0
    %2001 = vmatpush1.msra.mxu0 0.0
    %2002 = vmatprep.subr.mxu0 0.0
    %2003 = vmatpush1.msra.mxu0 0.0
    %2004 = vmatprep.mubr.f32.mxu0 0.0
    %2005 = vmatmul.mubr.f32.gmra.mrb[0].mxu0 %v1938
    %v2006 = vpop.f32.mrb[0].mxu0
    %v2007 = vadd.f32 %v1934, %v2006
    %v2008 = vpop.f32.mrb[0].mxu0
    %2009 = vdwg.mxu0
    %v2010 = vld [vmem:[%s8] sm:$0xff]
    %2012 = vrot.lane.b32.xlu0 %v2010, 16
    %v2013 = vpop.permute.xlu0 %2012
    %v2015 = vadd.f32 %v134, %v2013
    %v2016 = vld [vmem:[%s9] sm:$0xff]
    %2018 = vrot.lane.b32.xlu0 %v2016, 16
    %v2019 = vpop.permute.xlu0 %2018
    %v2021 = vadd.f32 %v230, %v2019
    %2023 = vrot.lane.b32.xlu0 %v2015, 112
    %v2024 = vpop.permute.xlu0 %2023
    %2026 = vrot.lane.b32.xlu0 %v2021, 112
    %v2027 = vpop.permute.xlu0 %2026
    %v2028 = vsel %vm335, %v2024, 0
    %v2030 = vsel %vm335, %v2027, 0
    %2032 = vmatprep.subr.mxu0 0.0
    %2033 = vmatpush1.xpose.msra.mxu0 %v2030
    %2034 = vmatprep.subr.mxu0 0.0
    %2035 = vmatpush1.xpose.msra.mxu0 0.0
    %2036 = vmatprep.subr.mxu0 0.0
    %2037 = vmatpush1.xpose.msra.mxu0 0.0
    %2038 = vmatprep.subr.mxu0 0.0
    %2039 = vmatpush1.xpose.msra.mxu0 0.0
    %2040 = vmatprep.subr.mxu0 0.0
    %2041 = vmatpush1.xpose.msra.mxu0 0.0
    %2042 = vmatprep.subr.mxu0 0.0
    %2043 = vmatpush1.xpose.msra.mxu0 0.0
    %2044 = vmatprep.subr.mxu0 0.0
    %2045 = vmatpush1.xpose.msra.mxu0 0.0
    %2046 = vmatprep.subr.mxu0 0.0
    %2047 = vmatpush1.xpose.msra.mxu0 0.0
    %2048 = vmatprep.subr.mxu0 0.0
    %2049 = vmatpush1.xpose.msra.mxu0 0.0
    %2050 = vmatprep.subr.mxu0 0.0
    %2051 = vmatpush1.xpose.msra.mxu0 0.0
    %2052 = vmatprep.subr.mxu0 0.0
    %2053 = vmatpush1.xpose.msra.mxu0 0.0
    %2054 = vmatprep.subr.mxu0 0.0
    %2055 = vmatpush1.xpose.msra.mxu0 0.0
    %2056 = vmatprep.subr.mxu0 0.0
    %2057 = vmatpush1.xpose.msra.mxu0 0.0
    %2058 = vmatprep.subr.mxu0 0.0
    %2059 = vmatpush1.xpose.msra.mxu0 0.0
    %2060 = vmatprep.subr.mxu0 0.0
    %2061 = vmatpush1.xpose.msra.mxu0 0.0
    %2062 = vmatprep.subr.mxu0 0.0
    %2063 = vmatpush1.xpose.msra.mxu0 0.0
    %2064 = vmatprep.subr.mxu0 0.0
    %2065 = vmatpush1.xpose.msra.mxu0 0.0
    %2066 = vmatprep.subr.mxu0 0.0
    %2067 = vmatpush1.xpose.msra.mxu0 0.0
    %2068 = vmatprep.subr.mxu0 0.0
    %2069 = vmatpush1.xpose.msra.mxu0 0.0
    %2070 = vmatprep.subr.mxu0 0.0
    %2071 = vmatpush1.xpose.msra.mxu0 0.0
    %2072 = vmatprep.subr.mxu0 0.0
    %2073 = vmatpush1.xpose.msra.mxu0 0.0
    %2074 = vmatprep.subr.mxu0 0.0
    %2075 = vmatpush1.xpose.msra.mxu0 0.0
    %2076 = vmatprep.subr.mxu0 0.0
    %2077 = vmatpush1.xpose.msra.mxu0 0.0
    %2078 = vmatprep.subr.mxu0 0.0
    %2079 = vmatpush1.xpose.msra.mxu0 0.0
    %2080 = vmatprep.subr.mxu0 0.0
    %2081 = vmatpush1.xpose.msra.mxu0 0.0
    %2082 = vmatprep.subr.mxu0 0.0
    %2083 = vmatpush1.xpose.msra.mxu0 0.0
    %2084 = vmatprep.subr.mxu0 0.0
    %2085 = vmatpush1.xpose.msra.mxu0 0.0
    %2086 = vmatprep.subr.mxu0 0.0
    %2087 = vmatpush1.xpose.msra.mxu0 0.0
    %2088 = vmatprep.subr.mxu0 0.0
    %2089 = vmatpush1.xpose.msra.mxu0 0.0
    %2090 = vmatprep.subr.mxu0 0.0
    %2091 = vmatpush1.xpose.msra.mxu0 0.0
    %2092 = vmatprep.subr.mxu0 0.0
    %2093 = vmatpush1.xpose.msra.mxu0 0.0
    %2094 = vmatprep.subr.mxu0 0.0
    %2095 = vmatpush1.xpose.msra.mxu0 0.0
    %2096 = vmatprep.mubr.f32.mxu0 0.0
    %2097 = vmatmul.mubr.f32.gmra.mrb[0].mxu0 %v2028
    %v2098 = vpop.f32.mrb[0].mxu0
    %v2099 = vadd.f32 0.0, %v2098
    %v2100 = vpop.f32.mrb[0].mxu0
    %2101 = vdwg.mxu0
    %v2102 = vmul.f32 %v2099, 0.35355338
    %v2103 = vld [vmem:[%s11] sm:$0x1]
    %v2105 = vlaneseq
    %v2106 = vshrl.u32 %v2105, 7
    %v2107 = vsub.s32 0, %v2106
    %v2108 = vrot.slane %v2103, %v2107
    %2109 = vrot.lane.b32.xlu0 %v2108, 16
    %v2110 = vpop.permute.xlu0 %2109
    %v2112 = vmul.f32 %v326, %v2110
    %2114 = vrot.lane.b32.xlu0 %v2112, 112
    %v2115 = vpop.permute.xlu0 %2114
    %v2117 = vsel %vm335, %v2115, 0.0
    %2118 = vadd.xlane.f32.xlu0 %v2117
    %v2119 = vpop.xlane.xlu0 %2118
    %2120 = vrot.lane.b32.xlu0 %v326, 112
    %v2121 = vpop.permute.xlu0 %2120
    %v2122 = vsel %vm335, %v2103, 0
    %v2124 = vsel %vm335, %v2121, 0
    %2126 = vmatprep.subr.mxu0 0.0
    %2127 = vmatpush1.xpose.msra.mxu0 %v2124
    %2128 = vmatprep.subr.mxu0 0.0
    %2129 = vmatpush1.xpose.msra.mxu0 0.0
    %2130 = vmatprep.subr.mxu0 0.0
    %2131 = vmatpush1.xpose.msra.mxu0 0.0
    %2132 = vmatprep.subr.mxu0 0.0
    %2133 = vmatpush1.xpose.msra.mxu0 0.0
    %2134 = vmatprep.subr.mxu0 0.0
    %2135 = vmatpush1.xpose.msra.mxu0 0.0
    %2136 = vmatprep.subr.mxu0 0.0
    %2137 = vmatpush1.xpose.msra.mxu0 0.0
    %2138 = vmatprep.subr.mxu0 0.0
    %2139 = vmatpush1.xpose.msra.mxu0 0.0
    %2140 = vmatprep.subr.mxu0 0.0
    %2141 = vmatpush1.xpose.msra.mxu0 0.0
    %2142 = vmatprep.subr.mxu0 0.0
    %2143 = vmatpush1.xpose.msra.mxu0 0.0
    %2144 = vmatprep.subr.mxu0 0.0
    %2145 = vmatpush1.xpose.msra.mxu0 0.0
    %2146 = vmatprep.subr.mxu0 0.0
    %2147 = vmatpush1.xpose.msra.mxu0 0.0
    %2148 = vmatprep.subr.mxu0 0.0
    %2149 = vmatpush1.xpose.msra.mxu0 0.0
    %2150 = vmatprep.subr.mxu0 0.0
    %2151 = vmatpush1.xpose.msra.mxu0 0.0
    %2152 = vmatprep.subr.mxu0 0.0
    %2153 = vmatpush1.xpose.msra.mxu0 0.0
    %2154 = vmatprep.subr.mxu0 0.0
    %2155 = vmatpush1.xpose.msra.mxu0 0.0
    %2156 = vmatprep.subr.mxu0 0.0
    %2157 = vmatpush1.xpose.msra.mxu0 0.0
    %2158 = vmatprep.subr.mxu0 0.0
    %2159 = vmatpush1.xpose.msra.mxu0 0.0
    %2160 = vmatprep.subr.mxu0 0.0
    %2161 = vmatpush1.xpose.msra.mxu0 0.0
    %2162 = vmatprep.subr.mxu0 0.0
    %2163 = vmatpush1.xpose.msra.mxu0 0.0
    %2164 = vmatprep.subr.mxu0 0.0
    %2165 = vmatpush1.xpose.msra.mxu0 0.0
    %2166 = vmatprep.subr.mxu0 0.0
    %2167 = vmatpush1.xpose.msra.mxu0 0.0
    %2168 = vmatprep.subr.mxu0 0.0
    %2169 = vmatpush1.xpose.msra.mxu0 0.0
    %2170 = vmatprep.subr.mxu0 0.0
    %2171 = vmatpush1.xpose.msra.mxu0 0.0
    %2172 = vmatprep.subr.mxu0 0.0
    %2173 = vmatpush1.xpose.msra.mxu0 0.0
    %2174 = vmatprep.subr.mxu0 0.0
    %2175 = vmatpush1.xpose.msra.mxu0 0.0
    %2176 = vmatprep.subr.mxu0 0.0
    %2177 = vmatpush1.xpose.msra.mxu0 0.0
    %2178 = vmatprep.subr.mxu0 0.0
    %2179 = vmatpush1.xpose.msra.mxu0 0.0
    %2180 = vmatprep.subr.mxu0 0.0
    %2181 = vmatpush1.xpose.msra.mxu0 0.0
    %2182 = vmatprep.subr.mxu0 0.0
    %2183 = vmatpush1.xpose.msra.mxu0 0.0
    %2184 = vmatprep.subr.mxu0 0.0
    %2185 = vmatpush1.xpose.msra.mxu0 0.0
    %2186 = vmatprep.subr.mxu0 0.0
    %2187 = vmatpush1.xpose.msra.mxu0 0.0
    %2188 = vmatprep.subr.mxu0 0.0
    %2189 = vmatpush1.xpose.msra.mxu0 0.0
    %2190 = vmatprep.mubr.f32.mxu0 0.0
    %2191 = vmatmul.mubr.f32.gmra.mrb[0].mxu0 %v2122
    %v2192 = vpop.f32.mrb[0].mxu0
    %v2193 = vadd.f32 0.0, %v2192
    %v2194 = vpop.f32.mrb[0].mxu0
    %2195 = vdwg.mxu0
    %v2196 = vld [vmem:[%s10] sm:$0xff]
    %v2197 = vadd.f32 %v2196, %v2119
    %v2198 = vlaneseq
    %v2199 = vshrl.u32 %v2198, 7
    %v2200 = vsub.s32 0, %v2199
    %v2201 = vrot.slane %v2193, %v2200
    %v2202 = vadd.f32 %v2197, %v2201
    %v2203 = vadd.f32 %v2102, %v2202
    %v2204 = vadd.f32 %v2203, %v1533
    %v2205 = vsel %vm335, %v2204, -inf
    %2206 = vmax.xlane.f32.xlu0 %v2205
    %v2207 = vpop.xlane.xlu0 %2206
    %v2208 = vsub.f32 %v2204, %v2207
    %v2209 = vmul.f32 %v2208, 1.442695
    %v2210 = vpow.pop %v2209
    %v2211 = vsel %vm335, %v2210, 0.0
    %2212 = vadd.xlane.f32.xlu0 %v2211
    %v2213 = vpop.xlane.xlu0 %2212
    %v2214 = vrcp.pop %v2213
    %v2215 = vmul.f32 %v2210, %v2214
    %v2218 = vsel %vm335, %v2215, 0
    %2220 = vmatprep.subr.mxu0 0.0
    %2221 = vmatpush1.msra.mxu0 %v2121
    %2222 = vmatprep.subr.mxu0 0.0
    %2223 = vmatpush1.msra.mxu0 0.0
    %2224 = vmatprep.subr.mxu0 0.0
    %2225 = vmatpush1.msra.mxu0 0.0
    %2226 = vmatprep.subr.mxu0 0.0
    %2227 = vmatpush1.msra.mxu0 0.0
    %2228 = vmatprep.subr.mxu0 0.0
    %2229 = vmatpush1.msra.mxu0 0.0
    %2230 = vmatprep.subr.mxu0 0.0
    %2231 = vmatpush1.msra.mxu0 0.0
    %2232 = vmatprep.subr.mxu0 0.0
    %2233 = vmatpush1.msra.mxu0 0.0
    %2234 = vmatprep.subr.mxu0 0.0
    %2235 = vmatpush1.msra.mxu0 0.0
    %2236 = vmatprep.subr.mxu0 0.0
    %2237 = vmatpush1.msra.mxu0 0.0
    %2238 = vmatprep.subr.mxu0 0.0
    %2239 = vmatpush1.msra.mxu0 0.0
    %2240 = vmatprep.subr.mxu0 0.0
    %2241 = vmatpush1.msra.mxu0 0.0
    %2242 = vmatprep.subr.mxu0 0.0
    %2243 = vmatpush1.msra.mxu0 0.0
    %2244 = vmatprep.subr.mxu0 0.0
    %2245 = vmatpush1.msra.mxu0 0.0
    %2246 = vmatprep.subr.mxu0 0.0
    %2247 = vmatpush1.msra.mxu0 0.0
    %2248 = vmatprep.subr.mxu0 0.0
    %2249 = vmatpush1.msra.mxu0 0.0
    %2250 = vmatprep.subr.mxu0 0.0
    %2251 = vmatpush1.msra.mxu0 0.0
    %2252 = vmatprep.subr.mxu0 0.0
    %2253 = vmatpush1.msra.mxu0 0.0
    %2254 = vmatprep.subr.mxu0 0.0
    %2255 = vmatpush1.msra.mxu0 0.0
    %2256 = vmatprep.subr.mxu0 0.0
    %2257 = vmatpush1.msra.mxu0 0.0
    %2258 = vmatprep.subr.mxu0 0.0
    %2259 = vmatpush1.msra.mxu0 0.0
    %2260 = vmatprep.subr.mxu0 0.0
    %2261 = vmatpush1.msra.mxu0 0.0
    %2262 = vmatprep.subr.mxu0 0.0
    %2263 = vmatpush1.msra.mxu0 0.0
    %2264 = vmatprep.subr.mxu0 0.0
    %2265 = vmatpush1.msra.mxu0 0.0
    %2266 = vmatprep.subr.mxu0 0.0
    %2267 = vmatpush1.msra.mxu0 0.0
    %2268 = vmatprep.subr.mxu0 0.0
    %2269 = vmatpush1.msra.mxu0 0.0
    %2270 = vmatprep.subr.mxu0 0.0
    %2271 = vmatpush1.msra.mxu0 0.0
    %2272 = vmatprep.subr.mxu0 0.0
    %2273 = vmatpush1.msra.mxu0 0.0
    %2274 = vmatprep.subr.mxu0 0.0
    %2275 = vmatpush1.msra.mxu0 0.0
    %2276 = vmatprep.subr.mxu0 0.0
    %2277 = vmatpush1.msra.mxu0 0.0
    %2278 = vmatprep.subr.mxu0 0.0
    %2279 = vmatpush1.msra.mxu0 0.0
    %2280 = vmatprep.subr.mxu0 0.0
    %2281 = vmatpush1.msra.mxu0 0.0
    %2282 = vmatprep.subr.mxu0 0.0
    %2283 = vmatpush1.msra.mxu0 0.0
    %2284 = vmatprep.mubr.f32.mxu0 0.0
    %2285 = vmatmul.mubr.f32.gmra.mrb[0].mxu0 %v2218
    %v2286 = vpop.f32.mrb[0].mxu0
    %v2287 = vadd.f32 0.0, %v2286
    %v2288 = vpop.f32.mrb[0].mxu0
    %2289 = vdwg.mxu0
    %v2291 = vsel %vm335, %v2287, 0
    %2293 = vmatprep.subr.mxu0 0.0
    %2294 = vmatpush1.msra.mxu0 %v331
    %2295 = vmatprep.subr.mxu0 0.0
    %2296 = vmatpush1.msra.mxu0 0.0
    %2297 = vmatprep.subr.mxu0 0.0
    %2298 = vmatpush1.msra.mxu0 0.0
    %2299 = vmatprep.subr.mxu0 0.0
    %2300 = vmatpush1.msra.mxu0 0.0
    %2301 = vmatprep.subr.mxu0 0.0
    %2302 = vmatpush1.msra.mxu0 0.0
    %2303 = vmatprep.subr.mxu0 0.0
    %2304 = vmatpush1.msra.mxu0 0.0
    %2305 = vmatprep.subr.mxu0 0.0
    %2306 = vmatpush1.msra.mxu0 0.0
    %2307 = vmatprep.subr.mxu0 0.0
    %2308 = vmatpush1.msra.mxu0 0.0
    %2309 = vmatprep.subr.mxu0 0.0
    %2310 = vmatpush1.msra.mxu0 0.0
    %2311 = vmatprep.subr.mxu0 0.0
    %2312 = vmatpush1.msra.mxu0 0.0
    %2313 = vmatprep.subr.mxu0 0.0
    %2314 = vmatpush1.msra.mxu0 0.0
    %2315 = vmatprep.subr.mxu0 0.0
    %2316 = vmatpush1.msra.mxu0 0.0
    %2317 = vmatprep.subr.mxu0 0.0
    %2318 = vmatpush1.msra.mxu0 0.0
    %2319 = vmatprep.subr.mxu0 0.0
    %2320 = vmatpush1.msra.mxu0 0.0
    %2321 = vmatprep.subr.mxu0 0.0
    %2322 = vmatpush1.msra.mxu0 0.0
    %2323 = vmatprep.subr.mxu0 0.0
    %2324 = vmatpush1.msra.mxu0 0.0
    %2325 = vmatprep.subr.mxu0 0.0
    %2326 = vmatpush1.msra.mxu0 0.0
    %2327 = vmatprep.subr.mxu0 0.0
    %2328 = vmatpush1.msra.mxu0 0.0
    %2329 = vmatprep.subr.mxu0 0.0
    %2330 = vmatpush1.msra.mxu0 0.0
    %2331 = vmatprep.subr.mxu0 0.0
    %2332 = vmatpush1.msra.mxu0 0.0
    %2333 = vmatprep.subr.mxu0 0.0
    %2334 = vmatpush1.msra.mxu0 0.0
    %2335 = vmatprep.subr.mxu0 0.0
    %2336 = vmatpush1.msra.mxu0 0.0
    %2337 = vmatprep.subr.mxu0 0.0
    %2338 = vmatpush1.msra.mxu0 0.0
    %2339 = vmatprep.subr.mxu0 0.0
    %2340 = vmatpush1.msra.mxu0 0.0
    %2341 = vmatprep.subr.mxu0 0.0
    %2342 = vmatpush1.msra.mxu0 0.0
    %2343 = vmatprep.subr.mxu0 0.0
    %2344 = vmatpush1.msra.mxu0 0.0
    %2345 = vmatprep.subr.mxu0 0.0
    %2346 = vmatpush1.msra.mxu0 0.0
    %2347 = vmatprep.subr.mxu0 0.0
    %2348 = vmatpush1.msra.mxu0 0.0
    %2349 = vmatprep.subr.mxu0 0.0
    %2350 = vmatpush1.msra.mxu0 0.0
    %2351 = vmatprep.subr.mxu0 0.0
    %2352 = vmatpush1.msra.mxu0 0.0
    %2353 = vmatprep.subr.mxu0 0.0
    %2354 = vmatpush1.msra.mxu0 0.0
    %2355 = vmatprep.subr.mxu0 0.0
    %2356 = vmatpush1.msra.mxu0 0.0
    %2357 = vmatprep.mubr.f32.mxu0 0.0
    %2358 = vmatmul.mubr.f32.gmra.mrb[0].mxu0 %v2291
    %v2359 = vpop.f32.mrb[0].mxu0
    %v2360 = vadd.f32 0.0, %v2359
    %v2361 = vpop.f32.mrb[0].mxu0
    %2362 = vdwg.mxu0
    %v2363 = vadd.f32 %v2007, %v2360
    %v2364 = vld [vmem:[%s1166] sm:$0xff]
    %2366 = vrot.lane.b32.xlu0 %v2364, 24
    %v2367 = vpop.permute.xlu0 %2366
    %v2369 = vadd.f32 %v134, %v2367
    %v2370 = vld [vmem:[%s1173] sm:$0xff]
    %2372 = vrot.lane.b32.xlu0 %v2370, 24
    %v2373 = vpop.permute.xlu0 %2372
    %v2375 = vadd.f32 %v230, %v2373
    %2377 = vrot.lane.b32.xlu0 %v2369, 104
    %v2378 = vpop.permute.xlu0 %2377
    %2380 = vrot.lane.b32.xlu0 %v2375, 104
    %v2381 = vpop.permute.xlu0 %2380
    %v2382 = vsel %vm335, %v2378, 0
    %v2384 = vsel %vm335, %v2381, 0
    %2386 = vmatprep.subr.mxu0 0.0
    %2387 = vmatpush1.xpose.msra.mxu0 %v2384
    %2388 = vmatprep.subr.mxu0 0.0
    %2389 = vmatpush1.xpose.msra.mxu0 0.0
    %2390 = vmatprep.subr.mxu0 0.0
    %2391 = vmatpush1.xpose.msra.mxu0 0.0
    %2392 = vmatprep.subr.mxu0 0.0
    %2393 = vmatpush1.xpose.msra.mxu0 0.0
    %2394 = vmatprep.subr.mxu0 0.0
    %2395 = vmatpush1.xpose.msra.mxu0 0.0
    %2396 = vmatprep.subr.mxu0 0.0
    %2397 = vmatpush1.xpose.msra.mxu0 0.0
    %2398 = vmatprep.subr.mxu0 0.0
    %2399 = vmatpush1.xpose.msra.mxu0 0.0
    %2400 = vmatprep.subr.mxu0 0.0
    %2401 = vmatpush1.xpose.msra.mxu0 0.0
    %2402 = vmatprep.subr.mxu0 0.0
    %2403 = vmatpush1.xpose.msra.mxu0 0.0
    %2404 = vmatprep.subr.mxu0 0.0
    %2405 = vmatpush1.xpose.msra.mxu0 0.0
    %2406 = vmatprep.subr.mxu0 0.0
    %2407 = vmatpush1.xpose.msra.mxu0 0.0
    %2408 = vmatprep.subr.mxu0 0.0
    %2409 = vmatpush1.xpose.msra.mxu0 0.0
    %2410 = vmatprep.subr.mxu0 0.0
    %2411 = vmatpush1.xpose.msra.mxu0 0.0
    %2412 = vmatprep.subr.mxu0 0.0
    %2413 = vmatpush1.xpose.msra.mxu0 0.0
    %2414 = vmatprep.subr.mxu0 0.0
    %2415 = vmatpush1.xpose.msra.mxu0 0.0
    %2416 = vmatprep.subr.mxu0 0.0
    %2417 = vmatpush1.xpose.msra.mxu0 0.0
    %2418 = vmatprep.subr.mxu0 0.0
    %2419 = vmatpush1.xpose.msra.mxu0 0.0
    %2420 = vmatprep.subr.mxu0 0.0
    %2421 = vmatpush1.xpose.msra.mxu0 0.0
    %2422 = vmatprep.subr.mxu0 0.0
    %2423 = vmatpush1.xpose.msra.mxu0 0.0
    %2424 = vmatprep.subr.mxu0 0.0
    %2425 = vmatpush1.xpose.msra.mxu0 0.0
    %2426 = vmatprep.subr.mxu0 0.0
    %2427 = vmatpush1.xpose.msra.mxu0 0.0
    %2428 = vmatprep.subr.mxu0 0.0
    %2429 = vmatpush1.xpose.msra.mxu0 0.0
    %2430 = vmatprep.subr.mxu0 0.0
    %2431 = vmatpush1.xpose.msra.mxu0 0.0
    %2432 = vmatprep.subr.mxu0 0.0
    %2433 = vmatpush1.xpose.msra.mxu0 0.0
    %2434 = vmatprep.subr.mxu0 0.0
    %2435 = vmatpush1.xpose.msra.mxu0 0.0
    %2436 = vmatprep.subr.mxu0 0.0
    %2437 = vmatpush1.xpose.msra.mxu0 0.0
    %2438 = vmatprep.subr.mxu0 0.0
    %2439 = vmatpush1.xpose.msra.mxu0 0.0
    %2440 = vmatprep.subr.mxu0 0.0
    %2441 = vmatpush1.xpose.msra.mxu0 0.0
    %2442 = vmatprep.subr.mxu0 0.0
    %2443 = vmatpush1.xpose.msra.mxu0 0.0
    %2444 = vmatprep.subr.mxu0 0.0
    %2445 = vmatpush1.xpose.msra.mxu0 0.0
    %2446 = vmatprep.subr.mxu0 0.0
    %2447 = vmatpush1.xpose.msra.mxu0 0.0
    %2448 = vmatprep.subr.mxu0 0.0
    %2449 = vmatpush1.xpose.msra.mxu0 0.0
    %2450 = vmatprep.mubr.f32.mxu0 0.0
    %2451 = vmatmul.mubr.f32.gmra.mrb[0].mxu0 %v2382
    %v2452 = vpop.f32.mrb[0].mxu0
    %v2453 = vadd.f32 0.0, %v2452
    %v2454 = vpop.f32.mrb[0].mxu0
    %2455 = vdwg.mxu0
    %v2456 = vmul.f32 %v2453, 0.35355338
    %v2457 = vld [vmem:[%s1261] sm:$0x1]
    %v2459 = vlaneseq
    %v2460 = vshrl.u32 %v2459, 7
    %v2461 = vsub.s32 0, %v2460
    %v2462 = vrot.slane %v2457, %v2461
    %2463 = vrot.lane.b32.xlu0 %v2462, 24
    %v2464 = vpop.permute.xlu0 %2463
    %v2466 = vmul.f32 %v326, %v2464
    %2468 = vrot.lane.b32.xlu0 %v2466, 104
    %v2469 = vpop.permute.xlu0 %2468
    %v2471 = vsel %vm335, %v2469, 0.0
    %2472 = vadd.xlane.f32.xlu0 %v2471
    %v2473 = vpop.xlane.xlu0 %2472
    %2474 = vrot.lane.b32.xlu0 %v326, 104
    %v2475 = vpop.permute.xlu0 %2474
    %v2476 = vsel %vm335, %v2457, 0
    %v2478 = vsel %vm335, %v2475, 0
    %2480 = vmatprep.subr.mxu0 0.0
    %2481 = vmatpush1.xpose.msra.mxu0 %v2478
    %2482 = vmatprep.subr.mxu0 0.0
    %2483 = vmatpush1.xpose.msra.mxu0 0.0
    %2484 = vmatprep.subr.mxu0 0.0
    %2485 = vmatpush1.xpose.msra.mxu0 0.0
    %2486 = vmatprep.subr.mxu0 0.0
    %2487 = vmatpush1.xpose.msra.mxu0 0.0
    %2488 = vmatprep.subr.mxu0 0.0
    %2489 = vmatpush1.xpose.msra.mxu0 0.0
    %2490 = vmatprep.subr.mxu0 0.0
    %2491 = vmatpush1.xpose.msra.mxu0 0.0
    %2492 = vmatprep.subr.mxu0 0.0
    %2493 = vmatpush1.xpose.msra.mxu0 0.0
    %2494 = vmatprep.subr.mxu0 0.0
    %2495 = vmatpush1.xpose.msra.mxu0 0.0
    %2496 = vmatprep.subr.mxu0 0.0
    %2497 = vmatpush1.xpose.msra.mxu0 0.0
    %2498 = vmatprep.subr.mxu0 0.0
    %2499 = vmatpush1.xpose.msra.mxu0 0.0
    %2500 = vmatprep.subr.mxu0 0.0
    %2501 = vmatpush1.xpose.msra.mxu0 0.0
    %2502 = vmatprep.subr.mxu0 0.0
    %2503 = vmatpush1.xpose.msra.mxu0 0.0
    %2504 = vmatprep.subr.mxu0 0.0
    %2505 = vmatpush1.xpose.msra.mxu0 0.0
    %2506 = vmatprep.subr.mxu0 0.0
    %2507 = vmatpush1.xpose.msra.mxu0 0.0
    %2508 = vmatprep.subr.mxu0 0.0
    %2509 = vmatpush1.xpose.msra.mxu0 0.0
    %2510 = vmatprep.subr.mxu0 0.0
    %2511 = vmatpush1.xpose.msra.mxu0 0.0
    %2512 = vmatprep.subr.mxu0 0.0
    %2513 = vmatpush1.xpose.msra.mxu0 0.0
    %2514 = vmatprep.subr.mxu0 0.0
    %2515 = vmatpush1.xpose.msra.mxu0 0.0
    %2516 = vmatprep.subr.mxu0 0.0
    %2517 = vmatpush1.xpose.msra.mxu0 0.0
    %2518 = vmatprep.subr.mxu0 0.0
    %2519 = vmatpush1.xpose.msra.mxu0 0.0
    %2520 = vmatprep.subr.mxu0 0.0
    %2521 = vmatpush1.xpose.msra.mxu0 0.0
    %2522 = vmatprep.subr.mxu0 0.0
    %2523 = vmatpush1.xpose.msra.mxu0 0.0
    %2524 = vmatprep.subr.mxu0 0.0
    %2525 = vmatpush1.xpose.msra.mxu0 0.0
    %2526 = vmatprep.subr.mxu0 0.0
    %2527 = vmatpush1.xpose.msra.mxu0 0.0
    %2528 = vmatprep.subr.mxu0 0.0
    %2529 = vmatpush1.xpose.msra.mxu0 0.0
    %2530 = vmatprep.subr.mxu0 0.0
    %2531 = vmatpush1.xpose.msra.mxu0 0.0
    %2532 = vmatprep.subr.mxu0 0.0
    %2533 = vmatpush1.xpose.msra.mxu0 0.0
    %2534 = vmatprep.subr.mxu0 0.0
    %2535 = vmatpush1.xpose.msra.mxu0 0.0
    %2536 = vmatprep.subr.mxu0 0.0
    %2537 = vmatpush1.xpose.msra.mxu0 0.0
    %2538 = vmatprep.subr.mxu0 0.0
    %2539 = vmatpush1.xpose.msra.mxu0 0.0
    %2540 = vmatprep.subr.mxu0 0.0
    %2541 = vmatpush1.xpose.msra.mxu0 0.0
    %2542 = vmatprep.subr.mxu0 0.0
    %2543 = vmatpush1.xpose.msra.mxu0 0.0
    %2544 = vmatprep.mubr.f32.mxu0 0.0
    %2545 = vmatmul.mubr.f32.gmra.mrb[0].mxu0 %v2476
    %v2546 = vpop.f32.mrb[0].mxu0
    %v2547 = vadd.f32 0.0, %v2546
    %v2548 = vpop.f32.mrb[0].mxu0
    %2549 = vdwg.mxu0
    %v2550 = vld [vmem:[%s1355] sm:$0xff]
    %v2551 = vadd.f32 %v2550, %v2473
    %v2552 = vlaneseq
    %v2553 = vshrl.u32 %v2552, 7
    %v2554 = vsub.s32 0, %v2553
    %v2555 = vrot.slane %v2547, %v2554
    %v2556 = vadd.f32 %v2551, %v2555
    %v2557 = vadd.f32 %v2456, %v2556
    %v2558 = vadd.f32 %v2557, %v1533
    %v2559 = vsel %vm335, %v2558, -inf
    %2560 = vmax.xlane.f32.xlu0 %v2559
    %v2561 = vpop.xlane.xlu0 %2560
    %v2562 = vsub.f32 %v2558, %v2561
    %v2563 = vmul.f32 %v2562, 1.442695
    %v2564 = vpow.pop %v2563
    %v2565 = vsel %vm335, %v2564, 0.0
    %2566 = vadd.xlane.f32.xlu0 %v2565
    %v2567 = vpop.xlane.xlu0 %2566
    %v2568 = vrcp.pop %v2567
    %v2569 = vmul.f32 %v2564, %v2568
    %v2572 = vsel %vm335, %v2569, 0
    %2574 = vmatprep.subr.mxu0 0.0
    %2575 = vmatpush1.msra.mxu0 %v2475
    %2576 = vmatprep.subr.mxu0 0.0
    %2577 = vmatpush1.msra.mxu0 0.0
    %2578 = vmatprep.subr.mxu0 0.0
    %2579 = vmatpush1.msra.mxu0 0.0
    %2580 = vmatprep.subr.mxu0 0.0
    %2581 = vmatpush1.msra.mxu0 0.0
    %2582 = vmatprep.subr.mxu0 0.0
    %2583 = vmatpush1.msra.mxu0 0.0
    %2584 = vmatprep.subr.mxu0 0.0
    %2585 = vmatpush1.msra.mxu0 0.0
    %2586 = vmatprep.subr.mxu0 0.0
    %2587 = vmatpush1.msra.mxu0 0.0
    %2588 = vmatprep.subr.mxu0 0.0
    %2589 = vmatpush1.msra.mxu0 0.0
    %2590 = vmatprep.subr.mxu0 0.0
    %2591 = vmatpush1.msra.mxu0 0.0
    %2592 = vmatprep.subr.mxu0 0.0
    %2593 = vmatpush1.msra.mxu0 0.0
    %2594 = vmatprep.subr.mxu0 0.0
    %2595 = vmatpush1.msra.mxu0 0.0
    %2596 = vmatprep.subr.mxu0 0.0
    %2597 = vmatpush1.msra.mxu0 0.0
    %2598 = vmatprep.subr.mxu0 0.0
    %2599 = vmatpush1.msra.mxu0 0.0
    %2600 = vmatprep.subr.mxu0 0.0
    %2601 = vmatpush1.msra.mxu0 0.0
    %2602 = vmatprep.subr.mxu0 0.0
    %2603 = vmatpush1.msra.mxu0 0.0
    %2604 = vmatprep.subr.mxu0 0.0
    %2605 = vmatpush1.msra.mxu0 0.0
    %2606 = vmatprep.subr.mxu0 0.0
    %2607 = vmatpush1.msra.mxu0 0.0
    %2608 = vmatprep.subr.mxu0 0.0
    %2609 = vmatpush1.msra.mxu0 0.0
    %2610 = vmatprep.subr.mxu0 0.0
    %2611 = vmatpush1.msra.mxu0 0.0
    %2612 = vmatprep.subr.mxu0 0.0
    %2613 = vmatpush1.msra.mxu0 0.0
    %2614 = vmatprep.subr.mxu0 0.0
    %2615 = vmatpush1.msra.mxu0 0.0
    %2616 = vmatprep.subr.mxu0 0.0
    %2617 = vmatpush1.msra.mxu0 0.0
    %2618 = vmatprep.subr.mxu0 0.0
    %2619 = vmatpush1.msra.mxu0 0.0
    %2620 = vmatprep.subr.mxu0 0.0
    %2621 = vmatpush1.msra.mxu0 0.0
    %2622 = vmatprep.subr.mxu0 0.0
    %2623 = vmatpush1.msra.mxu0 0.0
    %2624 = vmatprep.subr.mxu0 0.0
    %2625 = vmatpush1.msra.mxu0 0.0
    %2626 = vmatprep.subr.mxu0 0.0
    %2627 = vmatpush1.msra.mxu0 0.0
    %2628 = vmatprep.subr.mxu0 0.0
    %2629 = vmatpush1.msra.mxu0 0.0
    %2630 = vmatprep.subr.mxu0 0.0
    %2631 = vmatpush1.msra.mxu0 0.0
    %2632 = vmatprep.subr.mxu0 0.0
    %2633 = vmatpush1.msra.mxu0 0.0
    %2634 = vmatprep.subr.mxu0 0.0
    %2635 = vmatpush1.msra.mxu0 0.0
    %2636 = vmatprep.subr.mxu0 0.0
    %2637 = vmatpush1.msra.mxu0 0.0
    %2638 = vmatprep.mubr.f32.mxu0 0.0
    %2639 = vmatmul.mubr.f32.gmra.mrb[0].mxu0 %v2572
    %v2640 = vpop.f32.mrb[0].mxu0
    %v2641 = vadd.f32 0.0, %v2640
    %v2642 = vpop.f32.mrb[0].mxu0
    %2643 = vdwg.mxu0
    %v2645 = vsel %vm335, %v2641, 0
    %2647 = vmatprep.subr.mxu0 0.0
    %2648 = vmatpush1.msra.mxu0 %v332
    %2649 = vmatprep.subr.mxu0 0.0
    %2650 = vmatpush1.msra.mxu0 0.0
    %2651 = vmatprep.subr.mxu0 0.0
    %2652 = vmatpush1.msra.mxu0 0.0
    %2653 = vmatprep.subr.mxu0 0.0
    %2654 = vmatpush1.msra.mxu0 0.0
    %2655 = vmatprep.subr.mxu0 0.0
    %2656 = vmatpush1.msra.mxu0 0.0
    %2657 = vmatprep.subr.mxu0 0.0
    %2658 = vmatpush1.msra.mxu0 0.0
    %2659 = vmatprep.subr.mxu0 0.0
    %2660 = vmatpush1.msra.mxu0 0.0
    %2661 = vmatprep.subr.mxu0 0.0
    %2662 = vmatpush1.msra.mxu0 0.0
    %2663 = vmatprep.subr.mxu0 0.0
    %2664 = vmatpush1.msra.mxu0 0.0
    %2665 = vmatprep.subr.mxu0 0.0
    %2666 = vmatpush1.msra.mxu0 0.0
    %2667 = vmatprep.subr.mxu0 0.0
    %2668 = vmatpush1.msra.mxu0 0.0
    %2669 = vmatprep.subr.mxu0 0.0
    %2670 = vmatpush1.msra.mxu0 0.0
    %2671 = vmatprep.subr.mxu0 0.0
    %2672 = vmatpush1.msra.mxu0 0.0
    %2673 = vmatprep.subr.mxu0 0.0
    %2674 = vmatpush1.msra.mxu0 0.0
    %2675 = vmatprep.subr.mxu0 0.0
    %2676 = vmatpush1.msra.mxu0 0.0
    %2677 = vmatprep.subr.mxu0 0.0
    %2678 = vmatpush1.msra.mxu0 0.0
    %2679 = vmatprep.subr.mxu0 0.0
    %2680 = vmatpush1.msra.mxu0 0.0
    %2681 = vmatprep.subr.mxu0 0.0
    %2682 = vmatpush1.msra.mxu0 0.0
    %2683 = vmatprep.subr.mxu0 0.0
    %2684 = vmatpush1.msra.mxu0 0.0
    %2685 = vmatprep.subr.mxu0 0.0
    %2686 = vmatpush1.msra.mxu0 0.0
    %2687 = vmatprep.subr.mxu0 0.0
    %2688 = vmatpush1.msra.mxu0 0.0
    %2689 = vmatprep.subr.mxu0 0.0
    %2690 = vmatpush1.msra.mxu0 0.0
    %2691 = vmatprep.subr.mxu0 0.0
    %2692 = vmatpush1.msra.mxu0 0.0
    %2693 = vmatprep.subr.mxu0 0.0
    %2694 = vmatpush1.msra.mxu0 0.0
    %2695 = vmatprep.subr.mxu0 0.0
    %2696 = vmatpush1.msra.mxu0 0.0
    %2697 = vmatprep.subr.mxu0 0.0
    %2698 = vmatpush1.msra.mxu0 0.0
    %2699 = vmatprep.subr.mxu0 0.0
    %2700 = vmatpush1.msra.mxu0 0.0
    %2701 = vmatprep.subr.mxu0 0.0
    %2702 = vmatpush1.msra.mxu0 0.0
    %2703 = vmatprep.subr.mxu0 0.0
    %2704 = vmatpush1.msra.mxu0 0.0
    %2705 = vmatprep.subr.mxu0 0.0
    %2706 = vmatpush1.msra.mxu0 0.0
    %2707 = vmatprep.subr.mxu0 0.0
    %2708 = vmatpush1.msra.mxu0 0.0
    %2709 = vmatprep.subr.mxu0 0.0
    %2710 = vmatpush1.msra.mxu0 0.0
    %2711 = vmatprep.mubr.f32.mxu0 0.0
    %2712 = vmatmul.mubr.f32.gmra.mrb[0].mxu0 %v2645
    %v2713 = vpop.f32.mrb[0].mxu0
    %v2714 = vadd.f32 0.0, %v2713
    %v2715 = vpop.f32.mrb[0].mxu0
    %2716 = vdwg.mxu0
    %v2717 = vadd.f32 %v2363, %v2714
    %v2718 = vadd.f32 %v2717, %v1528
    %2719 = vst.msk [vmem:[#allocation2 + $0x8] sm:$0xff] %vm55, %v2718
    // Predicated region
    $region50: #{mha_forward.1} parent=1 // pred_check
      _
    $region51: #{mha_forward.1} parent=1 // pred_check_branch
      %2721 = sbr.rel (0) target = $region53
    $region52: #{mha_forward.1} parent=1 // pred_region
      %s2723 = ssub.s32 256, 256
      %2724 = vsyncadd [#allocation3], %s2723
      %s2725 = sshll.u32 [#allocation2], 4
      %s2726 = int_to_ptr.vmem [resolvable:$true] %s2725
      %2731 = dma.vmem_to_hbm [thread:$0]  %s2726, 256, %s12, [#allocation3], 128, 128, 8
    $region53: #{mha_forward.1} parent=1 // pred_fallthru
      _
    // Predicated region
    $region54: #{mha_forward.1} parent=1 // pred_check
      _
    $region55: #{mha_forward.1} parent=1 // pred_check_branch
      %2733 = sbr.rel (0) target = $region57
    $region56: #{mha_forward.1} parent=1 // pred_region
      %2734 = dma.done [#allocation3], 256
    $region57: #{mha_forward.1} parent=1 // pred_fallthru
      _
    %2735 = vsyncpa [#allocation3], 1

</llo_original>
